<compile_context>
chip_gen: v7x
topology: tpu7x:2x2x1
jax: 0.10.0
libtpu: 0.0.40
codegen_flags: <defaults>
</compile_context>

<pallas_src>
import jax
import jax.numpy as jnp
from jax.experimental import pallas as pl
from jax.experimental.pallas import tpu as pltpu

IN_DIM = 28 * 28          # 784 (logical input features)
IN_PAD = 896              # 7 * 128 -> lane-aligned K for the first matmul
HID = 512
OUT_DIM = 10              # logical output features
OUT_PAD = 128             # lane-dense output tile
MIN_TILE = 16             # bf16 sublane packing (second-minor tile)
MAX_TILE = 512            # cap so VMEM stays small and grids stay multi-step


def _round_up(x, m):
    return ((x + m - 1) // m) * m


def _pick_batch_tile(b):
    """Batch-adaptive row tile (static at trace time)."""
    if b <= 128:
        # Latency path: single grid step, minimal row padding (16-row granularity).
        return _round_up(b, MIN_TILE)
    # Throughput path: largest 128-aligned tile (<= 512) with >= 2 grid steps,
    # so both v7x TensorCores are occupied and per-step overhead is amortized.
    half = ((b // 2) // 128) * 128
    return int(min(MAX_TILE, max(128, half)))


def mlp_kernel(x_ref, w1_ref, b1_ref, w2_ref, b2_ref, w3_ref, b3_ref,
               w4_ref, b4_ref, o_ref):
    # Layer 1: (bm, 896)bf16 @ (896, 512)bf16 -> f32 acc, + b, ReLU
    h = jnp.dot(x_ref[...], w1_ref[...], preferred_element_type=jnp.float32)
    h = jnp.maximum(h + b1_ref[...], 0.0).astype(jnp.bfloat16)
    # Layer 2: (bm, 512) @ (512, 512)
    h = jnp.dot(h, w2_ref[...], preferred_element_type=jnp.float32)
    h = jnp.maximum(h + b2_ref[...], 0.0).astype(jnp.bfloat16)
    # Layer 3: (bm, 512) @ (512, 512)
    h = jnp.dot(h, w3_ref[...], preferred_element_type=jnp.float32)
    h = jnp.maximum(h + b3_ref[...], 0.0).astype(jnp.bfloat16)
    # Output layer: (bm, 512) @ (512, 128)  (cols 10..127 zero-padded; no activation)
    o = jnp.dot(h, w4_ref[...], preferred_element_type=jnp.float32) + b4_ref[...]
    o_ref[...] = o.astype(o_ref.dtype)


def prepare_params(params):
    """One-time weight prep (pad + bf16 cast), hoisted out of the per-call path."""
    w1, b1, w2, b2, w3, b3, w4, b4 = params
    w1p = jnp.pad(w1, ((0, IN_PAD - IN_DIM), (0, 0))).astype(jnp.bfloat16)
    w2p = w2.astype(jnp.bfloat16)
    w3p = w3.astype(jnp.bfloat16)
    w4p = jnp.pad(w4, ((0, 0), (0, OUT_PAD - OUT_DIM))).astype(jnp.bfloat16)
    # Biases stay f32: they add into the f32 MXU accumulator (v5e VPU has no bf16).
    b1p = b1.astype(jnp.float32)
    b2p = b2.astype(jnp.float32)
    b3p = b3.astype(jnp.float32)
    b4p = jnp.pad(b4, ((0, 0), (0, OUT_PAD - OUT_DIM))).astype(jnp.float32)
    return (w1p, b1p, w2p, b2p, w3p, b3p, w4p, b4p)


def fully_connected_forward(x, prepared_params):
    """x: (B, 1, 28, 28) or anything flattening to (B, 784). Returns (B, 10) f32."""
    w1p, b1p, w2p, b2p, w3p, b3p, w4p, b4p = prepared_params

    # Cast BEFORE padding: the padded (b_pad, 896) staging array is bf16
    # (half the wrapper-side HBM traffic of padding in f32 then casting).
    x2d = x.reshape((-1, IN_DIM)).astype(jnp.bfloat16)
    b = x2d.shape[0]

    tile = _pick_batch_tile(b)
    b_pad = _round_up(b, tile)
    x2d = jnp.pad(x2d, ((0, b_pad - b), (0, IN_PAD - IN_DIM)))

    grid = (b_pad // tile,)
    full = lambda shape: pl.BlockSpec(shape, lambda i: (0, 0))

    flops = 2 * b_pad * (IN_PAD * HID + 2 * HID * HID + HID * OUT_PAD)
    bytes_accessed = (
        x2d.size * 2                                                  # bf16 input
        + 2 * (w1p.size + w2p.size + w3p.size + w4p.size)             # bf16 weights
        + 4 * (b1p.size + b2p.size + b3p.size + b4p.size)             # f32 biases
        + 4 * b_pad * OUT_PAD                                         # f32 output
    )

    out = pl.pallas_call(
        mlp_kernel,
        out_shape=jax.ShapeDtypeStruct((b_pad, OUT_PAD), jnp.float32),
        grid=grid,
        in_specs=[
            pl.BlockSpec((tile, IN_PAD), lambda i: (i, 0)),   # x tile (only moving input)
            full((IN_PAD, HID)),  full((1, HID)),             # layer "input" (resident)
            full((HID, HID)),     full((1, HID)),             # fc1
            full((HID, HID)),     full((1, HID)),             # fc2
            full((HID, OUT_PAD)), full((1, OUT_PAD)),         # out (lane-padded)
        ],
        out_specs=pl.BlockSpec((tile, OUT_PAD), lambda i: (i, 0)),
        compiler_params=pltpu.CompilerParams(
            dimension_semantics=("parallel",)),
        cost_estimate=pl.CostEstimate(
            flops=flops, transcendentals=0, bytes_accessed=bytes_accessed),
    )(x2d, w1p, b1p, w2p, b2p, w3p, b3p, w4p, b4p)

    return out[:b, :OUT_DIM]


def init_params(key):
    """Deterministic init matching torch.nn.Linear shapes (stored as (in, out)), f32."""
    ks = jax.random.split(key, 8)

    def linear(kw, kb, fan_in, fan_out):
        bound = 1.0 / (fan_in ** 0.5)
        w = jax.random.uniform(kw, (fan_in, fan_out), jnp.float32, -bound, bound)
        b = jax.random.uniform(kb, (1, fan_out), jnp.float32, -bound, bound)
        return w, b

    w1, b1 = linear(ks[0], ks[1], IN_DIM, HID)
    w2, b2 = linear(ks[2], ks[3], HID, HID)
    w3, b3 = linear(ks[4], ks[5], HID, HID)
    w4, b4 = linear(ks[6], ks[7], HID, OUT_DIM)
    return (w1, b1, w2, b2, w3, b3, w4, b4)


def reference_forward(x, params):
    """Pure-JAX f32 reference of the PyTorch forward."""
    w1, b1, w2, b2, w3, b3, w4, b4 = params
    h = x.reshape((-1, IN_DIM)).astype(jnp.float32)
    h = jnp.maximum(h @ w1 + b1, 0.0)
    h = jnp.maximum(h @ w2 + b2, 0.0)
    h = jnp.maximum(h @ w3 + b3, 0.0)
    return h @ w4 + b4


if __name__ == "__main__":
    key = jax.random.PRNGKey(0)
    k_x1, k_x2, k_p = jax.random.split(key, 3)

    params = init_params(k_p)
    prepared = prepare_params(params)   # weight pad/cast done once, reused below

    # 1) Small-batch / latency path: B=2 -> 16-row tile, single grid step.
    x_small = jax.random.normal(k_x1, (2, 1, 28, 28), jnp.float32)
    out_small = jax.block_until_ready(fully_connected_forward(x_small, prepared))
    ref_small = reference_forward(x_small, params)
    assert out_small.shape == (2, OUT_DIM), out_small.shape
    assert jnp.allclose(out_small, ref_small, atol=6e-2, rtol=6e-2), \
        "small-batch mismatch vs reference"

    # 2) Multi-step path: B=300 (> tile, not a multiple of it) -> 128-row tile,
    #    3-step grid; exercises batch padding and the final row/col slice.
    x_big = jax.random.normal(k_x2, (300, 1, 28, 28), jnp.float32)
    out_big = jax.block_until_ready(fully_connected_forward(x_big, prepared))
    ref_big = reference_forward(x_big, params)
    assert out_big.shape == (300, OUT_DIM), out_big.shape
    assert jnp.allclose(out_big, ref_big, atol=6e-2, rtol=6e-2), \
        "multi-step mismatch vs reference"

    print("KERNEL_OK")
</pallas_src>

<mosaic_0001>
module attributes {stable_mosaic.version = 11 : i64} {
  func.func @mlp_kernel(%arg0: i32, %arg1: memref<16x896xbf16, #tpu.memory_space<vmem>>, %arg2: memref<896x512xbf16, #tpu.memory_space<vmem>>, %arg3: memref<1x512xf32, #tpu.memory_space<vmem>>, %arg4: memref<512x512xbf16, #tpu.memory_space<vmem>>, %arg5: memref<1x512xf32, #tpu.memory_space<vmem>>, %arg6: memref<512x512xbf16, #tpu.memory_space<vmem>>, %arg7: memref<1x512xf32, #tpu.memory_space<vmem>>, %arg8: memref<512x128xbf16, #tpu.memory_space<vmem>>, %arg9: memref<1x128xf32, #tpu.memory_space<vmem>>, %arg10: memref<16x128xf32, #tpu.memory_space<vmem>>) attributes {dimension_semantics = [#tpu.dimension_semantics<parallel>], iteration_bounds = array<i64: 1>, scalar_prefetch = 0 : i64, scratch_operands = 0 : i64, tpu.core_type = #tpu.core_type<tc>, window_params = [{transform_indices = @transform_0, window_bounds = array<i64: 16, 896>}, {pipeline_mode = #tpu.pipeline_mode<synchronous>, transform_indices = @transform_1, window_bounds = array<i64: 896, 512>}, {pipeline_mode = #tpu.pipeline_mode<synchronous>, transform_indices = @transform_2, window_bounds = array<i64: 1, 512>}, {pipeline_mode = #tpu.pipeline_mode<synchronous>, transform_indices = @transform_3, window_bounds = array<i64: 512, 512>}, {pipeline_mode = #tpu.pipeline_mode<synchronous>, transform_indices = @transform_4, window_bounds = array<i64: 1, 512>}, {pipeline_mode = #tpu.pipeline_mode<synchronous>, transform_indices = @transform_5, window_bounds = array<i64: 512, 512>}, {pipeline_mode = #tpu.pipeline_mode<synchronous>, transform_indices = @transform_6, window_bounds = array<i64: 1, 512>}, {pipeline_mode = #tpu.pipeline_mode<synchronous>, transform_indices = @transform_7, window_bounds = array<i64: 512, 128>}, {pipeline_mode = #tpu.pipeline_mode<synchronous>, transform_indices = @transform_8, window_bounds = array<i64: 1, 128>}, {transform_indices = @transform_9, window_bounds = array<i64: 16, 128>}]} {
    %c0 = arith.constant 0 : index
    %c0_0 = arith.constant 0 : index
    %0 = vector.load %arg1[%c0, %c0_0] : memref<16x896xbf16, #tpu.memory_space<vmem>>, vector<16x896xbf16>
    %c0_1 = arith.constant 0 : index
    %c0_2 = arith.constant 0 : index
    %1 = vector.load %arg2[%c0_1, %c0_2] : memref<896x512xbf16, #tpu.memory_space<vmem>>, vector<896x512xbf16>
    %cst = arith.constant dense<0.000000e+00> : vector<16x512xf32>
    %2 = tpu.matmul %0, %1, %cst {dimension_numbers = #tpu.dot_dimension_numbers<[1], [0], [0], [1], [0, 0, 1, 1], [], []>} : vector<16x896xbf16>, vector<896x512xbf16>, vector<16x512xf32> -> vector<16x512xf32>
    %c0_3 = arith.constant 0 : index
    %c0_4 = arith.constant 0 : index
    %3 = vector.load %arg3[%c0_3, %c0_4] : memref<1x512xf32, #tpu.memory_space<vmem>>, vector<1x512xf32>
    %4 = vector.broadcast %3 : vector<1x512xf32> to vector<16x512xf32>
    %5 = arith.addf %2, %4 : vector<16x512xf32>
    %cst_5 = arith.constant 0.000000e+00 : f32
    %6 = vector.broadcast %cst_5 : f32 to vector<16x512xf32>
    %7 = arith.maximumf %5, %6 : vector<16x512xf32>
    %8 = arith.truncf %7 : vector<16x512xf32> to vector<16x512xbf16>
    %c0_6 = arith.constant 0 : index
    %c0_7 = arith.constant 0 : index
    %9 = vector.load %arg4[%c0_6, %c0_7] : memref<512x512xbf16, #tpu.memory_space<vmem>>, vector<512x512xbf16>
    %cst_8 = arith.constant dense<0.000000e+00> : vector<16x512xf32>
    %10 = tpu.matmul %8, %9, %cst_8 {dimension_numbers = #tpu.dot_dimension_numbers<[1], [0], [0], [1], [0, 0, 1, 1], [], []>} : vector<16x512xbf16>, vector<512x512xbf16>, vector<16x512xf32> -> vector<16x512xf32>
    %c0_9 = arith.constant 0 : index
    %c0_10 = arith.constant 0 : index
    %11 = vector.load %arg5[%c0_9, %c0_10] : memref<1x512xf32, #tpu.memory_space<vmem>>, vector<1x512xf32>
    %12 = vector.broadcast %11 : vector<1x512xf32> to vector<16x512xf32>
    %13 = arith.addf %10, %12 : vector<16x512xf32>
    %cst_11 = arith.constant 0.000000e+00 : f32
    %14 = vector.broadcast %cst_11 : f32 to vector<16x512xf32>
    %15 = arith.maximumf %13, %14 : vector<16x512xf32>
    %16 = arith.truncf %15 : vector<16x512xf32> to vector<16x512xbf16>
    %c0_12 = arith.constant 0 : index
    %c0_13 = arith.constant 0 : index
    %17 = vector.load %arg6[%c0_12, %c0_13] : memref<512x512xbf16, #tpu.memory_space<vmem>>, vector<512x512xbf16>
    %cst_14 = arith.constant dense<0.000000e+00> : vector<16x512xf32>
    %18 = tpu.matmul %16, %17, %cst_14 {dimension_numbers = #tpu.dot_dimension_numbers<[1], [0], [0], [1], [0, 0, 1, 1], [], []>} : vector<16x512xbf16>, vector<512x512xbf16>, vector<16x512xf32> -> vector<16x512xf32>
    %c0_15 = arith.constant 0 : index
    %c0_16 = arith.constant 0 : index
    %19 = vector.load %arg7[%c0_15, %c0_16] : memref<1x512xf32, #tpu.memory_space<vmem>>, vector<1x512xf32>
    %20 = vector.broadcast %19 : vector<1x512xf32> to vector<16x512xf32>
    %21 = arith.addf %18, %20 : vector<16x512xf32>
    %cst_17 = arith.constant 0.000000e+00 : f32
    %22 = vector.broadcast %cst_17 : f32 to vector<16x512xf32>
    %23 = arith.maximumf %21, %22 : vector<16x512xf32>
    %24 = arith.truncf %23 : vector<16x512xf32> to vector<16x512xbf16>
    %c0_18 = arith.constant 0 : index
    %c0_19 = arith.constant 0 : index
    %25 = vector.load %arg8[%c0_18, %c0_19] : memref<512x128xbf16, #tpu.memory_space<vmem>>, vector<512x128xbf16>
    %cst_20 = arith.constant dense<0.000000e+00> : vector<16x128xf32>
    %26 = tpu.matmul %24, %25, %cst_20 {dimension_numbers = #tpu.dot_dimension_numbers<[1], [0], [0], [1], [0, 0, 1, 1], [], []>} : vector<16x512xbf16>, vector<512x128xbf16>, vector<16x128xf32> -> vector<16x128xf32>
    %c0_21 = arith.constant 0 : index
    %c0_22 = arith.constant 0 : index
    %27 = vector.load %arg9[%c0_21, %c0_22] : memref<1x128xf32, #tpu.memory_space<vmem>>, vector<1x128xf32>
    %28 = vector.broadcast %27 : vector<1x128xf32> to vector<16x128xf32>
    %29 = arith.addf %26, %28 : vector<16x128xf32>
    %c0_23 = arith.constant 0 : index
    %c0_24 = arith.constant 0 : index
    %30 = vector.load %arg10[%c0_23, %c0_24] : memref<16x128xf32, #tpu.memory_space<vmem>>, vector<16x128xf32>
    tpu.vector_store %arg10[%c0_23, %c0_24], %29 {strides = array<i32>} : memref<16x128xf32, #tpu.memory_space<vmem>>, vector<16x128xf32>,
    return
  }
  func.func @transform_0(%arg0: i32) -> (i32, i32) {
    %c0_i32 = arith.constant 0 : i32
    %c0_i32_0 = arith.constant 0 : i32
    return %arg0, %c0_i32 : i32, i32
  }
  func.func @transform_1(%arg0: i32) -> (i32, i32) {
    %c0_i32 = arith.constant 0 : i32
    %c0_i32_0 = arith.constant 0 : i32
    %c0_i32_1 = arith.constant 0 : i32
    return %c0_i32, %c0_i32_0 : i32, i32
  }
  func.func @transform_2(%arg0: i32) -> (i32, i32) {
    %c0_i32 = arith.constant 0 : i32
    %c0_i32_0 = arith.constant 0 : i32
    %c0_i32_1 = arith.constant 0 : i32
    return %c0_i32, %c0_i32_0 : i32, i32
  }
  func.func @transform_3(%arg0: i32) -> (i32, i32) {
    %c0_i32 = arith.constant 0 : i32
    %c0_i32_0 = arith.constant 0 : i32
    %c0_i32_1 = arith.constant 0 : i32
    return %c0_i32, %c0_i32_0 : i32, i32
  }
  func.func @transform_4(%arg0: i32) -> (i32, i32) {
    %c0_i32 = arith.constant 0 : i32
    %c0_i32_0 = arith.constant 0 : i32
    %c0_i32_1 = arith.constant 0 : i32
    return %c0_i32, %c0_i32_0 : i32, i32
  }
  func.func @transform_5(%arg0: i32) -> (i32, i32) {
    %c0_i32 = arith.constant 0 : i32
    %c0_i32_0 = arith.constant 0 : i32
    %c0_i32_1 = arith.constant 0 : i32
    return %c0_i32, %c0_i32_0 : i32, i32
  }
  func.func @transform_6(%arg0: i32) -> (i32, i32) {
    %c0_i32 = arith.constant 0 : i32
    %c0_i32_0 = arith.constant 0 : i32
    %c0_i32_1 = arith.constant 0 : i32
    return %c0_i32, %c0_i32_0 : i32, i32
  }
  func.func @transform_7(%arg0: i32) -> (i32, i32) {
    %c0_i32 = arith.constant 0 : i32
    %c0_i32_0 = arith.constant 0 : i32
    %c0_i32_1 = arith.constant 0 : i32
    return %c0_i32, %c0_i32_0 : i32, i32
  }
  func.func @transform_8(%arg0: i32) -> (i32, i32) {
    %c0_i32 = arith.constant 0 : i32
    %c0_i32_0 = arith.constant 0 : i32
    %c0_i32_1 = arith.constant 0 : i32
    return %c0_i32, %c0_i32_0 : i32, i32
  }
  func.func @transform_9(%arg0: i32) -> (i32, i32) {
    %c0_i32 = arith.constant 0 : i32
    %c0_i32_0 = arith.constant 0 : i32
    return %arg0, %c0_i32 : i32, i32
  }
}

</mosaic_0001>

<llo_original>
// kernel: tpu_custom_call.1
$region0: #{tpu_custom_call.1}
  #allocation0 [shape = 'u32[]', space=smem, size = 0x4, offset = 0x4, fixed_abs, tag = 'smem constant byte address 0x4 - core index']
  #allocation1 [shape = 'u32[144,128]{1,0:T(1,128)}', space=vmem, size = 0x12000, scoped, tag = 'internal scratch']
  %s0 = inlined_call_operand.hbm [shape: bf16[16,896], index: 0, kind: input, shape index: {}]
  %s1 = inlined_call_operand.hbm [shape: bf16[896,512], index: 1, kind: input, shape index: {}]
  %s2 = inlined_call_operand.vmem [shape: f32[1,512], index: 2, kind: input, shape index: {}]
  %s3 = inlined_call_operand.hbm [shape: bf16[512,512], index: 3, kind: input, shape index: {}]
  %s4 = inlined_call_operand.vmem [shape: f32[1,512], index: 4, kind: input, shape index: {}]
  %s5 = inlined_call_operand.hbm [shape: bf16[512,512], index: 5, kind: input, shape index: {}]
  %s6 = inlined_call_operand.vmem [shape: f32[1,512], index: 6, kind: input, shape index: {}]
  %s7 = inlined_call_operand.hbm [shape: bf16[512,128], index: 7, kind: input, shape index: {}]
  %s8 = inlined_call_operand.vmem [shape: f32[1,128], index: 8, kind: input, shape index: {}]
  %s9 = inlined_call_operand.hbm [shape: f32[16,128], index: 9, kind: output, shape index: {}]
  %s10 = sld [smem:[#allocation0]]
  $region66: #{tpu_custom_call.1} parent=0
    _
  %s12 = ssub.s32 1, %s10
  %s13 = scalar_select 0, %s12, %s10
  $region1: #{tpu_custom_call.1} parent=0
    #allocation2 [shape = 'u8[28672]{0}', space=vmem, size = 0x7000, scoped, tag = 'input window, operand 0, single buffered']
    #allocation3 [shape = 's32[1]{0}', space=sflag, size = 0x4, scoped, tag = 'scoped memory for tpu_custom_call.1']
    #allocation4 [shape = 's32[1]{0}', space=sflag, size = 0x4, scoped, tag = 'scoped memory for tpu_custom_call.1']
    #allocation5 [shape = 'u8[917504]{0}', space=vmem, size = 0xe0000, scoped, tag = 'input window, operand 1, single buffered']
    #allocation6 [shape = 's32[1]{0}', space=sflag, size = 0x4, scoped, tag = 'scoped memory for tpu_custom_call.1']
    #allocation7 [shape = 'u8[524288]{0}', space=vmem, size = 0x80000, scoped, tag = 'input window, operand 3, single buffered']
    #allocation8 [shape = 'u8[524288]{0}', space=vmem, size = 0x80000, scoped, tag = 'input window, operand 5, single buffered']
    #allocation9 [shape = 's32[1]{0}', space=sflag, size = 0x4, scoped, tag = 'scoped memory for tpu_custom_call.1']
    #allocation10 [shape = 'u8[131072]{0}', space=vmem, size = 0x20000, scoped, tag = 'input window, operand 7, single buffered']
    #allocation11 [shape = 'u8[8192]{0}', space=vmem, size = 0x2000, scoped, tag = 'output window, operand 0, single buffered']
    %14 = vsyncpa [#allocation3], 0
    %15 = vsyncpa [#allocation6], 0
    %16 = vsyncpa [#allocation9], 0
    %17 = vsyncpa [#allocation4], 0
    // Predicated region
    $region2: #{tpu_custom_call.1} parent=1 // pred_check
      _
    $region3: #{tpu_custom_call.1} parent=1 // pred_check_branch
      %19 = sbr.rel (0) target = $region5
    $region4: #{tpu_custom_call.1} parent=1 // pred_region
      %s21 = ssub.s32 896, 896
      %22 = vsyncadd [#allocation3], %s21
      %s23 = sshll.u32 [#allocation2], 4
      %s24 = int_to_ptr.vmem [resolvable:$true] %s23
      %29 = dma.hbm_to_vmem [thread:$0]  %s0, 896, %s24, [#allocation3], 448, 448, 28
    $region5: #{tpu_custom_call.1} parent=1 // pred_fallthru
      _
    // Predicated region
    $region6: #{tpu_custom_call.1} parent=1 // pred_check
      _
    $region7: #{tpu_custom_call.1} parent=1 // pred_check_branch
      %31 = sbr.rel (0) target = $region9
    $region8: #{tpu_custom_call.1} parent=1 // pred_region
      %s33 = ssub.s32 28672, 28672
      %34 = vsyncadd [#allocation6], %s33
      %s35 = sshll.u32 [#allocation5], 4
      %s36 = int_to_ptr.vmem [resolvable:$true] %s35
      %41 = dma.hbm_to_vmem [thread:$0]  %s1, 28672, %s36, [#allocation6], 256, 256, 16
    $region9: #{tpu_custom_call.1} parent=1 // pred_fallthru
      _
    // Predicated region
    $region10: #{tpu_custom_call.1} parent=1 // pred_check
      _
    $region11: #{tpu_custom_call.1} parent=1 // pred_check_branch
      %43 = sbr.rel (0) target = $region13
    $region12: #{tpu_custom_call.1} parent=1 // pred_region
      _
    $region13: #{tpu_custom_call.1} parent=1 // pred_fallthru
      _
    // Predicated region
    $region14: #{tpu_custom_call.1} parent=1 // pred_check
      _
    $region15: #{tpu_custom_call.1} parent=1 // pred_check_branch
      %45 = sbr.rel (0) target = $region17
    $region16: #{tpu_custom_call.1} parent=1 // pred_region
      %s47 = ssub.s32 16384, 16384
      %48 = vsyncadd [#allocation6], %s47
      %s49 = sshll.u32 [#allocation7], 4
      %s50 = int_to_ptr.vmem [resolvable:$true] %s49
      %55 = dma.hbm_to_vmem [thread:$0]  %s3, 16384, %s50, [#allocation6], 256, 256, 16
    $region17: #{tpu_custom_call.1} parent=1 // pred_fallthru
      _
    // Predicated region
    $region18: #{tpu_custom_call.1} parent=1 // pred_check
      _
    $region19: #{tpu_custom_call.1} parent=1 // pred_check_branch
      %57 = sbr.rel (0) target = $region21
    $region20: #{tpu_custom_call.1} parent=1 // pred_region
      _
    $region21: #{tpu_custom_call.1} parent=1 // pred_fallthru
      _
    // Predicated region
    $region22: #{tpu_custom_call.1} parent=1 // pred_check
      _
    $region23: #{tpu_custom_call.1} parent=1 // pred_check_branch
      %59 = sbr.rel (0) target = $region25
    $region24: #{tpu_custom_call.1} parent=1 // pred_region
      %s61 = ssub.s32 16384, 16384
      %62 = vsyncadd [#allocation9], %s61
      %s63 = sshll.u32 [#allocation8], 4
      %s64 = int_to_ptr.vmem [resolvable:$true] %s63
      %69 = dma.hbm_to_vmem [thread:$0]  %s5, 16384, %s64, [#allocation9], 256, 256, 16
    $region25: #{tpu_custom_call.1} parent=1 // pred_fallthru
      _
    // Predicated region
    $region26: #{tpu_custom_call.1} parent=1 // pred_check
      _
    $region27: #{tpu_custom_call.1} parent=1 // pred_check_branch
      %71 = sbr.rel (0) target = $region29
    $region28: #{tpu_custom_call.1} parent=1 // pred_region
      _
    $region29: #{tpu_custom_call.1} parent=1 // pred_fallthru
      _
    // Predicated region
    $region30: #{tpu_custom_call.1} parent=1 // pred_check
      _
    $region31: #{tpu_custom_call.1} parent=1 // pred_check_branch
      %73 = sbr.rel (0) target = $region33
    $region32: #{tpu_custom_call.1} parent=1 // pred_region
      %s75 = ssub.s32 4096, 4096
      %76 = vsyncadd [#allocation9], %s75
      %s77 = sshll.u32 [#allocation10], 4
      %s78 = int_to_ptr.vmem [resolvable:$true] %s77
      %83 = dma.hbm_to_vmem [thread:$0]  %s7, 4096, %s78, [#allocation9], 64, 64, 4
    $region33: #{tpu_custom_call.1} parent=1 // pred_fallthru
      _
    // Predicated region
    $region34: #{tpu_custom_call.1} parent=1 // pred_check
      _
    $region35: #{tpu_custom_call.1} parent=1 // pred_check_branch
      %85 = sbr.rel (0) target = $region37
    $region36: #{tpu_custom_call.1} parent=1 // pred_region
      _
    $region37: #{tpu_custom_call.1} parent=1 // pred_fallthru
      _
    // Predicated region
    $region38: #{tpu_custom_call.1} parent=1 // pred_check
      _
    $region39: #{tpu_custom_call.1} parent=1 // pred_check_branch
      %87 = sbr.rel (0) target = $region41
    $region40: #{tpu_custom_call.1} parent=1 // pred_region
      %88 = dma.done [#allocation3], 896
    $region41: #{tpu_custom_call.1} parent=1 // pred_fallthru
      _
    // Predicated region
    $region42: #{tpu_custom_call.1} parent=1 // pred_check
      _
    $region43: #{tpu_custom_call.1} parent=1 // pred_check_branch
      %90 = sbr.rel (0) target = $region45
    $region44: #{tpu_custom_call.1} parent=1 // pred_region
      %91 = dma.done [#allocation6], 28672
    $region45: #{tpu_custom_call.1} parent=1 // pred_fallthru
      _
    // Predicated region
    $region46: #{tpu_custom_call.1} parent=1 // pred_check
      _
    $region47: #{tpu_custom_call.1} parent=1 // pred_check_branch
      %93 = sbr.rel (0) target = $region49
    $region48: #{tpu_custom_call.1} parent=1 // pred_region
      %94 = dma.done [#allocation6], 16384
    $region49: #{tpu_custom_call.1} parent=1 // pred_fallthru
      _
    // Predicated region
    $region50: #{tpu_custom_call.1} parent=1 // pred_check
      _
    $region51: #{tpu_custom_call.1} parent=1 // pred_check_branch
      %96 = sbr.rel (0) target = $region53
    $region52: #{tpu_custom_call.1} parent=1 // pred_region
      %97 = dma.done [#allocation9], 16384
    $region53: #{tpu_custom_call.1} parent=1 // pred_fallthru
      _
    // Predicated region
    $region54: #{tpu_custom_call.1} parent=1 // pred_check
      _
    $region55: #{tpu_custom_call.1} parent=1 // pred_check_branch
      %99 = sbr.rel (0) target = $region57
    $region56: #{tpu_custom_call.1} parent=1 // pred_region
      %100 = dma.done [#allocation9], 4096
    $region57: #{tpu_custom_call.1} parent=1 // pred_fallthru
      _
    %v102 = vld [vmem:[#allocation2] sm:$0xff]
    %v103 = vld [vmem:[#allocation2 + $0x8] sm:$0xff]
    %v104 = vld [vmem:[#allocation2 + $0x10] sm:$0xff]
    %v105 = vld [vmem:[#allocation2 + $0x18] sm:$0xf]
    %v106 = vld [vmem:[#allocation2 + $0x1c] sm:$0xff]
    %v107 = vld [vmem:[#allocation2 + $0x24] sm:$0xff]
    %v108 = vld [vmem:[#allocation2 + $0x2c] sm:$0xff]
    %v109 = vld [vmem:[#allocation2 + $0x34] sm:$0xf]
    %v110 = vld [vmem:[#allocation5] sm:$0xff]
    %v111 = vld [vmem:[#allocation5 + $0x8] sm:$0xff]
    %v112 = vld [vmem:[#allocation5 + $0x10] sm:$0xff]
    %v113 = vld [vmem:[#allocation5 + $0x18] sm:$0xff]
    %v114 = vld [vmem:[#allocation5 + $0x20] sm:$0xff]
    %v115 = vld [vmem:[#allocation5 + $0x28] sm:$0xff]
    %v116 = vld [vmem:[#allocation5 + $0x30] sm:$0xff]
    %v117 = vld [vmem:[#allocation5 + $0x38] sm:$0xff]
    %v118 = vld [vmem:[#allocation5 + $0x40] sm:$0xff]
    %v119 = vld [vmem:[#allocation5 + $0x48] sm:$0xff]
    %v120 = vld [vmem:[#allocation5 + $0x50] sm:$0xff]
    %v121 = vld [vmem:[#allocation5 + $0x58] sm:$0xff]
    %v122 = vld [vmem:[#allocation5 + $0x60] sm:$0xff]
    %v123 = vld [vmem:[#allocation5 + $0x68] sm:$0xff]
    %v124 = vld [vmem:[#allocation5 + $0x70] sm:$0xff]
    %v125 = vld [vmem:[#allocation5 + $0x78] sm:$0xff]
    %v126 = vld [vmem:[#allocation5 + $0x80] sm:$0xff]
    %v127 = vld [vmem:[#allocation5 + $0x88] sm:$0xff]
    %v128 = vld [vmem:[#allocation5 + $0x90] sm:$0xff]
    %v129 = vld [vmem:[#allocation5 + $0x98] sm:$0xff]
    %v130 = vld [vmem:[#allocation5 + $0xa0] sm:$0xff]
    %v131 = vld [vmem:[#allocation5 + $0xa8] sm:$0xff]
    %v132 = vld [vmem:[#allocation5 + $0xb0] sm:$0xff]
    %v133 = vld [vmem:[#allocation5 + $0xb8] sm:$0xff]
    %v134 = vld [vmem:[#allocation5 + $0xc0] sm:$0xff]
    %v135 = vld [vmem:[#allocation5 + $0xc8] sm:$0xff]
    %v136 = vld [vmem:[#allocation5 + $0xd0] sm:$0xff]
    %v137 = vld [vmem:[#allocation5 + $0xd8] sm:$0xff]
    %v138 = vld [vmem:[#allocation5 + $0xe0] sm:$0xff]
    %v139 = vld [vmem:[#allocation5 + $0xe8] sm:$0xff]
    %v140 = vld [vmem:[#allocation5 + $0xf0] sm:$0xff]
    %v141 = vld [vmem:[#allocation5 + $0xf8] sm:$0xff]
    %v142 = vld [vmem:[#allocation5 + $0x100] sm:$0xff]
    %v143 = vld [vmem:[#allocation5 + $0x108] sm:$0xff]
    %v144 = vld [vmem:[#allocation5 + $0x110] sm:$0xff]
    %v145 = vld [vmem:[#allocation5 + $0x118] sm:$0xff]
    %v146 = vld [vmem:[#allocation5 + $0x120] sm:$0xff]
    %v147 = vld [vmem:[#allocation5 + $0x128] sm:$0xff]
    %v148 = vld [vmem:[#allocation5 + $0x130] sm:$0xff]
    %v149 = vld [vmem:[#allocation5 + $0x138] sm:$0xff]
    %v150 = vld [vmem:[#allocation5 + $0x140] sm:$0xff]
    %v151 = vld [vmem:[#allocation5 + $0x148] sm:$0xff]
    %v152 = vld [vmem:[#allocation5 + $0x150] sm:$0xff]
    %v153 = vld [vmem:[#allocation5 + $0x158] sm:$0xff]
    %v154 = vld [vmem:[#allocation5 + $0x160] sm:$0xff]
    %v155 = vld [vmem:[#allocation5 + $0x168] sm:$0xff]
    %v156 = vld [vmem:[#allocation5 + $0x170] sm:$0xff]
    %v157 = vld [vmem:[#allocation5 + $0x178] sm:$0xff]
    %v158 = vld [vmem:[#allocation5 + $0x180] sm:$0xff]
    %v159 = vld [vmem:[#allocation5 + $0x188] sm:$0xff]
    %v160 = vld [vmem:[#allocation5 + $0x190] sm:$0xff]
    %v161 = vld [vmem:[#allocation5 + $0x198] sm:$0xff]
    %v162 = vld [vmem:[#allocation5 + $0x1a0] sm:$0xff]
    %v163 = vld [vmem:[#allocation5 + $0x1a8] sm:$0xff]
    %v164 = vld [vmem:[#allocation5 + $0x1b0] sm:$0xff]
    %v165 = vld [vmem:[#allocation5 + $0x1b8] sm:$0xff]
    %v166 = vld [vmem:[#allocation5 + $0x1c0] sm:$0xff]
    %v167 = vld [vmem:[#allocation5 + $0x1c8] sm:$0xff]
    %v168 = vld [vmem:[#allocation5 + $0x1d0] sm:$0xff]
    %v169 = vld [vmem:[#allocation5 + $0x1d8] sm:$0xff]
    %v170 = vld [vmem:[#allocation5 + $0x1e0] sm:$0xff]
    %v171 = vld [vmem:[#allocation5 + $0x1e8] sm:$0xff]
    %v172 = vld [vmem:[#allocation5 + $0x1f0] sm:$0xff]
    %v173 = vld [vmem:[#allocation5 + $0x1f8] sm:$0xff]
    %v174 = vld [vmem:[#allocation5 + $0x200] sm:$0xff]
    %v175 = vld [vmem:[#allocation5 + $0x208] sm:$0xff]
    %v176 = vld [vmem:[#allocation5 + $0x210] sm:$0xff]
    %v177 = vld [vmem:[#allocation5 + $0x218] sm:$0xff]
    %v178 = vld [vmem:[#allocation5 + $0x220] sm:$0xff]
    %v179 = vld [vmem:[#allocation5 + $0x228] sm:$0xff]
    %v180 = vld [vmem:[#allocation5 + $0x230] sm:$0xff]
    %v181 = vld [vmem:[#allocation5 + $0x238] sm:$0xff]
    %v182 = vld [vmem:[#allocation5 + $0x240] sm:$0xff]
    %v183 = vld [vmem:[#allocation5 + $0x248] sm:$0xff]
    %v184 = vld [vmem:[#allocation5 + $0x250] sm:$0xff]
    %v185 = vld [vmem:[#allocation5 + $0x258] sm:$0xff]
    %v186 = vld [vmem:[#allocation5 + $0x260] sm:$0xff]
    %v187 = vld [vmem:[#allocation5 + $0x268] sm:$0xff]
    %v188 = vld [vmem:[#allocation5 + $0x270] sm:$0xff]
    %v189 = vld [vmem:[#allocation5 + $0x278] sm:$0xff]
    %v190 = vld [vmem:[#allocation5 + $0x280] sm:$0xff]
    %v191 = vld [vmem:[#allocation5 + $0x288] sm:$0xff]
    %v192 = vld [vmem:[#allocation5 + $0x290] sm:$0xff]
    %v193 = vld [vmem:[#allocation5 + $0x298] sm:$0xff]
    %v194 = vld [vmem:[#allocation5 + $0x2a0] sm:$0xff]
    %v195 = vld [vmem:[#allocation5 + $0x2a8] sm:$0xff]
    %v196 = vld [vmem:[#allocation5 + $0x2b0] sm:$0xff]
    %v197 = vld [vmem:[#allocation5 + $0x2b8] sm:$0xff]
    %v198 = vld [vmem:[#allocation5 + $0x2c0] sm:$0xff]
    %v199 = vld [vmem:[#allocation5 + $0x2c8] sm:$0xff]
    %v200 = vld [vmem:[#allocation5 + $0x2d0] sm:$0xff]
    %v201 = vld [vmem:[#allocation5 + $0x2d8] sm:$0xff]
    %v202 = vld [vmem:[#allocation5 + $0x2e0] sm:$0xff]
    %v203 = vld [vmem:[#allocation5 + $0x2e8] sm:$0xff]
    %v204 = vld [vmem:[#allocation5 + $0x2f0] sm:$0xff]
    %v205 = vld [vmem:[#allocation5 + $0x2f8] sm:$0xff]
    %v206 = vld [vmem:[#allocation5 + $0x300] sm:$0xff]
    %v207 = vld [vmem:[#allocation5 + $0x308] sm:$0xff]
    %v208 = vld [vmem:[#allocation5 + $0x310] sm:$0xff]
    %v209 = vld [vmem:[#allocation5 + $0x318] sm:$0xff]
    %v210 = vld [vmem:[#allocation5 + $0x320] sm:$0xff]
    %v211 = vld [vmem:[#allocation5 + $0x328] sm:$0xff]
    %v212 = vld [vmem:[#allocation5 + $0x330] sm:$0xff]
    %v213 = vld [vmem:[#allocation5 + $0x338] sm:$0xff]
    %v214 = vld [vmem:[#allocation5 + $0x340] sm:$0xff]
    %v215 = vld [vmem:[#allocation5 + $0x348] sm:$0xff]
    %v216 = vld [vmem:[#allocation5 + $0x350] sm:$0xff]
    %v217 = vld [vmem:[#allocation5 + $0x358] sm:$0xff]
    %v218 = vld [vmem:[#allocation5 + $0x360] sm:$0xff]
    %v219 = vld [vmem:[#allocation5 + $0x368] sm:$0xff]
    %v220 = vld [vmem:[#allocation5 + $0x370] sm:$0xff]
    %v221 = vld [vmem:[#allocation5 + $0x378] sm:$0xff]
    %v222 = vld [vmem:[#allocation5 + $0x380] sm:$0xff]
    %v223 = vld [vmem:[#allocation5 + $0x388] sm:$0xff]
    %v224 = vld [vmem:[#allocation5 + $0x390] sm:$0xff]
    %v225 = vld [vmem:[#allocation5 + $0x398] sm:$0xff]
    %v226 = vld [vmem:[#allocation5 + $0x3a0] sm:$0xff]
    %v227 = vld [vmem:[#allocation5 + $0x3a8] sm:$0xff]
    %v228 = vld [vmem:[#allocation5 + $0x3b0] sm:$0xff]
    %v229 = vld [vmem:[#allocation5 + $0x3b8] sm:$0xff]
    %v230 = vld [vmem:[#allocation5 + $0x3c0] sm:$0xff]
    %v231 = vld [vmem:[#allocation5 + $0x3c8] sm:$0xff]
    %v232 = vld [vmem:[#allocation5 + $0x3d0] sm:$0xff]
    %v233 = vld [vmem:[#allocation5 + $0x3d8] sm:$0xff]
    %v234 = vld [vmem:[#allocation5 + $0x3e0] sm:$0xff]
    %v235 = vld [vmem:[#allocation5 + $0x3e8] sm:$0xff]
    %v236 = vld [vmem:[#allocation5 + $0x3f0] sm:$0xff]
    %v237 = vld [vmem:[#allocation5 + $0x3f8] sm:$0xff]
    %v238 = vld [vmem:[#allocation5 + $0x400] sm:$0xff]
    %v239 = vld [vmem:[#allocation5 + $0x408] sm:$0xff]
    %v240 = vld [vmem:[#allocation5 + $0x410] sm:$0xff]
    %v241 = vld [vmem:[#allocation5 + $0x418] sm:$0xff]
    %v242 = vld [vmem:[#allocation5 + $0x420] sm:$0xff]
    %v243 = vld [vmem:[#allocation5 + $0x428] sm:$0xff]
    %v244 = vld [vmem:[#allocation5 + $0x430] sm:$0xff]
    %v245 = vld [vmem:[#allocation5 + $0x438] sm:$0xff]
    %v246 = vld [vmem:[#allocation5 + $0x440] sm:$0xff]
    %v247 = vld [vmem:[#allocation5 + $0x448] sm:$0xff]
    %v248 = vld [vmem:[#allocation5 + $0x450] sm:$0xff]
    %v249 = vld [vmem:[#allocation5 + $0x458] sm:$0xff]
    %v250 = vld [vmem:[#allocation5 + $0x460] sm:$0xff]
    %v251 = vld [vmem:[#allocation5 + $0x468] sm:$0xff]
    %v252 = vld [vmem:[#allocation5 + $0x470] sm:$0xff]
    %v253 = vld [vmem:[#allocation5 + $0x478] sm:$0xff]
    %v254 = vld [vmem:[#allocation5 + $0x480] sm:$0xff]
    %v255 = vld [vmem:[#allocation5 + $0x488] sm:$0xff]
    %v256 = vld [vmem:[#allocation5 + $0x490] sm:$0xff]
    %v257 = vld [vmem:[#allocation5 + $0x498] sm:$0xff]
    %v258 = vld [vmem:[#allocation5 + $0x4a0] sm:$0xff]
    %v259 = vld [vmem:[#allocation5 + $0x4a8] sm:$0xff]
    %v260 = vld [vmem:[#allocation5 + $0x4b0] sm:$0xff]
    %v261 = vld [vmem:[#allocation5 + $0x4b8] sm:$0xff]
    %v262 = vld [vmem:[#allocation5 + $0x4c0] sm:$0xff]
    %v263 = vld [vmem:[#allocation5 + $0x4c8] sm:$0xff]
    %v264 = vld [vmem:[#allocation5 + $0x4d0] sm:$0xff]
    %v265 = vld [vmem:[#allocation5 + $0x4d8] sm:$0xff]
    %v266 = vld [vmem:[#allocation5 + $0x4e0] sm:$0xff]
    %v267 = vld [vmem:[#allocation5 + $0x4e8] sm:$0xff]
    %v268 = vld [vmem:[#allocation5 + $0x4f0] sm:$0xff]
    %v269 = vld [vmem:[#allocation5 + $0x4f8] sm:$0xff]
    %v270 = vld [vmem:[#allocation5 + $0x500] sm:$0xff]
    %v271 = vld [vmem:[#allocation5 + $0x508] sm:$0xff]
    %v272 = vld [vmem:[#allocation5 + $0x510] sm:$0xff]
    %v273 = vld [vmem:[#allocation5 + $0x518] sm:$0xff]
    %v274 = vld [vmem:[#allocation5 + $0x520] sm:$0xff]
    %v275 = vld [vmem:[#allocation5 + $0x528] sm:$0xff]
    %v276 = vld [vmem:[#allocation5 + $0x530] sm:$0xff]
    %v277 = vld [vmem:[#allocation5 + $0x538] sm:$0xff]
    %v278 = vld [vmem:[#allocation5 + $0x540] sm:$0xff]
    %v279 = vld [vmem:[#allocation5 + $0x548] sm:$0xff]
    %v280 = vld [vmem:[#allocation5 + $0x550] sm:$0xff]
    %v281 = vld [vmem:[#allocation5 + $0x558] sm:$0xff]
    %v282 = vld [vmem:[#allocation5 + $0x560] sm:$0xff]
    %v283 = vld [vmem:[#allocation5 + $0x568] sm:$0xff]
    %v284 = vld [vmem:[#allocation5 + $0x570] sm:$0xff]
    %v285 = vld [vmem:[#allocation5 + $0x578] sm:$0xff]
    %v286 = vld [vmem:[#allocation5 + $0x580] sm:$0xff]
    %v287 = vld [vmem:[#allocation5 + $0x588] sm:$0xff]
    %v288 = vld [vmem:[#allocation5 + $0x590] sm:$0xff]
    %v289 = vld [vmem:[#allocation5 + $0x598] sm:$0xff]
    %v290 = vld [vmem:[#allocation5 + $0x5a0] sm:$0xff]
    %v291 = vld [vmem:[#allocation5 + $0x5a8] sm:$0xff]
    %v292 = vld [vmem:[#allocation5 + $0x5b0] sm:$0xff]
    %v293 = vld [vmem:[#allocation5 + $0x5b8] sm:$0xff]
    %v294 = vld [vmem:[#allocation5 + $0x5c0] sm:$0xff]
    %v295 = vld [vmem:[#allocation5 + $0x5c8] sm:$0xff]
    %v296 = vld [vmem:[#allocation5 + $0x5d0] sm:$0xff]
    %v297 = vld [vmem:[#allocation5 + $0x5d8] sm:$0xff]
    %v298 = vld [vmem:[#allocation5 + $0x5e0] sm:$0xff]
    %v299 = vld [vmem:[#allocation5 + $0x5e8] sm:$0xff]
    %v300 = vld [vmem:[#allocation5 + $0x5f0] sm:$0xff]
    %v301 = vld [vmem:[#allocation5 + $0x5f8] sm:$0xff]
    %v302 = vld [vmem:[#allocation5 + $0x600] sm:$0xff]
    %v303 = vld [vmem:[#allocation5 + $0x608] sm:$0xff]
    %v304 = vld [vmem:[#allocation5 + $0x610] sm:$0xff]
    %v305 = vld [vmem:[#allocation5 + $0x618] sm:$0xff]
    %v306 = vld [vmem:[#allocation5 + $0x620] sm:$0xff]
    %v307 = vld [vmem:[#allocation5 + $0x628] sm:$0xff]
    %v308 = vld [vmem:[#allocation5 + $0x630] sm:$0xff]
    %v309 = vld [vmem:[#allocation5 + $0x638] sm:$0xff]
    %v310 = vld [vmem:[#allocation5 + $0x640] sm:$0xff]
    %v311 = vld [vmem:[#allocation5 + $0x648] sm:$0xff]
    %v312 = vld [vmem:[#allocation5 + $0x650] sm:$0xff]
    %v313 = vld [vmem:[#allocation5 + $0x658] sm:$0xff]
    %v314 = vld [vmem:[#allocation5 + $0x660] sm:$0xff]
    %v315 = vld [vmem:[#allocation5 + $0x668] sm:$0xff]
    %v316 = vld [vmem:[#allocation5 + $0x670] sm:$0xff]
    %v317 = vld [vmem:[#allocation5 + $0x678] sm:$0xff]
    %v318 = vld [vmem:[#allocation5 + $0x680] sm:$0xff]
    %v319 = vld [vmem:[#allocation5 + $0x688] sm:$0xff]
    %v320 = vld [vmem:[#allocation5 + $0x690] sm:$0xff]
    %v321 = vld [vmem:[#allocation5 + $0x698] sm:$0xff]
    %v322 = vld [vmem:[#allocation5 + $0x6a0] sm:$0xff]
    %v323 = vld [vmem:[#allocation5 + $0x6a8] sm:$0xff]
    %v324 = vld [vmem:[#allocation5 + $0x6b0] sm:$0xff]
    %v325 = vld [vmem:[#allocation5 + $0x6b8] sm:$0xff]
    %v326 = vld [vmem:[#allocation5 + $0x6c0] sm:$0xff]
    %v327 = vld [vmem:[#allocation5 + $0x6c8] sm:$0xff]
    %v328 = vld [vmem:[#allocation5 + $0x6d0] sm:$0xff]
    %v329 = vld [vmem:[#allocation5 + $0x6d8] sm:$0xff]
    %v330 = vld [vmem:[#allocation5 + $0x6e0] sm:$0xff]
    %v331 = vld [vmem:[#allocation5 + $0x6e8] sm:$0xff]
    %v332 = vld [vmem:[#allocation5 + $0x6f0] sm:$0xff]
    %v333 = vld [vmem:[#allocation5 + $0x6f8] sm:$0xff]
    %v334 = vld [vmem:[%s2] sm:$0xf]
    %v336 = vlaneseq
    %v337 = vshrl.u32 %v336, 7
    %v338 = vsub.s32 0, %v337
    %v339 = vrot.slane %v334, %v338
    %v340 = vlaneseq
    %v341 = vshrl.u32 %v340, 7
    %v342 = vsub.s32 1, %v341
    %v343 = vrot.slane %v334, %v342
    %v344 = vlaneseq
    %v345 = vshrl.u32 %v344, 7
    %v346 = vsub.s32 2, %v345
    %v347 = vrot.slane %v334, %v346
    %v348 = vlaneseq
    %v349 = vshrl.u32 %v348, 7
    %v350 = vsub.s32 3, %v349
    %v351 = vrot.slane %v334, %v350
    %v364 = vunpack.c.l.b16 %v102
    %v365 = vunpack.c.h.b16 %v102
    %v366 = vunpack.c.l.b16 %v103
    %v367 = vunpack.c.h.b16 %v103
    %v368 = vunpack.c.l.b16 %v104
    %v369 = vunpack.c.h.b16 %v104
    %v370 = vunpack.c.l.b16 %v105
    %v371 = vunpack.c.l.b16 %v106
    %v372 = vunpack.c.h.b16 %v106
    %v373 = vunpack.c.l.b16 %v107
    %v374 = vunpack.c.h.b16 %v107
    %v375 = vunpack.c.l.b16 %v108
    %v376 = vunpack.c.h.b16 %v108
    %v377 = vunpack.c.l.b16 %v109
    %v378 = vpack.c.b16 %v371, %v364
    %v379 = vpack.c.b16 %v372, %v365
    %v380 = vpack.c.b16 %v373, %v366
    %v381 = vpack.c.b16 %v374, %v367
    %v382 = vpack.c.b16 %v375, %v368
    %v383 = vpack.c.b16 %v376, %v369
    %v384 = vpack.c.b16 %v377, %v370
    %v616 = vunpack.c.l.b16 %v110
    %v617 = vunpack.c.h.b16 %v110
    %v618 = vunpack.c.l.b16 %v111
    %v619 = vunpack.c.h.b16 %v111
    %v620 = vunpack.c.l.b16 %v112
    %v621 = vunpack.c.h.b16 %v112
    %v622 = vunpack.c.l.b16 %v113
    %v623 = vunpack.c.h.b16 %v113
    %v624 = vunpack.c.l.b16 %v114
    %v625 = vunpack.c.h.b16 %v114
    %v626 = vunpack.c.l.b16 %v115
    %v627 = vunpack.c.h.b16 %v115
    %v628 = vunpack.c.l.b16 %v116
    %v629 = vunpack.c.h.b16 %v116
    %v630 = vunpack.c.l.b16 %v117
    %v631 = vunpack.c.h.b16 %v117
    %v632 = vunpack.c.l.b16 %v118
    %v633 = vunpack.c.h.b16 %v118
    %v634 = vunpack.c.l.b16 %v119
    %v635 = vunpack.c.h.b16 %v119
    %v636 = vunpack.c.l.b16 %v120
    %v637 = vunpack.c.h.b16 %v120
    %v638 = vunpack.c.l.b16 %v121
    %v639 = vunpack.c.h.b16 %v121
    %v640 = vunpack.c.l.b16 %v122
    %v641 = vunpack.c.h.b16 %v122
    %v642 = vunpack.c.l.b16 %v123
    %v643 = vunpack.c.h.b16 %v123
    %v644 = vunpack.c.l.b16 %v124
    %v645 = vunpack.c.h.b16 %v124
    %v646 = vunpack.c.l.b16 %v125
    %v647 = vunpack.c.h.b16 %v125
    %v648 = vunpack.c.l.b16 %v126
    %v649 = vunpack.c.h.b16 %v126
    %v650 = vunpack.c.l.b16 %v127
    %v651 = vunpack.c.h.b16 %v127
    %v652 = vunpack.c.l.b16 %v128
    %v653 = vunpack.c.h.b16 %v128
    %v654 = vunpack.c.l.b16 %v129
    %v655 = vunpack.c.h.b16 %v129
    %v656 = vunpack.c.l.b16 %v130
    %v657 = vunpack.c.h.b16 %v130
    %v658 = vunpack.c.l.b16 %v131
    %v659 = vunpack.c.h.b16 %v131
    %v660 = vunpack.c.l.b16 %v132
    %v661 = vunpack.c.h.b16 %v132
    %v662 = vunpack.c.l.b16 %v133
    %v663 = vunpack.c.h.b16 %v133
    %v664 = vunpack.c.l.b16 %v134
    %v665 = vunpack.c.h.b16 %v134
    %v666 = vunpack.c.l.b16 %v135
    %v667 = vunpack.c.h.b16 %v135
    %v668 = vunpack.c.l.b16 %v136
    %v669 = vunpack.c.h.b16 %v136
    %v670 = vunpack.c.l.b16 %v137
    %v671 = vunpack.c.h.b16 %v137
    %v672 = vunpack.c.l.b16 %v138
    %v673 = vunpack.c.h.b16 %v138
    %v674 = vunpack.c.l.b16 %v139
    %v675 = vunpack.c.h.b16 %v139
    %v676 = vunpack.c.l.b16 %v140
    %v677 = vunpack.c.h.b16 %v140
    %v678 = vunpack.c.l.b16 %v141
    %v679 = vunpack.c.h.b16 %v141
    %v680 = vunpack.c.l.b16 %v142
    %v681 = vunpack.c.h.b16 %v142
    %v682 = vunpack.c.l.b16 %v143
    %v683 = vunpack.c.h.b16 %v143
    %v684 = vunpack.c.l.b16 %v144
    %v685 = vunpack.c.h.b16 %v144
    %v686 = vunpack.c.l.b16 %v145
    %v687 = vunpack.c.h.b16 %v145
    %v688 = vunpack.c.l.b16 %v146
    %v689 = vunpack.c.h.b16 %v146
    %v690 = vunpack.c.l.b16 %v147
    %v691 = vunpack.c.h.b16 %v147
    %v692 = vunpack.c.l.b16 %v148
    %v693 = vunpack.c.h.b16 %v148
    %v694 = vunpack.c.l.b16 %v149
    %v695 = vunpack.c.h.b16 %v149
    %v696 = vunpack.c.l.b16 %v150
    %v697 = vunpack.c.h.b16 %v150
    %v698 = vunpack.c.l.b16 %v151
    %v699 = vunpack.c.h.b16 %v151
    %v700 = vunpack.c.l.b16 %v152
    %v701 = vunpack.c.h.b16 %v152
    %v702 = vunpack.c.l.b16 %v153
    %v703 = vunpack.c.h.b16 %v153
    %v704 = vunpack.c.l.b16 %v154
    %v705 = vunpack.c.h.b16 %v154
    %v706 = vunpack.c.l.b16 %v155
    %v707 = vunpack.c.h.b16 %v155
    %v708 = vunpack.c.l.b16 %v156
    %v709 = vunpack.c.h.b16 %v156
    %v710 = vunpack.c.l.b16 %v157
    %v711 = vunpack.c.h.b16 %v157
    %v712 = vunpack.c.l.b16 %v158
    %v713 = vunpack.c.h.b16 %v158
    %v714 = vunpack.c.l.b16 %v159
    %v715 = vunpack.c.h.b16 %v159
    %v716 = vunpack.c.l.b16 %v160
    %v717 = vunpack.c.h.b16 %v160
    %v718 = vunpack.c.l.b16 %v161
    %v719 = vunpack.c.h.b16 %v161
    %v720 = vunpack.c.l.b16 %v162
    %v721 = vunpack.c.h.b16 %v162
    %v722 = vunpack.c.l.b16 %v163
    %v723 = vunpack.c.h.b16 %v163
    %v724 = vunpack.c.l.b16 %v164
    %v725 = vunpack.c.h.b16 %v164
    %v726 = vunpack.c.l.b16 %v165
    %v727 = vunpack.c.h.b16 %v165
    %v728 = vunpack.c.l.b16 %v166
    %v729 = vunpack.c.h.b16 %v166
    %v730 = vunpack.c.l.b16 %v167
    %v731 = vunpack.c.h.b16 %v167
    %v732 = vunpack.c.l.b16 %v168
    %v733 = vunpack.c.h.b16 %v168
    %v734 = vunpack.c.l.b16 %v169
    %v735 = vunpack.c.h.b16 %v169
    %v736 = vunpack.c.l.b16 %v170
    %v737 = vunpack.c.h.b16 %v170
    %v738 = vunpack.c.l.b16 %v171
    %v739 = vunpack.c.h.b16 %v171
    %v740 = vunpack.c.l.b16 %v172
    %v741 = vunpack.c.h.b16 %v172
    %v742 = vunpack.c.l.b16 %v173
    %v743 = vunpack.c.h.b16 %v173
    %v744 = vunpack.c.l.b16 %v174
    %v745 = vunpack.c.h.b16 %v174
    %v746 = vunpack.c.l.b16 %v175
    %v747 = vunpack.c.h.b16 %v175
    %v748 = vunpack.c.l.b16 %v176
    %v749 = vunpack.c.h.b16 %v176
    %v750 = vunpack.c.l.b16 %v177
    %v751 = vunpack.c.h.b16 %v177
    %v752 = vunpack.c.l.b16 %v178
    %v753 = vunpack.c.h.b16 %v178
    %v754 = vunpack.c.l.b16 %v179
    %v755 = vunpack.c.h.b16 %v179
    %v756 = vunpack.c.l.b16 %v180
    %v757 = vunpack.c.h.b16 %v180
    %v758 = vunpack.c.l.b16 %v181
    %v759 = vunpack.c.h.b16 %v181
    %v760 = vunpack.c.l.b16 %v182
    %v761 = vunpack.c.h.b16 %v182
    %v762 = vunpack.c.l.b16 %v183
    %v763 = vunpack.c.h.b16 %v183
    %v764 = vunpack.c.l.b16 %v184
    %v765 = vunpack.c.h.b16 %v184
    %v766 = vunpack.c.l.b16 %v185
    %v767 = vunpack.c.h.b16 %v185
    %v768 = vunpack.c.l.b16 %v186
    %v769 = vunpack.c.h.b16 %v186
    %v770 = vunpack.c.l.b16 %v187
    %v771 = vunpack.c.h.b16 %v187
    %v772 = vunpack.c.l.b16 %v188
    %v773 = vunpack.c.h.b16 %v188
    %v774 = vunpack.c.l.b16 %v189
    %v775 = vunpack.c.h.b16 %v189
    %v776 = vunpack.c.l.b16 %v190
    %v777 = vunpack.c.h.b16 %v190
    %v778 = vunpack.c.l.b16 %v191
    %v779 = vunpack.c.h.b16 %v191
    %v780 = vunpack.c.l.b16 %v192
    %v781 = vunpack.c.h.b16 %v192
    %v782 = vunpack.c.l.b16 %v193
    %v783 = vunpack.c.h.b16 %v193
    %v784 = vunpack.c.l.b16 %v194
    %v785 = vunpack.c.h.b16 %v194
    %v786 = vunpack.c.l.b16 %v195
    %v787 = vunpack.c.h.b16 %v195
    %v788 = vunpack.c.l.b16 %v196
    %v789 = vunpack.c.h.b16 %v196
    %v790 = vunpack.c.l.b16 %v197
    %v791 = vunpack.c.h.b16 %v197
    %v792 = vunpack.c.l.b16 %v198
    %v793 = vunpack.c.h.b16 %v198
    %v794 = vunpack.c.l.b16 %v199
    %v795 = vunpack.c.h.b16 %v199
    %v796 = vunpack.c.l.b16 %v200
    %v797 = vunpack.c.h.b16 %v200
    %v798 = vunpack.c.l.b16 %v201
    %v799 = vunpack.c.h.b16 %v201
    %v800 = vunpack.c.l.b16 %v202
    %v801 = vunpack.c.h.b16 %v202
    %v802 = vunpack.c.l.b16 %v203
    %v803 = vunpack.c.h.b16 %v203
    %v804 = vunpack.c.l.b16 %v204
    %v805 = vunpack.c.h.b16 %v204
    %v806 = vunpack.c.l.b16 %v205
    %v807 = vunpack.c.h.b16 %v205
    %v808 = vunpack.c.l.b16 %v206
    %v809 = vunpack.c.h.b16 %v206
    %v810 = vunpack.c.l.b16 %v207
    %v811 = vunpack.c.h.b16 %v207
    %v812 = vunpack.c.l.b16 %v208
    %v813 = vunpack.c.h.b16 %v208
    %v814 = vunpack.c.l.b16 %v209
    %v815 = vunpack.c.h.b16 %v209
    %v816 = vunpack.c.l.b16 %v210
    %v817 = vunpack.c.h.b16 %v210
    %v818 = vunpack.c.l.b16 %v211
    %v819 = vunpack.c.h.b16 %v211
    %v820 = vunpack.c.l.b16 %v212
    %v821 = vunpack.c.h.b16 %v212
    %v822 = vunpack.c.l.b16 %v213
    %v823 = vunpack.c.h.b16 %v213
    %v824 = vunpack.c.l.b16 %v214
    %v825 = vunpack.c.h.b16 %v214
    %v826 = vunpack.c.l.b16 %v215
    %v827 = vunpack.c.h.b16 %v215
    %v828 = vunpack.c.l.b16 %v216
    %v829 = vunpack.c.h.b16 %v216
    %v830 = vunpack.c.l.b16 %v217
    %v831 = vunpack.c.h.b16 %v217
    %v832 = vunpack.c.l.b16 %v218
    %v833 = vunpack.c.h.b16 %v218
    %v834 = vunpack.c.l.b16 %v219
    %v835 = vunpack.c.h.b16 %v219
    %v836 = vunpack.c.l.b16 %v220
    %v837 = vunpack.c.h.b16 %v220
    %v838 = vunpack.c.l.b16 %v221
    %v839 = vunpack.c.h.b16 %v221
    %v840 = vunpack.c.l.b16 %v222
    %v841 = vunpack.c.h.b16 %v222
    %v842 = vunpack.c.l.b16 %v223
    %v843 = vunpack.c.h.b16 %v223
    %v844 = vunpack.c.l.b16 %v224
    %v845 = vunpack.c.h.b16 %v224
    %v846 = vunpack.c.l.b16 %v225
    %v847 = vunpack.c.h.b16 %v225
    %v848 = vunpack.c.l.b16 %v226
    %v849 = vunpack.c.h.b16 %v226
    %v850 = vunpack.c.l.b16 %v227
    %v851 = vunpack.c.h.b16 %v227
    %v852 = vunpack.c.l.b16 %v228
    %v853 = vunpack.c.h.b16 %v228
    %v854 = vunpack.c.l.b16 %v229
    %v855 = vunpack.c.h.b16 %v229
    %v856 = vunpack.c.l.b16 %v230
    %v857 = vunpack.c.h.b16 %v230
    %v858 = vunpack.c.l.b16 %v231
    %v859 = vunpack.c.h.b16 %v231
    %v860 = vunpack.c.l.b16 %v232
    %v861 = vunpack.c.h.b16 %v232
    %v862 = vunpack.c.l.b16 %v233
    %v863 = vunpack.c.h.b16 %v233
    %v864 = vunpack.c.l.b16 %v234
    %v865 = vunpack.c.h.b16 %v234
    %v866 = vunpack.c.l.b16 %v235
    %v867 = vunpack.c.h.b16 %v235
    %v868 = vunpack.c.l.b16 %v236
    %v869 = vunpack.c.h.b16 %v236
    %v870 = vunpack.c.l.b16 %v237
    %v871 = vunpack.c.h.b16 %v237
    %v872 = vunpack.c.l.b16 %v238
    %v873 = vunpack.c.h.b16 %v238
    %v874 = vunpack.c.l.b16 %v239
    %v875 = vunpack.c.h.b16 %v239
    %v876 = vunpack.c.l.b16 %v240
    %v877 = vunpack.c.h.b16 %v240
    %v878 = vunpack.c.l.b16 %v241
    %v879 = vunpack.c.h.b16 %v241
    %v880 = vunpack.c.l.b16 %v242
    %v881 = vunpack.c.h.b16 %v242
    %v882 = vunpack.c.l.b16 %v243
    %v883 = vunpack.c.h.b16 %v243
    %v884 = vunpack.c.l.b16 %v244
    %v885 = vunpack.c.h.b16 %v244
    %v886 = vunpack.c.l.b16 %v245
    %v887 = vunpack.c.h.b16 %v245
    %v888 = vunpack.c.l.b16 %v246
    %v889 = vunpack.c.h.b16 %v246
    %v890 = vunpack.c.l.b16 %v247
    %v891 = vunpack.c.h.b16 %v247
    %v892 = vunpack.c.l.b16 %v248
    %v893 = vunpack.c.h.b16 %v248
    %v894 = vunpack.c.l.b16 %v249
    %v895 = vunpack.c.h.b16 %v249
    %v896 = vunpack.c.l.b16 %v250
    %v897 = vunpack.c.h.b16 %v250
    %v898 = vunpack.c.l.b16 %v251
    %v899 = vunpack.c.h.b16 %v251
    %v900 = vunpack.c.l.b16 %v252
    %v901 = vunpack.c.h.b16 %v252
    %v902 = vunpack.c.l.b16 %v253
    %v903 = vunpack.c.h.b16 %v253
    %v904 = vunpack.c.l.b16 %v254
    %v905 = vunpack.c.h.b16 %v254
    %v906 = vunpack.c.l.b16 %v255
    %v907 = vunpack.c.h.b16 %v255
    %v908 = vunpack.c.l.b16 %v256
    %v909 = vunpack.c.h.b16 %v256
    %v910 = vunpack.c.l.b16 %v257
    %v911 = vunpack.c.h.b16 %v257
    %v912 = vunpack.c.l.b16 %v258
    %v913 = vunpack.c.h.b16 %v258
    %v914 = vunpack.c.l.b16 %v259
    %v915 = vunpack.c.h.b16 %v259
    %v916 = vunpack.c.l.b16 %v260
    %v917 = vunpack.c.h.b16 %v260
    %v918 = vunpack.c.l.b16 %v261
    %v919 = vunpack.c.h.b16 %v261
    %v920 = vunpack.c.l.b16 %v262
    %v921 = vunpack.c.h.b16 %v262
    %v922 = vunpack.c.l.b16 %v263
    %v923 = vunpack.c.h.b16 %v263
    %v924 = vunpack.c.l.b16 %v264
    %v925 = vunpack.c.h.b16 %v264
    %v926 = vunpack.c.l.b16 %v265
    %v927 = vunpack.c.h.b16 %v265
    %v928 = vunpack.c.l.b16 %v266
    %v929 = vunpack.c.h.b16 %v266
    %v930 = vunpack.c.l.b16 %v267
    %v931 = vunpack.c.h.b16 %v267
    %v932 = vunpack.c.l.b16 %v268
    %v933 = vunpack.c.h.b16 %v268
    %v934 = vunpack.c.l.b16 %v269
    %v935 = vunpack.c.h.b16 %v269
    %v936 = vunpack.c.l.b16 %v270
    %v937 = vunpack.c.h.b16 %v270
    %v938 = vunpack.c.l.b16 %v271
    %v939 = vunpack.c.h.b16 %v271
    %v940 = vunpack.c.l.b16 %v272
    %v941 = vunpack.c.h.b16 %v272
    %v942 = vunpack.c.l.b16 %v273
    %v943 = vunpack.c.h.b16 %v273
    %v944 = vunpack.c.l.b16 %v274
    %v945 = vunpack.c.h.b16 %v274
    %v946 = vunpack.c.l.b16 %v275
    %v947 = vunpack.c.h.b16 %v275
    %v948 = vunpack.c.l.b16 %v276
    %v949 = vunpack.c.h.b16 %v276
    %v950 = vunpack.c.l.b16 %v277
    %v951 = vunpack.c.h.b16 %v277
    %v952 = vunpack.c.l.b16 %v278
    %v953 = vunpack.c.h.b16 %v278
    %v954 = vunpack.c.l.b16 %v279
    %v955 = vunpack.c.h.b16 %v279
    %v956 = vunpack.c.l.b16 %v280
    %v957 = vunpack.c.h.b16 %v280
    %v958 = vunpack.c.l.b16 %v281
    %v959 = vunpack.c.h.b16 %v281
    %v960 = vunpack.c.l.b16 %v282
    %v961 = vunpack.c.h.b16 %v282
    %v962 = vunpack.c.l.b16 %v283
    %v963 = vunpack.c.h.b16 %v283
    %v964 = vunpack.c.l.b16 %v284
    %v965 = vunpack.c.h.b16 %v284
    %v966 = vunpack.c.l.b16 %v285
    %v967 = vunpack.c.h.b16 %v285
    %v968 = vunpack.c.l.b16 %v286
    %v969 = vunpack.c.h.b16 %v286
    %v970 = vunpack.c.l.b16 %v287
    %v971 = vunpack.c.h.b16 %v287
    %v972 = vunpack.c.l.b16 %v288
    %v973 = vunpack.c.h.b16 %v288
    %v974 = vunpack.c.l.b16 %v289
    %v975 = vunpack.c.h.b16 %v289
    %v976 = vunpack.c.l.b16 %v290
    %v977 = vunpack.c.h.b16 %v290
    %v978 = vunpack.c.l.b16 %v291
    %v979 = vunpack.c.h.b16 %v291
    %v980 = vunpack.c.l.b16 %v292
    %v981 = vunpack.c.h.b16 %v292
    %v982 = vunpack.c.l.b16 %v293
    %v983 = vunpack.c.h.b16 %v293
    %v984 = vunpack.c.l.b16 %v294
    %v985 = vunpack.c.h.b16 %v294
    %v986 = vunpack.c.l.b16 %v295
    %v987 = vunpack.c.h.b16 %v295
    %v988 = vunpack.c.l.b16 %v296
    %v989 = vunpack.c.h.b16 %v296
    %v990 = vunpack.c.l.b16 %v297
    %v991 = vunpack.c.h.b16 %v297
    %v992 = vunpack.c.l.b16 %v298
    %v993 = vunpack.c.h.b16 %v298
    %v994 = vunpack.c.l.b16 %v299
    %v995 = vunpack.c.h.b16 %v299
    %v996 = vunpack.c.l.b16 %v300
    %v997 = vunpack.c.h.b16 %v300
    %v998 = vunpack.c.l.b16 %v301
    %v999 = vunpack.c.h.b16 %v301
    %v1000 = vunpack.c.l.b16 %v302
    %v1001 = vunpack.c.h.b16 %v302
    %v1002 = vunpack.c.l.b16 %v303
    %v1003 = vunpack.c.h.b16 %v303
    %v1004 = vunpack.c.l.b16 %v304
    %v1005 = vunpack.c.h.b16 %v304
    %v1006 = vunpack.c.l.b16 %v305
    %v1007 = vunpack.c.h.b16 %v305
    %v1008 = vunpack.c.l.b16 %v306
    %v1009 = vunpack.c.h.b16 %v306
    %v1010 = vunpack.c.l.b16 %v307
    %v1011 = vunpack.c.h.b16 %v307
    %v1012 = vunpack.c.l.b16 %v308
    %v1013 = vunpack.c.h.b16 %v308
    %v1014 = vunpack.c.l.b16 %v309
    %v1015 = vunpack.c.h.b16 %v309
    %v1016 = vunpack.c.l.b16 %v310
    %v1017 = vunpack.c.h.b16 %v310
    %v1018 = vunpack.c.l.b16 %v311
    %v1019 = vunpack.c.h.b16 %v311
    %v1020 = vunpack.c.l.b16 %v312
    %v1021 = vunpack.c.h.b16 %v312
    %v1022 = vunpack.c.l.b16 %v313
    %v1023 = vunpack.c.h.b16 %v313
    %v1024 = vunpack.c.l.b16 %v314
    %v1025 = vunpack.c.h.b16 %v314
    %v1026 = vunpack.c.l.b16 %v315
    %v1027 = vunpack.c.h.b16 %v315
    %v1028 = vunpack.c.l.b16 %v316
    %v1029 = vunpack.c.h.b16 %v316
    %v1030 = vunpack.c.l.b16 %v317
    %v1031 = vunpack.c.h.b16 %v317
    %v1032 = vunpack.c.l.b16 %v318
    %v1033 = vunpack.c.h.b16 %v318
    %v1034 = vunpack.c.l.b16 %v319
    %v1035 = vunpack.c.h.b16 %v319
    %v1036 = vunpack.c.l.b16 %v320
    %v1037 = vunpack.c.h.b16 %v320
    %v1038 = vunpack.c.l.b16 %v321
    %v1039 = vunpack.c.h.b16 %v321
    %v1040 = vunpack.c.l.b16 %v322
    %v1041 = vunpack.c.h.b16 %v322
    %v1042 = vunpack.c.l.b16 %v323
    %v1043 = vunpack.c.h.b16 %v323
    %v1044 = vunpack.c.l.b16 %v324
    %v1045 = vunpack.c.h.b16 %v324
    %v1046 = vunpack.c.l.b16 %v325
    %v1047 = vunpack.c.h.b16 %v325
    %v1048 = vunpack.c.l.b16 %v326
    %v1049 = vunpack.c.h.b16 %v326
    %v1050 = vunpack.c.l.b16 %v327
    %v1051 = vunpack.c.h.b16 %v327
    %v1052 = vunpack.c.l.b16 %v328
    %v1053 = vunpack.c.h.b16 %v328
    %v1054 = vunpack.c.l.b16 %v329
    %v1055 = vunpack.c.h.b16 %v329
    %v1056 = vunpack.c.l.b16 %v330
    %v1057 = vunpack.c.h.b16 %v330
    %v1058 = vunpack.c.l.b16 %v331
    %v1059 = vunpack.c.h.b16 %v331
    %v1060 = vunpack.c.l.b16 %v332
    %v1061 = vunpack.c.h.b16 %v332
    %v1062 = vunpack.c.l.b16 %v333
    %v1063 = vunpack.c.h.b16 %v333
    %v1064 = vpack.c.b16 %v620, %v616
    %v1065 = vpack.c.b16 %v621, %v617
    %v1066 = vpack.c.b16 %v622, %v618
    %v1067 = vpack.c.b16 %v623, %v619
    %v1068 = vpack.c.b16 %v628, %v624
    %v1069 = vpack.c.b16 %v629, %v625
    %v1070 = vpack.c.b16 %v630, %v626
    %v1071 = vpack.c.b16 %v631, %v627
    %v1072 = vpack.c.b16 %v636, %v632
    %v1073 = vpack.c.b16 %v637, %v633
    %v1074 = vpack.c.b16 %v638, %v634
    %v1075 = vpack.c.b16 %v639, %v635
    %v1076 = vpack.c.b16 %v644, %v640
    %v1077 = vpack.c.b16 %v645, %v641
    %v1078 = vpack.c.b16 %v646, %v642
    %v1079 = vpack.c.b16 %v647, %v643
    %v1080 = vpack.c.b16 %v652, %v648
    %v1081 = vpack.c.b16 %v653, %v649
    %v1082 = vpack.c.b16 %v654, %v650
    %v1083 = vpack.c.b16 %v655, %v651
    %v1084 = vpack.c.b16 %v660, %v656
    %v1085 = vpack.c.b16 %v661, %v657
    %v1086 = vpack.c.b16 %v662, %v658
    %v1087 = vpack.c.b16 %v663, %v659
    %v1088 = vpack.c.b16 %v668, %v664
    %v1089 = vpack.c.b16 %v669, %v665
    %v1090 = vpack.c.b16 %v670, %v666
    %v1091 = vpack.c.b16 %v671, %v667
    %v1092 = vpack.c.b16 %v676, %v672
    %v1093 = vpack.c.b16 %v677, %v673
    %v1094 = vpack.c.b16 %v678, %v674
    %v1095 = vpack.c.b16 %v679, %v675
    %v1096 = vpack.c.b16 %v684, %v680
    %v1097 = vpack.c.b16 %v685, %v681
    %v1098 = vpack.c.b16 %v686, %v682
    %v1099 = vpack.c.b16 %v687, %v683
    %v1100 = vpack.c.b16 %v692, %v688
    %v1101 = vpack.c.b16 %v693, %v689
    %v1102 = vpack.c.b16 %v694, %v690
    %v1103 = vpack.c.b16 %v695, %v691
    %v1104 = vpack.c.b16 %v700, %v696
    %v1105 = vpack.c.b16 %v701, %v697
    %v1106 = vpack.c.b16 %v702, %v698
    %v1107 = vpack.c.b16 %v703, %v699
    %v1108 = vpack.c.b16 %v708, %v704
    %v1109 = vpack.c.b16 %v709, %v705
    %v1110 = vpack.c.b16 %v710, %v706
    %v1111 = vpack.c.b16 %v711, %v707
    %v1112 = vpack.c.b16 %v716, %v712
    %v1113 = vpack.c.b16 %v717, %v713
    %v1114 = vpack.c.b16 %v718, %v714
    %v1115 = vpack.c.b16 %v719, %v715
    %v1116 = vpack.c.b16 %v724, %v720
    %v1117 = vpack.c.b16 %v725, %v721
    %v1118 = vpack.c.b16 %v726, %v722
    %v1119 = vpack.c.b16 %v727, %v723
    %v1120 = vpack.c.b16 %v732, %v728
    %v1121 = vpack.c.b16 %v733, %v729
    %v1122 = vpack.c.b16 %v734, %v730
    %v1123 = vpack.c.b16 %v735, %v731
    %v1124 = vpack.c.b16 %v740, %v736
    %v1125 = vpack.c.b16 %v741, %v737
    %v1126 = vpack.c.b16 %v742, %v738
    %v1127 = vpack.c.b16 %v743, %v739
    %v1128 = vpack.c.b16 %v748, %v744
    %v1129 = vpack.c.b16 %v749, %v745
    %v1130 = vpack.c.b16 %v750, %v746
    %v1131 = vpack.c.b16 %v751, %v747
    %v1132 = vpack.c.b16 %v756, %v752
    %v1133 = vpack.c.b16 %v757, %v753
    %v1134 = vpack.c.b16 %v758, %v754
    %v1135 = vpack.c.b16 %v759, %v755
    %v1136 = vpack.c.b16 %v764, %v760
    %v1137 = vpack.c.b16 %v765, %v761
    %v1138 = vpack.c.b16 %v766, %v762
    %v1139 = vpack.c.b16 %v767, %v763
    %v1140 = vpack.c.b16 %v772, %v768
    %v1141 = vpack.c.b16 %v773, %v769
    %v1142 = vpack.c.b16 %v774, %v770
    %v1143 = vpack.c.b16 %v775, %v771
    %v1144 = vpack.c.b16 %v780, %v776
    %v1145 = vpack.c.b16 %v781, %v777
    %v1146 = vpack.c.b16 %v782, %v778
    %v1147 = vpack.c.b16 %v783, %v779
    %v1148 = vpack.c.b16 %v788, %v784
    %v1149 = vpack.c.b16 %v789, %v785
    %v1150 = vpack.c.b16 %v790, %v786
    %v1151 = vpack.c.b16 %v791, %v787
    %v1152 = vpack.c.b16 %v796, %v792
    %v1153 = vpack.c.b16 %v797, %v793
    %v1154 = vpack.c.b16 %v798, %v794
    %v1155 = vpack.c.b16 %v799, %v795
    %v1156 = vpack.c.b16 %v804, %v800
    %v1157 = vpack.c.b16 %v805, %v801
    %v1158 = vpack.c.b16 %v806, %v802
    %v1159 = vpack.c.b16 %v807, %v803
    %v1160 = vpack.c.b16 %v812, %v808
    %v1161 = vpack.c.b16 %v813, %v809
    %v1162 = vpack.c.b16 %v814, %v810
    %v1163 = vpack.c.b16 %v815, %v811
    %v1164 = vpack.c.b16 %v820, %v816
    %v1165 = vpack.c.b16 %v821, %v817
    %v1166 = vpack.c.b16 %v822, %v818
    %v1167 = vpack.c.b16 %v823, %v819
    %v1168 = vpack.c.b16 %v828, %v824
    %v1169 = vpack.c.b16 %v829, %v825
    %v1170 = vpack.c.b16 %v830, %v826
    %v1171 = vpack.c.b16 %v831, %v827
    %v1172 = vpack.c.b16 %v836, %v832
    %v1173 = vpack.c.b16 %v837, %v833
    %v1174 = vpack.c.b16 %v838, %v834
    %v1175 = vpack.c.b16 %v839, %v835
    %v1176 = vpack.c.b16 %v844, %v840
    %v1177 = vpack.c.b16 %v845, %v841
    %v1178 = vpack.c.b16 %v846, %v842
    %v1179 = vpack.c.b16 %v847, %v843
    %v1180 = vpack.c.b16 %v852, %v848
    %v1181 = vpack.c.b16 %v853, %v849
    %v1182 = vpack.c.b16 %v854, %v850
    %v1183 = vpack.c.b16 %v855, %v851
    %v1184 = vpack.c.b16 %v860, %v856
    %v1185 = vpack.c.b16 %v861, %v857
    %v1186 = vpack.c.b16 %v862, %v858
    %v1187 = vpack.c.b16 %v863, %v859
    %v1188 = vpack.c.b16 %v868, %v864
    %v1189 = vpack.c.b16 %v869, %v865
    %v1190 = vpack.c.b16 %v870, %v866
    %v1191 = vpack.c.b16 %v871, %v867
    %v1192 = vpack.c.b16 %v876, %v872
    %v1193 = vpack.c.b16 %v877, %v873
    %v1194 = vpack.c.b16 %v878, %v874
    %v1195 = vpack.c.b16 %v879, %v875
    %v1196 = vpack.c.b16 %v884, %v880
    %v1197 = vpack.c.b16 %v885, %v881
    %v1198 = vpack.c.b16 %v886, %v882
    %v1199 = vpack.c.b16 %v887, %v883
    %v1200 = vpack.c.b16 %v892, %v888
    %v1201 = vpack.c.b16 %v893, %v889
    %v1202 = vpack.c.b16 %v894, %v890
    %v1203 = vpack.c.b16 %v895, %v891
    %v1204 = vpack.c.b16 %v900, %v896
    %v1205 = vpack.c.b16 %v901, %v897
    %v1206 = vpack.c.b16 %v902, %v898
    %v1207 = vpack.c.b16 %v903, %v899
    %v1208 = vpack.c.b16 %v908, %v904
    %v1209 = vpack.c.b16 %v909, %v905
    %v1210 = vpack.c.b16 %v910, %v906
    %v1211 = vpack.c.b16 %v911, %v907
    %v1212 = vpack.c.b16 %v916, %v912
    %v1213 = vpack.c.b16 %v917, %v913
    %v1214 = vpack.c.b16 %v918, %v914
    %v1215 = vpack.c.b16 %v919, %v915
    %v1216 = vpack.c.b16 %v924, %v920
    %v1217 = vpack.c.b16 %v925, %v921
    %v1218 = vpack.c.b16 %v926, %v922
    %v1219 = vpack.c.b16 %v927, %v923
    %v1220 = vpack.c.b16 %v932, %v928
    %v1221 = vpack.c.b16 %v933, %v929
    %v1222 = vpack.c.b16 %v934, %v930
    %v1223 = vpack.c.b16 %v935, %v931
    %v1224 = vpack.c.b16 %v940, %v936
    %v1225 = vpack.c.b16 %v941, %v937
    %v1226 = vpack.c.b16 %v942, %v938
    %v1227 = vpack.c.b16 %v943, %v939
    %v1228 = vpack.c.b16 %v948, %v944
    %v1229 = vpack.c.b16 %v949, %v945
    %v1230 = vpack.c.b16 %v950, %v946
    %v1231 = vpack.c.b16 %v951, %v947
    %v1232 = vpack.c.b16 %v956, %v952
    %v1233 = vpack.c.b16 %v957, %v953
    %v1234 = vpack.c.b16 %v958, %v954
    %v1235 = vpack.c.b16 %v959, %v955
    %v1236 = vpack.c.b16 %v964, %v960
    %v1237 = vpack.c.b16 %v965, %v961
    %v1238 = vpack.c.b16 %v966, %v962
    %v1239 = vpack.c.b16 %v967, %v963
    %v1240 = vpack.c.b16 %v972, %v968
    %v1241 = vpack.c.b16 %v973, %v969
    %v1242 = vpack.c.b16 %v974, %v970
    %v1243 = vpack.c.b16 %v975, %v971
    %v1244 = vpack.c.b16 %v980, %v976
    %v1245 = vpack.c.b16 %v981, %v977
    %v1246 = vpack.c.b16 %v982, %v978
    %v1247 = vpack.c.b16 %v983, %v979
    %v1248 = vpack.c.b16 %v988, %v984
    %v1249 = vpack.c.b16 %v989, %v985
    %v1250 = vpack.c.b16 %v990, %v986
    %v1251 = vpack.c.b16 %v991, %v987
    %v1252 = vpack.c.b16 %v996, %v992
    %v1253 = vpack.c.b16 %v997, %v993
    %v1254 = vpack.c.b16 %v998, %v994
    %v1255 = vpack.c.b16 %v999, %v995
    %v1256 = vpack.c.b16 %v1004, %v1000
    %v1257 = vpack.c.b16 %v1005, %v1001
    %v1258 = vpack.c.b16 %v1006, %v1002
    %v1259 = vpack.c.b16 %v1007, %v1003
    %v1260 = vpack.c.b16 %v1012, %v1008
    %v1261 = vpack.c.b16 %v1013, %v1009
    %v1262 = vpack.c.b16 %v1014, %v1010
    %v1263 = vpack.c.b16 %v1015, %v1011
    %v1264 = vpack.c.b16 %v1020, %v1016
    %v1265 = vpack.c.b16 %v1021, %v1017
    %v1266 = vpack.c.b16 %v1022, %v1018
    %v1267 = vpack.c.b16 %v1023, %v1019
    %v1268 = vpack.c.b16 %v1028, %v1024
    %v1269 = vpack.c.b16 %v1029, %v1025
    %v1270 = vpack.c.b16 %v1030, %v1026
    %v1271 = vpack.c.b16 %v1031, %v1027
    %v1272 = vpack.c.b16 %v1036, %v1032
    %v1273 = vpack.c.b16 %v1037, %v1033
    %v1274 = vpack.c.b16 %v1038, %v1034
    %v1275 = vpack.c.b16 %v1039, %v1035
    %v1276 = vpack.c.b16 %v1044, %v1040
    %v1277 = vpack.c.b16 %v1045, %v1041
    %v1278 = vpack.c.b16 %v1046, %v1042
    %v1279 = vpack.c.b16 %v1047, %v1043
    %v1280 = vpack.c.b16 %v1052, %v1048
    %v1281 = vpack.c.b16 %v1053, %v1049
    %v1282 = vpack.c.b16 %v1054, %v1050
    %v1283 = vpack.c.b16 %v1055, %v1051
    %v1284 = vpack.c.b16 %v1060, %v1056
    %v1285 = vpack.c.b16 %v1061, %v1057
    %v1286 = vpack.c.b16 %v1062, %v1058
    %v1287 = vpack.c.b16 %v1063, %v1059
    %1512 = vmatprep.subr.bf16.mxu0 %v1065
    %1513 = vmatpush1.bf16.msra.mxu0 %v1064
    %1514 = vmatprep.subr.bf16.mxu0 %v1069
    %1515 = vmatpush1.bf16.msra.mxu0 %v1068
    %1516 = vmatprep.subr.bf16.mxu0 %v1073
    %1517 = vmatpush1.bf16.msra.mxu0 %v1072
    %1518 = vmatprep.subr.bf16.mxu0 %v1077
    %1519 = vmatpush1.bf16.msra.mxu0 %v1076
    %1520 = vmatprep.subr.bf16.mxu0 %v1081
    %1521 = vmatpush1.bf16.msra.mxu0 %v1080
    %1522 = vmatprep.subr.bf16.mxu0 %v1085
    %1523 = vmatpush1.bf16.msra.mxu0 %v1084
    %1524 = vmatprep.subr.bf16.mxu0 %v1089
    %1525 = vmatpush1.bf16.msra.mxu0 %v1088
    %1526 = vmatprep.subr.bf16.mxu0 %v1093
    %1527 = vmatpush1.bf16.msra.mxu0 %v1092
    %1528 = vmatprep.subr.bf16.mxu0 %v1097
    %1529 = vmatpush1.bf16.msra.mxu0 %v1096
    %1530 = vmatprep.subr.bf16.mxu0 %v1101
    %1531 = vmatpush1.bf16.msra.mxu0 %v1100
    %1532 = vmatprep.subr.bf16.mxu0 %v1105
    %1533 = vmatpush1.bf16.msra.mxu0 %v1104
    %1534 = vmatprep.subr.bf16.mxu0 %v1109
    %1535 = vmatpush1.bf16.msra.mxu0 %v1108
    %1536 = vmatprep.subr.bf16.mxu0 %v1113
    %1537 = vmatpush1.bf16.msra.mxu0 %v1112
    %1538 = vmatprep.subr.bf16.mxu0 %v1117
    %1539 = vmatpush1.bf16.msra.mxu0 %v1116
    %1540 = vmatprep.subr.bf16.mxu0 %v1121
    %1541 = vmatpush1.bf16.msra.mxu0 %v1120
    %1542 = vmatprep.subr.bf16.mxu0 %v1125
    %1543 = vmatpush1.bf16.msra.mxu0 %v1124
    %1544 = vmatprep.mubr.bf16.mxu0 %v379
    %1545 = vmatmul.mubr.bf16.gmra.mrb[0].mxu0 %v378
    %v1546 = vpop.f32.mrb[0].mxu0
    %v1547 = vadd.f32 %v339, %v1546
    %v1548 = vpop.f32.mrb[0].mxu0
    %v1549 = vadd.f32 %v343, %v1548
    %v1550 = vpop.f32.mrb[0].mxu0
    %v1551 = vadd.f32 %v339, %v1550
    %v1552 = vpop.f32.mrb[0].mxu0
    %v1553 = vadd.f32 %v343, %v1552
    %1554 = vdwg.mxu0
    %1555 = vmatprep.subr.bf16.mxu0 %v1129
    %1556 = vmatpush1.bf16.msra.mxu0 %v1128
    %1557 = vmatprep.subr.bf16.mxu0 %v1133
    %1558 = vmatpush1.bf16.msra.mxu0 %v1132
    %1559 = vmatprep.subr.bf16.mxu0 %v1137
    %1560 = vmatpush1.bf16.msra.mxu0 %v1136
    %1561 = vmatprep.subr.bf16.mxu0 %v1141
    %1562 = vmatpush1.bf16.msra.mxu0 %v1140
    %1563 = vmatprep.subr.bf16.mxu0 %v1145
    %1564 = vmatpush1.bf16.msra.mxu0 %v1144
    %1565 = vmatprep.subr.bf16.mxu0 %v1149
    %1566 = vmatpush1.bf16.msra.mxu0 %v1148
    %1567 = vmatprep.subr.bf16.mxu0 %v1153
    %1568 = vmatpush1.bf16.msra.mxu0 %v1152
    %1569 = vmatprep.subr.bf16.mxu0 %v1157
    %1570 = vmatpush1.bf16.msra.mxu0 %v1156
    %1571 = vmatprep.subr.bf16.mxu0 %v1161
    %1572 = vmatpush1.bf16.msra.mxu0 %v1160
    %1573 = vmatprep.subr.bf16.mxu0 %v1165
    %1574 = vmatpush1.bf16.msra.mxu0 %v1164
    %1575 = vmatprep.subr.bf16.mxu0 %v1169
    %1576 = vmatpush1.bf16.msra.mxu0 %v1168
    %1577 = vmatprep.subr.bf16.mxu0 %v1173
    %1578 = vmatpush1.bf16.msra.mxu0 %v1172
    %1579 = vmatprep.subr.bf16.mxu0 %v1177
    %1580 = vmatpush1.bf16.msra.mxu0 %v1176
    %1581 = vmatprep.subr.bf16.mxu0 %v1181
    %1582 = vmatpush1.bf16.msra.mxu0 %v1180
    %1583 = vmatprep.subr.bf16.mxu0 %v1185
    %1584 = vmatpush1.bf16.msra.mxu0 %v1184
    %1585 = vmatprep.subr.bf16.mxu0 %v1189
    %1586 = vmatpush1.bf16.msra.mxu0 %v1188
    %1587 = vmatprep.mubr.bf16.mxu0 %v381
    %1588 = vmatmul.mubr.bf16.gmra.mrb[0].mxu0 %v380
    %v1589 = vpop.f32.mrb[0].mxu0
    %v1590 = vadd.f32 %v1547, %v1589
    %v1591 = vpop.f32.mrb[0].mxu0
    %v1592 = vadd.f32 %v1549, %v1591
    %v1593 = vpop.f32.mrb[0].mxu0
    %v1594 = vadd.f32 %v1551, %v1593
    %v1595 = vpop.f32.mrb[0].mxu0
    %v1596 = vadd.f32 %v1553, %v1595
    %1597 = vdwg.mxu0
    %1598 = vmatprep.subr.bf16.mxu0 %v1193
    %1599 = vmatpush1.bf16.msra.mxu0 %v1192
    %1600 = vmatprep.subr.bf16.mxu0 %v1197
    %1601 = vmatpush1.bf16.msra.mxu0 %v1196
    %1602 = vmatprep.subr.bf16.mxu0 %v1201
    %1603 = vmatpush1.bf16.msra.mxu0 %v1200
    %1604 = vmatprep.subr.bf16.mxu0 %v1205
    %1605 = vmatpush1.bf16.msra.mxu0 %v1204
    %1606 = vmatprep.subr.bf16.mxu0 %v1209
    %1607 = vmatpush1.bf16.msra.mxu0 %v1208
    %1608 = vmatprep.subr.bf16.mxu0 %v1213
    %1609 = vmatpush1.bf16.msra.mxu0 %v1212
    %1610 = vmatprep.subr.bf16.mxu0 %v1217
    %1611 = vmatpush1.bf16.msra.mxu0 %v1216
    %1612 = vmatprep.subr.bf16.mxu0 %v1221
    %1613 = vmatpush1.bf16.msra.mxu0 %v1220
    %1614 = vmatprep.subr.bf16.mxu0 %v1225
    %1615 = vmatpush1.bf16.msra.mxu0 %v1224
    %1616 = vmatprep.subr.bf16.mxu0 %v1229
    %1617 = vmatpush1.bf16.msra.mxu0 %v1228
    %1618 = vmatprep.subr.bf16.mxu0 %v1233
    %1619 = vmatpush1.bf16.msra.mxu0 %v1232
    %1620 = vmatprep.subr.bf16.mxu0 %v1237
    %1621 = vmatpush1.bf16.msra.mxu0 %v1236
    %1622 = vmatprep.subr.bf16.mxu0 %v1241
    %1623 = vmatpush1.bf16.msra.mxu0 %v1240
    %1624 = vmatprep.subr.bf16.mxu0 %v1245
    %1625 = vmatpush1.bf16.msra.mxu0 %v1244
    %1626 = vmatprep.subr.bf16.mxu0 %v1249
    %1627 = vmatpush1.bf16.msra.mxu0 %v1248
    %1628 = vmatprep.subr.bf16.mxu0 %v1253
    %1629 = vmatpush1.bf16.msra.mxu0 %v1252
    %1630 = vmatprep.mubr.bf16.mxu0 %v383
    %1631 = vmatmul.mubr.bf16.gmra.mrb[0].mxu0 %v382
    %v1632 = vpop.f32.mrb[0].mxu0
    %v1633 = vadd.f32 %v1590, %v1632
    %v1634 = vpop.f32.mrb[0].mxu0
    %v1635 = vadd.f32 %v1592, %v1634
    %v1636 = vpop.f32.mrb[0].mxu0
    %v1637 = vadd.f32 %v1594, %v1636
    %v1638 = vpop.f32.mrb[0].mxu0
    %v1639 = vadd.f32 %v1596, %v1638
    %1640 = vdwg.mxu0
    %1641 = vmatprep.subr.bf16.mxu0 %v1257
    %1642 = vmatpush1.bf16.msra.mxu0 %v1256
    %1643 = vmatprep.subr.bf16.mxu0 %v1261
    %1644 = vmatpush1.bf16.msra.mxu0 %v1260
    %1645 = vmatprep.subr.bf16.mxu0 %v1265
    %1646 = vmatpush1.bf16.msra.mxu0 %v1264
    %1647 = vmatprep.subr.bf16.mxu0 %v1269
    %1648 = vmatpush1.bf16.msra.mxu0 %v1268
    %1649 = vmatprep.subr.bf16.mxu0 %v1273
    %1650 = vmatpush1.bf16.msra.mxu0 %v1272
    %1651 = vmatprep.subr.bf16.mxu0 %v1277
    %1652 = vmatpush1.bf16.msra.mxu0 %v1276
    %1653 = vmatprep.subr.bf16.mxu0 %v1281
    %1654 = vmatpush1.bf16.msra.mxu0 %v1280
    %1655 = vmatprep.subr.bf16.mxu0 %v1285
    %1656 = vmatpush1.bf16.msra.mxu0 %v1284
    %1657 = vmatprep.subr.bf16.mxu0 0
    %1658 = vmatpush1.bf16.msra.mxu0 0
    %1659 = vmatprep.subr.bf16.mxu0 0
    %1660 = vmatpush1.bf16.msra.mxu0 0
    %1661 = vmatprep.subr.bf16.mxu0 0
    %1662 = vmatpush1.bf16.msra.mxu0 0
    %1663 = vmatprep.subr.bf16.mxu0 0
    %1664 = vmatpush1.bf16.msra.mxu0 0
    %1665 = vmatprep.subr.bf16.mxu0 0
    %1666 = vmatpush1.bf16.msra.mxu0 0
    %1667 = vmatprep.subr.bf16.mxu0 0
    %1668 = vmatpush1.bf16.msra.mxu0 0
    %1669 = vmatprep.subr.bf16.mxu0 0
    %1670 = vmatpush1.bf16.msra.mxu0 0
    %1671 = vmatprep.subr.bf16.mxu0 0
    %1672 = vmatpush1.bf16.msra.mxu0 0
    %1673 = vmatprep.mubr.bf16.mxu0 0
    %1674 = vmatmul.mubr.bf16.gmra.mrb[0].mxu0 %v384
    %v1675 = vpop.f32.mrb[0].mxu0
    %v1676 = vadd.f32 %v1633, %v1675
    %v1677 = vpop.f32.mrb[0].mxu0
    %v1678 = vadd.f32 %v1635, %v1677
    %v1679 = vpop.f32.mrb[0].mxu0
    %v1680 = vadd.f32 %v1637, %v1679
    %v1681 = vpop.f32.mrb[0].mxu0
    %v1682 = vadd.f32 %v1639, %v1681
    %1683 = vdwg.mxu0
    %1684 = vmatprep.subr.bf16.mxu0 %v1067
    %1685 = vmatpush1.bf16.msra.mxu0 %v1066
    %1686 = vmatprep.subr.bf16.mxu0 %v1071
    %1687 = vmatpush1.bf16.msra.mxu0 %v1070
    %1688 = vmatprep.subr.bf16.mxu0 %v1075
    %1689 = vmatpush1.bf16.msra.mxu0 %v1074
    %1690 = vmatprep.subr.bf16.mxu0 %v1079
    %1691 = vmatpush1.bf16.msra.mxu0 %v1078
    %1692 = vmatprep.subr.bf16.mxu0 %v1083
    %1693 = vmatpush1.bf16.msra.mxu0 %v1082
    %1694 = vmatprep.subr.bf16.mxu0 %v1087
    %1695 = vmatpush1.bf16.msra.mxu0 %v1086
    %1696 = vmatprep.subr.bf16.mxu0 %v1091
    %1697 = vmatpush1.bf16.msra.mxu0 %v1090
    %1698 = vmatprep.subr.bf16.mxu0 %v1095
    %1699 = vmatpush1.bf16.msra.mxu0 %v1094
    %1700 = vmatprep.subr.bf16.mxu0 %v1099
    %1701 = vmatpush1.bf16.msra.mxu0 %v1098
    %1702 = vmatprep.subr.bf16.mxu0 %v1103
    %1703 = vmatpush1.bf16.msra.mxu0 %v1102
    %1704 = vmatprep.subr.bf16.mxu0 %v1107
    %1705 = vmatpush1.bf16.msra.mxu0 %v1106
    %1706 = vmatprep.subr.bf16.mxu0 %v1111
    %1707 = vmatpush1.bf16.msra.mxu0 %v1110
    %1708 = vmatprep.subr.bf16.mxu0 %v1115
    %1709 = vmatpush1.bf16.msra.mxu0 %v1114
    %1710 = vmatprep.subr.bf16.mxu0 %v1119
    %1711 = vmatpush1.bf16.msra.mxu0 %v1118
    %1712 = vmatprep.subr.bf16.mxu0 %v1123
    %1713 = vmatpush1.bf16.msra.mxu0 %v1122
    %1714 = vmatprep.subr.bf16.mxu0 %v1127
    %1715 = vmatpush1.bf16.msra.mxu0 %v1126
    %1716 = vmatprep.mubr.bf16.mxu0 %v379
    %1717 = vmatmul.mubr.bf16.gmra.mrb[0].mxu0 %v378
    %v1718 = vpop.f32.mrb[0].mxu0
    %v1719 = vadd.f32 %v347, %v1718
    %v1720 = vpop.f32.mrb[0].mxu0
    %v1721 = vadd.f32 %v351, %v1720
    %v1722 = vpop.f32.mrb[0].mxu0
    %v1723 = vadd.f32 %v347, %v1722
    %v1724 = vpop.f32.mrb[0].mxu0
    %v1725 = vadd.f32 %v351, %v1724
    %1726 = vdwg.mxu0
    %1727 = vmatprep.subr.bf16.mxu0 %v1131
    %1728 = vmatpush1.bf16.msra.mxu0 %v1130
    %1729 = vmatprep.subr.bf16.mxu0 %v1135
    %1730 = vmatpush1.bf16.msra.mxu0 %v1134
    %1731 = vmatprep.subr.bf16.mxu0 %v1139
    %1732 = vmatpush1.bf16.msra.mxu0 %v1138
    %1733 = vmatprep.subr.bf16.mxu0 %v1143
    %1734 = vmatpush1.bf16.msra.mxu0 %v1142
    %1735 = vmatprep.subr.bf16.mxu0 %v1147
    %1736 = vmatpush1.bf16.msra.mxu0 %v1146
    %1737 = vmatprep.subr.bf16.mxu0 %v1151
    %1738 = vmatpush1.bf16.msra.mxu0 %v1150
    %1739 = vmatprep.subr.bf16.mxu0 %v1155
    %1740 = vmatpush1.bf16.msra.mxu0 %v1154
    %1741 = vmatprep.subr.bf16.mxu0 %v1159
    %1742 = vmatpush1.bf16.msra.mxu0 %v1158
    %1743 = vmatprep.subr.bf16.mxu0 %v1163
    %1744 = vmatpush1.bf16.msra.mxu0 %v1162
    %1745 = vmatprep.subr.bf16.mxu0 %v1167
    %1746 = vmatpush1.bf16.msra.mxu0 %v1166
    %1747 = vmatprep.subr.bf16.mxu0 %v1171
    %1748 = vmatpush1.bf16.msra.mxu0 %v1170
    %1749 = vmatprep.subr.bf16.mxu0 %v1175
    %1750 = vmatpush1.bf16.msra.mxu0 %v1174
    %1751 = vmatprep.subr.bf16.mxu0 %v1179
    %1752 = vmatpush1.bf16.msra.mxu0 %v1178
    %1753 = vmatprep.subr.bf16.mxu0 %v1183
    %1754 = vmatpush1.bf16.msra.mxu0 %v1182
    %1755 = vmatprep.subr.bf16.mxu0 %v1187
    %1756 = vmatpush1.bf16.msra.mxu0 %v1186
    %1757 = vmatprep.subr.bf16.mxu0 %v1191
    %1758 = vmatpush1.bf16.msra.mxu0 %v1190
    %1759 = vmatprep.mubr.bf16.mxu0 %v381
    %1760 = vmatmul.mubr.bf16.gmra.mrb[0].mxu0 %v380
    %v1761 = vpop.f32.mrb[0].mxu0
    %v1762 = vadd.f32 %v1719, %v1761
    %v1763 = vpop.f32.mrb[0].mxu0
    %v1764 = vadd.f32 %v1721, %v1763
    %v1765 = vpop.f32.mrb[0].mxu0
    %v1766 = vadd.f32 %v1723, %v1765
    %v1767 = vpop.f32.mrb[0].mxu0
    %v1768 = vadd.f32 %v1725, %v1767
    %1769 = vdwg.mxu0
    %1770 = vmatprep.subr.bf16.mxu0 %v1195
    %1771 = vmatpush1.bf16.msra.mxu0 %v1194
    %1772 = vmatprep.subr.bf16.mxu0 %v1199
    %1773 = vmatpush1.bf16.msra.mxu0 %v1198
    %1774 = vmatprep.subr.bf16.mxu0 %v1203
    %1775 = vmatpush1.bf16.msra.mxu0 %v1202
    %1776 = vmatprep.subr.bf16.mxu0 %v1207
    %1777 = vmatpush1.bf16.msra.mxu0 %v1206
    %1778 = vmatprep.subr.bf16.mxu0 %v1211
    %1779 = vmatpush1.bf16.msra.mxu0 %v1210
    %1780 = vmatprep.subr.bf16.mxu0 %v1215
    %1781 = vmatpush1.bf16.msra.mxu0 %v1214
    %1782 = vmatprep.subr.bf16.mxu0 %v1219
    %1783 = vmatpush1.bf16.msra.mxu0 %v1218
    %1784 = vmatprep.subr.bf16.mxu0 %v1223
    %1785 = vmatpush1.bf16.msra.mxu0 %v1222
    %1786 = vmatprep.subr.bf16.mxu0 %v1227
    %1787 = vmatpush1.bf16.msra.mxu0 %v1226
    %1788 = vmatprep.subr.bf16.mxu0 %v1231
    %1789 = vmatpush1.bf16.msra.mxu0 %v1230
    %1790 = vmatprep.subr.bf16.mxu0 %v1235
    %1791 = vmatpush1.bf16.msra.mxu0 %v1234
    %1792 = vmatprep.subr.bf16.mxu0 %v1239
    %1793 = vmatpush1.bf16.msra.mxu0 %v1238
    %1794 = vmatprep.subr.bf16.mxu0 %v1243
    %1795 = vmatpush1.bf16.msra.mxu0 %v1242
    %1796 = vmatprep.subr.bf16.mxu0 %v1247
    %1797 = vmatpush1.bf16.msra.mxu0 %v1246
    %1798 = vmatprep.subr.bf16.mxu0 %v1251
    %1799 = vmatpush1.bf16.msra.mxu0 %v1250
    %1800 = vmatprep.subr.bf16.mxu0 %v1255
    %1801 = vmatpush1.bf16.msra.mxu0 %v1254
    %1802 = vmatprep.mubr.bf16.mxu0 %v383
    %1803 = vmatmul.mubr.bf16.gmra.mrb[0].mxu0 %v382
    %v1804 = vpop.f32.mrb[0].mxu0
    %v1805 = vadd.f32 %v1762, %v1804
    %v1806 = vpop.f32.mrb[0].mxu0
    %v1807 = vadd.f32 %v1764, %v1806
    %v1808 = vpop.f32.mrb[0].mxu0
    %v1809 = vadd.f32 %v1766, %v1808
    %v1810 = vpop.f32.mrb[0].mxu0
    %v1811 = vadd.f32 %v1768, %v1810
    %1812 = vdwg.mxu0
    %1813 = vmatprep.subr.bf16.mxu0 %v1259
    %1814 = vmatpush1.bf16.msra.mxu0 %v1258
    %1815 = vmatprep.subr.bf16.mxu0 %v1263
    %1816 = vmatpush1.bf16.msra.mxu0 %v1262
    %1817 = vmatprep.subr.bf16.mxu0 %v1267
    %1818 = vmatpush1.bf16.msra.mxu0 %v1266
    %1819 = vmatprep.subr.bf16.mxu0 %v1271
    %1820 = vmatpush1.bf16.msra.mxu0 %v1270
    %1821 = vmatprep.subr.bf16.mxu0 %v1275
    %1822 = vmatpush1.bf16.msra.mxu0 %v1274
    %1823 = vmatprep.subr.bf16.mxu0 %v1279
    %1824 = vmatpush1.bf16.msra.mxu0 %v1278
    %1825 = vmatprep.subr.bf16.mxu0 %v1283
    %1826 = vmatpush1.bf16.msra.mxu0 %v1282
    %1827 = vmatprep.subr.bf16.mxu0 %v1287
    %1828 = vmatpush1.bf16.msra.mxu0 %v1286
    %1829 = vmatprep.subr.bf16.mxu0 0
    %1830 = vmatpush1.bf16.msra.mxu0 0
    %1831 = vmatprep.subr.bf16.mxu0 0
    %1832 = vmatpush1.bf16.msra.mxu0 0
    %1833 = vmatprep.subr.bf16.mxu0 0
    %1834 = vmatpush1.bf16.msra.mxu0 0
    %1835 = vmatprep.subr.bf16.mxu0 0
    %1836 = vmatpush1.bf16.msra.mxu0 0
    %1837 = vmatprep.subr.bf16.mxu0 0
    %1838 = vmatpush1.bf16.msra.mxu0 0
    %1839 = vmatprep.subr.bf16.mxu0 0
    %1840 = vmatpush1.bf16.msra.mxu0 0
    %1841 = vmatprep.subr.bf16.mxu0 0
    %1842 = vmatpush1.bf16.msra.mxu0 0
    %1843 = vmatprep.subr.bf16.mxu0 0
    %1844 = vmatpush1.bf16.msra.mxu0 0
    %1845 = vmatprep.mubr.bf16.mxu0 0
    %1846 = vmatmul.mubr.bf16.gmra.mrb[0].mxu0 %v384
    %v1847 = vpop.f32.mrb[0].mxu0
    %v1848 = vadd.f32 %v1805, %v1847
    %v1849 = vpop.f32.mrb[0].mxu0
    %v1850 = vadd.f32 %v1807, %v1849
    %v1851 = vpop.f32.mrb[0].mxu0
    %v1852 = vadd.f32 %v1809, %v1851
    %v1853 = vpop.f32.mrb[0].mxu0
    %v1854 = vadd.f32 %v1811, %v1853
    %1855 = vdwg.mxu0
    %v1856 = vmax.f32 %v1676, 0.0
    %v1857 = vmax.f32 %v1678, 0.0
    %v1858 = vmax.f32 %v1848, 0.0
    %v1859 = vmax.f32 %v1850, 0.0
    %v1860 = vmax.f32 %v1680, 0.0
    %v1861 = vmax.f32 %v1682, 0.0
    %v1862 = vmax.f32 %v1852, 0.0
    %v1863 = vmax.f32 %v1854, 0.0
    %v1864 = vpack.c.bf16 %v1860, %v1856
    %v1865 = vpack.c.bf16 %v1861, %v1857
    %v1866 = vpack.c.bf16 %v1862, %v1858
    %v1867 = vpack.c.bf16 %v1863, %v1859
    %v1868 = vld [vmem:[#allocation7] sm:$0xff]
    %v1869 = vld [vmem:[#allocation7 + $0x8] sm:$0xff]
    %v1870 = vld [vmem:[#allocation7 + $0x10] sm:$0xff]
    %v1871 = vld [vmem:[#allocation7 + $0x18] sm:$0xff]
    %v1872 = vld [vmem:[#allocation7 + $0x20] sm:$0xff]
    %v1873 = vld [vmem:[#allocation7 + $0x28] sm:$0xff]
    %v1874 = vld [vmem:[#allocation7 + $0x30] sm:$0xff]
    %v1875 = vld [vmem:[#allocation7 + $0x38] sm:$0xff]
    %v1876 = vld [vmem:[#allocation7 + $0x40] sm:$0xff]
    %v1877 = vld [vmem:[#allocation7 + $0x48] sm:$0xff]
    %v1878 = vld [vmem:[#allocation7 + $0x50] sm:$0xff]
    %v1879 = vld [vmem:[#allocation7 + $0x58] sm:$0xff]
    %v1880 = vld [vmem:[#allocation7 + $0x60] sm:$0xff]
    %v1881 = vld [vmem:[#allocation7 + $0x68] sm:$0xff]
    %v1882 = vld [vmem:[#allocation7 + $0x70] sm:$0xff]
    %v1883 = vld [vmem:[#allocation7 + $0x78] sm:$0xff]
    %v1884 = vld [vmem:[#allocation7 + $0x80] sm:$0xff]
    %v1885 = vld [vmem:[#allocation7 + $0x88] sm:$0xff]
    %v1886 = vld [vmem:[#allocation7 + $0x90] sm:$0xff]
    %v1887 = vld [vmem:[#allocation7 + $0x98] sm:$0xff]
    %v1888 = vld [vmem:[#allocation7 + $0xa0] sm:$0xff]
    %v1889 = vld [vmem:[#allocation7 + $0xa8] sm:$0xff]
    %v1890 = vld [vmem:[#allocation7 + $0xb0] sm:$0xff]
    %v1891 = vld [vmem:[#allocation7 + $0xb8] sm:$0xff]
    %v1892 = vld [vmem:[#allocation7 + $0xc0] sm:$0xff]
    %v1893 = vld [vmem:[#allocation7 + $0xc8] sm:$0xff]
    %v1894 = vld [vmem:[#allocation7 + $0xd0] sm:$0xff]
    %v1895 = vld [vmem:[#allocation7 + $0xd8] sm:$0xff]
    %v1896 = vld [vmem:[#allocation7 + $0xe0] sm:$0xff]
    %v1897 = vld [vmem:[#allocation7 + $0xe8] sm:$0xff]
    %v1898 = vld [vmem:[#allocation7 + $0xf0] sm:$0xff]
    %v1899 = vld [vmem:[#allocation7 + $0xf8] sm:$0xff]
    %v1900 = vld [vmem:[#allocation7 + $0x100] sm:$0xff]
    %v1901 = vld [vmem:[#allocation7 + $0x108] sm:$0xff]
    %v1902 = vld [vmem:[#allocation7 + $0x110] sm:$0xff]
    %v1903 = vld [vmem:[#allocation7 + $0x118] sm:$0xff]
    %v1904 = vld [vmem:[#allocation7 + $0x120] sm:$0xff]
    %v1905 = vld [vmem:[#allocation7 + $0x128] sm:$0xff]
    %v1906 = vld [vmem:[#allocation7 + $0x130] sm:$0xff]
    %v1907 = vld [vmem:[#allocation7 + $0x138] sm:$0xff]
    %v1908 = vld [vmem:[#allocation7 + $0x140] sm:$0xff]
    %v1909 = vld [vmem:[#allocation7 + $0x148] sm:$0xff]
    %v1910 = vld [vmem:[#allocation7 + $0x150] sm:$0xff]
    %v1911 = vld [vmem:[#allocation7 + $0x158] sm:$0xff]
    %v1912 = vld [vmem:[#allocation7 + $0x160] sm:$0xff]
    %v1913 = vld [vmem:[#allocation7 + $0x168] sm:$0xff]
    %v1914 = vld [vmem:[#allocation7 + $0x170] sm:$0xff]
    %v1915 = vld [vmem:[#allocation7 + $0x178] sm:$0xff]
    %v1916 = vld [vmem:[#allocation7 + $0x180] sm:$0xff]
    %v1917 = vld [vmem:[#allocation7 + $0x188] sm:$0xff]
    %v1918 = vld [vmem:[#allocation7 + $0x190] sm:$0xff]
    %v1919 = vld [vmem:[#allocation7 + $0x198] sm:$0xff]
    %v1920 = vld [vmem:[#allocation7 + $0x1a0] sm:$0xff]
    %v1921 = vld [vmem:[#allocation7 + $0x1a8] sm:$0xff]
    %v1922 = vld [vmem:[#allocation7 + $0x1b0] sm:$0xff]
    %v1923 = vld [vmem:[#allocation7 + $0x1b8] sm:$0xff]
    %v1924 = vld [vmem:[#allocation7 + $0x1c0] sm:$0xff]
    %v1925 = vld [vmem:[#allocation7 + $0x1c8] sm:$0xff]
    %v1926 = vld [vmem:[#allocation7 + $0x1d0] sm:$0xff]
    %v1927 = vld [vmem:[#allocation7 + $0x1d8] sm:$0xff]
    %v1928 = vld [vmem:[#allocation7 + $0x1e0] sm:$0xff]
    %v1929 = vld [vmem:[#allocation7 + $0x1e8] sm:$0xff]
    %v1930 = vld [vmem:[#allocation7 + $0x1f0] sm:$0xff]
    %v1931 = vld [vmem:[#allocation7 + $0x1f8] sm:$0xff]
    %v1932 = vld [vmem:[#allocation7 + $0x200] sm:$0xff]
    %v1933 = vld [vmem:[#allocation7 + $0x208] sm:$0xff]
    %v1934 = vld [vmem:[#allocation7 + $0x210] sm:$0xff]
    %v1935 = vld [vmem:[#allocation7 + $0x218] sm:$0xff]
    %v1936 = vld [vmem:[#allocation7 + $0x220] sm:$0xff]
    %v1937 = vld [vmem:[#allocation7 + $0x228] sm:$0xff]
    %v1938 = vld [vmem:[#allocation7 + $0x230] sm:$0xff]
    %v1939 = vld [vmem:[#allocation7 + $0x238] sm:$0xff]
    %v1940 = vld [vmem:[#allocation7 + $0x240] sm:$0xff]
    %v1941 = vld [vmem:[#allocation7 + $0x248] sm:$0xff]
    %v1942 = vld [vmem:[#allocation7 + $0x250] sm:$0xff]
    %v1943 = vld [vmem:[#allocation7 + $0x258] sm:$0xff]
    %v1944 = vld [vmem:[#allocation7 + $0x260] sm:$0xff]
    %v1945 = vld [vmem:[#allocation7 + $0x268] sm:$0xff]
    %v1946 = vld [vmem:[#allocation7 + $0x270] sm:$0xff]
    %v1947 = vld [vmem:[#allocation7 + $0x278] sm:$0xff]
    %v1948 = vld [vmem:[#allocation7 + $0x280] sm:$0xff]
    %v1949 = vld [vmem:[#allocation7 + $0x288] sm:$0xff]
    %v1950 = vld [vmem:[#allocation7 + $0x290] sm:$0xff]
    %v1951 = vld [vmem:[#allocation7 + $0x298] sm:$0xff]
    %v1952 = vld [vmem:[#allocation7 + $0x2a0] sm:$0xff]
    %v1953 = vld [vmem:[#allocation7 + $0x2a8] sm:$0xff]
    %v1954 = vld [vmem:[#allocation7 + $0x2b0] sm:$0xff]
    %v1955 = vld [vmem:[#allocation7 + $0x2b8] sm:$0xff]
    %v1956 = vld [vmem:[#allocation7 + $0x2c0] sm:$0xff]
    %v1957 = vld [vmem:[#allocation7 + $0x2c8] sm:$0xff]
    %v1958 = vld [vmem:[#allocation7 + $0x2d0] sm:$0xff]
    %v1959 = vld [vmem:[#allocation7 + $0x2d8] sm:$0xff]
    %v1960 = vld [vmem:[#allocation7 + $0x2e0] sm:$0xff]
    %v1961 = vld [vmem:[#allocation7 + $0x2e8] sm:$0xff]
    %v1962 = vld [vmem:[#allocation7 + $0x2f0] sm:$0xff]
    %v1963 = vld [vmem:[#allocation7 + $0x2f8] sm:$0xff]
    %v1964 = vld [vmem:[#allocation7 + $0x300] sm:$0xff]
    %v1965 = vld [vmem:[#allocation7 + $0x308] sm:$0xff]
    %v1966 = vld [vmem:[#allocation7 + $0x310] sm:$0xff]
    %v1967 = vld [vmem:[#allocation7 + $0x318] sm:$0xff]
    %v1968 = vld [vmem:[#allocation7 + $0x320] sm:$0xff]
    %v1969 = vld [vmem:[#allocation7 + $0x328] sm:$0xff]
    %v1970 = vld [vmem:[#allocation7 + $0x330] sm:$0xff]
    %v1971 = vld [vmem:[#allocation7 + $0x338] sm:$0xff]
    %v1972 = vld [vmem:[#allocation7 + $0x340] sm:$0xff]
    %v1973 = vld [vmem:[#allocation7 + $0x348] sm:$0xff]
    %v1974 = vld [vmem:[#allocation7 + $0x350] sm:$0xff]
    %v1975 = vld [vmem:[#allocation7 + $0x358] sm:$0xff]
    %v1976 = vld [vmem:[#allocation7 + $0x360] sm:$0xff]
    %v1977 = vld [vmem:[#allocation7 + $0x368] sm:$0xff]
    %v1978 = vld [vmem:[#allocation7 + $0x370] sm:$0xff]
    %v1979 = vld [vmem:[#allocation7 + $0x378] sm:$0xff]
    %v1980 = vld [vmem:[#allocation7 + $0x380] sm:$0xff]
    %v1981 = vld [vmem:[#allocation7 + $0x388] sm:$0xff]
    %v1982 = vld [vmem:[#allocation7 + $0x390] sm:$0xff]
    %v1983 = vld [vmem:[#allocation7 + $0x398] sm:$0xff]
    %v1984 = vld [vmem:[#allocation7 + $0x3a0] sm:$0xff]
    %v1985 = vld [vmem:[#allocation7 + $0x3a8] sm:$0xff]
    %v1986 = vld [vmem:[#allocation7 + $0x3b0] sm:$0xff]
    %v1987 = vld [vmem:[#allocation7 + $0x3b8] sm:$0xff]
    %v1988 = vld [vmem:[#allocation7 + $0x3c0] sm:$0xff]
    %v1989 = vld [vmem:[#allocation7 + $0x3c8] sm:$0xff]
    %v1990 = vld [vmem:[#allocation7 + $0x3d0] sm:$0xff]
    %v1991 = vld [vmem:[#allocation7 + $0x3d8] sm:$0xff]
    %v1992 = vld [vmem:[#allocation7 + $0x3e0] sm:$0xff]
    %v1993 = vld [vmem:[#allocation7 + $0x3e8] sm:$0xff]
    %v1994 = vld [vmem:[#allocation7 + $0x3f0] sm:$0xff]
    %v1995 = vld [vmem:[#allocation7 + $0x3f8] sm:$0xff]
    %v1996 = vld [vmem:[%s4] sm:$0xf]
    %v1998 = vlaneseq
    %v1999 = vshrl.u32 %v1998, 7
    %v2000 = vsub.s32 0, %v1999
    %v2001 = vrot.slane %v1996, %v2000
    %v2002 = vlaneseq
    %v2003 = vshrl.u32 %v2002, 7
    %v2004 = vsub.s32 1, %v2003
    %v2005 = vrot.slane %v1996, %v2004
    %v2006 = vlaneseq
    %v2007 = vshrl.u32 %v2006, 7
    %v2008 = vsub.s32 2, %v2007
    %v2009 = vrot.slane %v1996, %v2008
    %v2010 = vlaneseq
    %v2011 = vshrl.u32 %v2010, 7
    %v2012 = vsub.s32 3, %v2011
    %v2013 = vrot.slane %v1996, %v2012
    %v2146 = vunpack.c.l.b16 %v1868
    %v2147 = vunpack.c.h.b16 %v1868
    %v2148 = vunpack.c.l.b16 %v1869
    %v2149 = vunpack.c.h.b16 %v1869
    %v2150 = vunpack.c.l.b16 %v1870
    %v2151 = vunpack.c.h.b16 %v1870
    %v2152 = vunpack.c.l.b16 %v1871
    %v2153 = vunpack.c.h.b16 %v1871
    %v2154 = vunpack.c.l.b16 %v1872
    %v2155 = vunpack.c.h.b16 %v1872
    %v2156 = vunpack.c.l.b16 %v1873
    %v2157 = vunpack.c.h.b16 %v1873
    %v2158 = vunpack.c.l.b16 %v1874
    %v2159 = vunpack.c.h.b16 %v1874
    %v2160 = vunpack.c.l.b16 %v1875
    %v2161 = vunpack.c.h.b16 %v1875
    %v2162 = vunpack.c.l.b16 %v1876
    %v2163 = vunpack.c.h.b16 %v1876
    %v2164 = vunpack.c.l.b16 %v1877
    %v2165 = vunpack.c.h.b16 %v1877
    %v2166 = vunpack.c.l.b16 %v1878
    %v2167 = vunpack.c.h.b16 %v1878
    %v2168 = vunpack.c.l.b16 %v1879
    %v2169 = vunpack.c.h.b16 %v1879
    %v2170 = vunpack.c.l.b16 %v1880
    %v2171 = vunpack.c.h.b16 %v1880
    %v2172 = vunpack.c.l.b16 %v1881
    %v2173 = vunpack.c.h.b16 %v1881
    %v2174 = vunpack.c.l.b16 %v1882
    %v2175 = vunpack.c.h.b16 %v1882
    %v2176 = vunpack.c.l.b16 %v1883
    %v2177 = vunpack.c.h.b16 %v1883
    %v2178 = vunpack.c.l.b16 %v1884
    %v2179 = vunpack.c.h.b16 %v1884
    %v2180 = vunpack.c.l.b16 %v1885
    %v2181 = vunpack.c.h.b16 %v1885
    %v2182 = vunpack.c.l.b16 %v1886
    %v2183 = vunpack.c.h.b16 %v1886
    %v2184 = vunpack.c.l.b16 %v1887
    %v2185 = vunpack.c.h.b16 %v1887
    %v2186 = vunpack.c.l.b16 %v1888
    %v2187 = vunpack.c.h.b16 %v1888
    %v2188 = vunpack.c.l.b16 %v1889
    %v2189 = vunpack.c.h.b16 %v1889
    %v2190 = vunpack.c.l.b16 %v1890
    %v2191 = vunpack.c.h.b16 %v1890
    %v2192 = vunpack.c.l.b16 %v1891
    %v2193 = vunpack.c.h.b16 %v1891
    %v2194 = vunpack.c.l.b16 %v1892
    %v2195 = vunpack.c.h.b16 %v1892
    %v2196 = vunpack.c.l.b16 %v1893
    %v2197 = vunpack.c.h.b16 %v1893
    %v2198 = vunpack.c.l.b16 %v1894
    %v2199 = vunpack.c.h.b16 %v1894
    %v2200 = vunpack.c.l.b16 %v1895
    %v2201 = vunpack.c.h.b16 %v1895
    %v2202 = vunpack.c.l.b16 %v1896
    %v2203 = vunpack.c.h.b16 %v1896
    %v2204 = vunpack.c.l.b16 %v1897
    %v2205 = vunpack.c.h.b16 %v1897
    %v2206 = vunpack.c.l.b16 %v1898
    %v2207 = vunpack.c.h.b16 %v1898
    %v2208 = vunpack.c.l.b16 %v1899
    %v2209 = vunpack.c.h.b16 %v1899
    %v2210 = vunpack.c.l.b16 %v1900
    %v2211 = vunpack.c.h.b16 %v1900
    %v2212 = vunpack.c.l.b16 %v1901
    %v2213 = vunpack.c.h.b16 %v1901
    %v2214 = vunpack.c.l.b16 %v1902
    %v2215 = vunpack.c.h.b16 %v1902
    %v2216 = vunpack.c.l.b16 %v1903
    %v2217 = vunpack.c.h.b16 %v1903
    %v2218 = vunpack.c.l.b16 %v1904
    %v2219 = vunpack.c.h.b16 %v1904
    %v2220 = vunpack.c.l.b16 %v1905
    %v2221 = vunpack.c.h.b16 %v1905
    %v2222 = vunpack.c.l.b16 %v1906
    %v2223 = vunpack.c.h.b16 %v1906
    %v2224 = vunpack.c.l.b16 %v1907
    %v2225 = vunpack.c.h.b16 %v1907
    %v2226 = vunpack.c.l.b16 %v1908
    %v2227 = vunpack.c.h.b16 %v1908
    %v2228 = vunpack.c.l.b16 %v1909
    %v2229 = vunpack.c.h.b16 %v1909
    %v2230 = vunpack.c.l.b16 %v1910
    %v2231 = vunpack.c.h.b16 %v1910
    %v2232 = vunpack.c.l.b16 %v1911
    %v2233 = vunpack.c.h.b16 %v1911
    %v2234 = vunpack.c.l.b16 %v1912
    %v2235 = vunpack.c.h.b16 %v1912
    %v2236 = vunpack.c.l.b16 %v1913
    %v2237 = vunpack.c.h.b16 %v1913
    %v2238 = vunpack.c.l.b16 %v1914
    %v2239 = vunpack.c.h.b16 %v1914
    %v2240 = vunpack.c.l.b16 %v1915
    %v2241 = vunpack.c.h.b16 %v1915
    %v2242 = vunpack.c.l.b16 %v1916
    %v2243 = vunpack.c.h.b16 %v1916
    %v2244 = vunpack.c.l.b16 %v1917
    %v2245 = vunpack.c.h.b16 %v1917
    %v2246 = vunpack.c.l.b16 %v1918
    %v2247 = vunpack.c.h.b16 %v1918
    %v2248 = vunpack.c.l.b16 %v1919
    %v2249 = vunpack.c.h.b16 %v1919
    %v2250 = vunpack.c.l.b16 %v1920
    %v2251 = vunpack.c.h.b16 %v1920
    %v2252 = vunpack.c.l.b16 %v1921
    %v2253 = vunpack.c.h.b16 %v1921
    %v2254 = vunpack.c.l.b16 %v1922
    %v2255 = vunpack.c.h.b16 %v1922
    %v2256 = vunpack.c.l.b16 %v1923
    %v2257 = vunpack.c.h.b16 %v1923
    %v2258 = vunpack.c.l.b16 %v1924
    %v2259 = vunpack.c.h.b16 %v1924
    %v2260 = vunpack.c.l.b16 %v1925
    %v2261 = vunpack.c.h.b16 %v1925
    %v2262 = vunpack.c.l.b16 %v1926
    %v2263 = vunpack.c.h.b16 %v1926
    %v2264 = vunpack.c.l.b16 %v1927
    %v2265 = vunpack.c.h.b16 %v1927
    %v2266 = vunpack.c.l.b16 %v1928
    %v2267 = vunpack.c.h.b16 %v1928
    %v2268 = vunpack.c.l.b16 %v1929
    %v2269 = vunpack.c.h.b16 %v1929
    %v2270 = vunpack.c.l.b16 %v1930
    %v2271 = vunpack.c.h.b16 %v1930
    %v2272 = vunpack.c.l.b16 %v1931
    %v2273 = vunpack.c.h.b16 %v1931
    %v2274 = vunpack.c.l.b16 %v1932
    %v2275 = vunpack.c.h.b16 %v1932
    %v2276 = vunpack.c.l.b16 %v1933
    %v2277 = vunpack.c.h.b16 %v1933
    %v2278 = vunpack.c.l.b16 %v1934
    %v2279 = vunpack.c.h.b16 %v1934
    %v2280 = vunpack.c.l.b16 %v1935
    %v2281 = vunpack.c.h.b16 %v1935
    %v2282 = vunpack.c.l.b16 %v1936
    %v2283 = vunpack.c.h.b16 %v1936
    %v2284 = vunpack.c.l.b16 %v1937
    %v2285 = vunpack.c.h.b16 %v1937
    %v2286 = vunpack.c.l.b16 %v1938
    %v2287 = vunpack.c.h.b16 %v1938
    %v2288 = vunpack.c.l.b16 %v1939
    %v2289 = vunpack.c.h.b16 %v1939
    %v2290 = vunpack.c.l.b16 %v1940
    %v2291 = vunpack.c.h.b16 %v1940
    %v2292 = vunpack.c.l.b16 %v1941
    %v2293 = vunpack.c.h.b16 %v1941
    %v2294 = vunpack.c.l.b16 %v1942
    %v2295 = vunpack.c.h.b16 %v1942
    %v2296 = vunpack.c.l.b16 %v1943
    %v2297 = vunpack.c.h.b16 %v1943
    %v2298 = vunpack.c.l.b16 %v1944
    %v2299 = vunpack.c.h.b16 %v1944
    %v2300 = vunpack.c.l.b16 %v1945
    %v2301 = vunpack.c.h.b16 %v1945
    %v2302 = vunpack.c.l.b16 %v1946
    %v2303 = vunpack.c.h.b16 %v1946
    %v2304 = vunpack.c.l.b16 %v1947
    %v2305 = vunpack.c.h.b16 %v1947
    %v2306 = vunpack.c.l.b16 %v1948
    %v2307 = vunpack.c.h.b16 %v1948
    %v2308 = vunpack.c.l.b16 %v1949
    %v2309 = vunpack.c.h.b16 %v1949
    %v2310 = vunpack.c.l.b16 %v1950
    %v2311 = vunpack.c.h.b16 %v1950
    %v2312 = vunpack.c.l.b16 %v1951
    %v2313 = vunpack.c.h.b16 %v1951
    %v2314 = vunpack.c.l.b16 %v1952
    %v2315 = vunpack.c.h.b16 %v1952
    %v2316 = vunpack.c.l.b16 %v1953
    %v2317 = vunpack.c.h.b16 %v1953
    %v2318 = vunpack.c.l.b16 %v1954
    %v2319 = vunpack.c.h.b16 %v1954
    %v2320 = vunpack.c.l.b16 %v1955
    %v2321 = vunpack.c.h.b16 %v1955
    %v2322 = vunpack.c.l.b16 %v1956
    %v2323 = vunpack.c.h.b16 %v1956
    %v2324 = vunpack.c.l.b16 %v1957
    %v2325 = vunpack.c.h.b16 %v1957
    %v2326 = vunpack.c.l.b16 %v1958
    %v2327 = vunpack.c.h.b16 %v1958
    %v2328 = vunpack.c.l.b16 %v1959
    %v2329 = vunpack.c.h.b16 %v1959
    %v2330 = vunpack.c.l.b16 %v1960
    %v2331 = vunpack.c.h.b16 %v1960
    %v2332 = vunpack.c.l.b16 %v1961
    %v2333 = vunpack.c.h.b16 %v1961
    %v2334 = vunpack.c.l.b16 %v1962
    %v2335 = vunpack.c.h.b16 %v1962
    %v2336 = vunpack.c.l.b16 %v1963
    %v2337 = vunpack.c.h.b16 %v1963
    %v2338 = vunpack.c.l.b16 %v1964
    %v2339 = vunpack.c.h.b16 %v1964
    %v2340 = vunpack.c.l.b16 %v1965
    %v2341 = vunpack.c.h.b16 %v1965
    %v2342 = vunpack.c.l.b16 %v1966
    %v2343 = vunpack.c.h.b16 %v1966
    %v2344 = vunpack.c.l.b16 %v1967
    %v2345 = vunpack.c.h.b16 %v1967
    %v2346 = vunpack.c.l.b16 %v1968
    %v2347 = vunpack.c.h.b16 %v1968
    %v2348 = vunpack.c.l.b16 %v1969
    %v2349 = vunpack.c.h.b16 %v1969
    %v2350 = vunpack.c.l.b16 %v1970
    %v2351 = vunpack.c.h.b16 %v1970
    %v2352 = vunpack.c.l.b16 %v1971
    %v2353 = vunpack.c.h.b16 %v1971
    %v2354 = vunpack.c.l.b16 %v1972
    %v2355 = vunpack.c.h.b16 %v1972
    %v2356 = vunpack.c.l.b16 %v1973
    %v2357 = vunpack.c.h.b16 %v1973
    %v2358 = vunpack.c.l.b16 %v1974
    %v2359 = vunpack.c.h.b16 %v1974
    %v2360 = vunpack.c.l.b16 %v1975
    %v2361 = vunpack.c.h.b16 %v1975
    %v2362 = vunpack.c.l.b16 %v1976
    %v2363 = vunpack.c.h.b16 %v1976
    %v2364 = vunpack.c.l.b16 %v1977
    %v2365 = vunpack.c.h.b16 %v1977
    %v2366 = vunpack.c.l.b16 %v1978
    %v2367 = vunpack.c.h.b16 %v1978
    %v2368 = vunpack.c.l.b16 %v1979
    %v2369 = vunpack.c.h.b16 %v1979
    %v2370 = vunpack.c.l.b16 %v1980
    %v2371 = vunpack.c.h.b16 %v1980
    %v2372 = vunpack.c.l.b16 %v1981
    %v2373 = vunpack.c.h.b16 %v1981
    %v2374 = vunpack.c.l.b16 %v1982
    %v2375 = vunpack.c.h.b16 %v1982
    %v2376 = vunpack.c.l.b16 %v1983
    %v2377 = vunpack.c.h.b16 %v1983
    %v2378 = vunpack.c.l.b16 %v1984
    %v2379 = vunpack.c.h.b16 %v1984
    %v2380 = vunpack.c.l.b16 %v1985
    %v2381 = vunpack.c.h.b16 %v1985
    %v2382 = vunpack.c.l.b16 %v1986
    %v2383 = vunpack.c.h.b16 %v1986
    %v2384 = vunpack.c.l.b16 %v1987
    %v2385 = vunpack.c.h.b16 %v1987
    %v2386 = vunpack.c.l.b16 %v1988
    %v2387 = vunpack.c.h.b16 %v1988
    %v2388 = vunpack.c.l.b16 %v1989
    %v2389 = vunpack.c.h.b16 %v1989
    %v2390 = vunpack.c.l.b16 %v1990
    %v2391 = vunpack.c.h.b16 %v1990
    %v2392 = vunpack.c.l.b16 %v1991
    %v2393 = vunpack.c.h.b16 %v1991
    %v2394 = vunpack.c.l.b16 %v1992
    %v2395 = vunpack.c.h.b16 %v1992
    %v2396 = vunpack.c.l.b16 %v1993
    %v2397 = vunpack.c.h.b16 %v1993
    %v2398 = vunpack.c.l.b16 %v1994
    %v2399 = vunpack.c.h.b16 %v1994
    %v2400 = vunpack.c.l.b16 %v1995
    %v2401 = vunpack.c.h.b16 %v1995
    %v2402 = vpack.c.b16 %v2150, %v2146
    %v2403 = vpack.c.b16 %v2151, %v2147
    %v2404 = vpack.c.b16 %v2152, %v2148
    %v2405 = vpack.c.b16 %v2153, %v2149
    %v2406 = vpack.c.b16 %v2158, %v2154
    %v2407 = vpack.c.b16 %v2159, %v2155
    %v2408 = vpack.c.b16 %v2160, %v2156
    %v2409 = vpack.c.b16 %v2161, %v2157
    %v2410 = vpack.c.b16 %v2166, %v2162
    %v2411 = vpack.c.b16 %v2167, %v2163
    %v2412 = vpack.c.b16 %v2168, %v2164
    %v2413 = vpack.c.b16 %v2169, %v2165
    %v2414 = vpack.c.b16 %v2174, %v2170
    %v2415 = vpack.c.b16 %v2175, %v2171
    %v2416 = vpack.c.b16 %v2176, %v2172
    %v2417 = vpack.c.b16 %v2177, %v2173
    %v2418 = vpack.c.b16 %v2182, %v2178
    %v2419 = vpack.c.b16 %v2183, %v2179
    %v2420 = vpack.c.b16 %v2184, %v2180
    %v2421 = vpack.c.b16 %v2185, %v2181
    %v2422 = vpack.c.b16 %v2190, %v2186
    %v2423 = vpack.c.b16 %v2191, %v2187
    %v2424 = vpack.c.b16 %v2192, %v2188
    %v2425 = vpack.c.b16 %v2193, %v2189
    %v2426 = vpack.c.b16 %v2198, %v2194
    %v2427 = vpack.c.b16 %v2199, %v2195
    %v2428 = vpack.c.b16 %v2200, %v2196
    %v2429 = vpack.c.b16 %v2201, %v2197
    %v2430 = vpack.c.b16 %v2206, %v2202
    %v2431 = vpack.c.b16 %v2207, %v2203
    %v2432 = vpack.c.b16 %v2208, %v2204
    %v2433 = vpack.c.b16 %v2209, %v2205
    %v2434 = vpack.c.b16 %v2214, %v2210
    %v2435 = vpack.c.b16 %v2215, %v2211
    %v2436 = vpack.c.b16 %v2216, %v2212
    %v2437 = vpack.c.b16 %v2217, %v2213
    %v2438 = vpack.c.b16 %v2222, %v2218
    %v2439 = vpack.c.b16 %v2223, %v2219
    %v2440 = vpack.c.b16 %v2224, %v2220
    %v2441 = vpack.c.b16 %v2225, %v2221
    %v2442 = vpack.c.b16 %v2230, %v2226
    %v2443 = vpack.c.b16 %v2231, %v2227
    %v2444 = vpack.c.b16 %v2232, %v2228
    %v2445 = vpack.c.b16 %v2233, %v2229
    %v2446 = vpack.c.b16 %v2238, %v2234
    %v2447 = vpack.c.b16 %v2239, %v2235
    %v2448 = vpack.c.b16 %v2240, %v2236
    %v2449 = vpack.c.b16 %v2241, %v2237
    %v2450 = vpack.c.b16 %v2246, %v2242
    %v2451 = vpack.c.b16 %v2247, %v2243
    %v2452 = vpack.c.b16 %v2248, %v2244
    %v2453 = vpack.c.b16 %v2249, %v2245
    %v2454 = vpack.c.b16 %v2254, %v2250
    %v2455 = vpack.c.b16 %v2255, %v2251
    %v2456 = vpack.c.b16 %v2256, %v2252
    %v2457 = vpack.c.b16 %v2257, %v2253
    %v2458 = vpack.c.b16 %v2262, %v2258
    %v2459 = vpack.c.b16 %v2263, %v2259
    %v2460 = vpack.c.b16 %v2264, %v2260
    %v2461 = vpack.c.b16 %v2265, %v2261
    %v2462 = vpack.c.b16 %v2270, %v2266
    %v2463 = vpack.c.b16 %v2271, %v2267
    %v2464 = vpack.c.b16 %v2272, %v2268
    %v2465 = vpack.c.b16 %v2273, %v2269
    %v2466 = vpack.c.b16 %v2278, %v2274
    %v2467 = vpack.c.b16 %v2279, %v2275
    %v2468 = vpack.c.b16 %v2280, %v2276
    %v2469 = vpack.c.b16 %v2281, %v2277
    %v2470 = vpack.c.b16 %v2286, %v2282
    %v2471 = vpack.c.b16 %v2287, %v2283
    %v2472 = vpack.c.b16 %v2288, %v2284
    %v2473 = vpack.c.b16 %v2289, %v2285
    %v2474 = vpack.c.b16 %v2294, %v2290
    %v2475 = vpack.c.b16 %v2295, %v2291
    %v2476 = vpack.c.b16 %v2296, %v2292
    %v2477 = vpack.c.b16 %v2297, %v2293
    %v2478 = vpack.c.b16 %v2302, %v2298
    %v2479 = vpack.c.b16 %v2303, %v2299
    %v2480 = vpack.c.b16 %v2304, %v2300
    %v2481 = vpack.c.b16 %v2305, %v2301
    %v2482 = vpack.c.b16 %v2310, %v2306
    %v2483 = vpack.c.b16 %v2311, %v2307
    %v2484 = vpack.c.b16 %v2312, %v2308
    %v2485 = vpack.c.b16 %v2313, %v2309
    %v2486 = vpack.c.b16 %v2318, %v2314
    %v2487 = vpack.c.b16 %v2319, %v2315
    %v2488 = vpack.c.b16 %v2320, %v2316
    %v2489 = vpack.c.b16 %v2321, %v2317
    %v2490 = vpack.c.b16 %v2326, %v2322
    %v2491 = vpack.c.b16 %v2327, %v2323
    %v2492 = vpack.c.b16 %v2328, %v2324
    %v2493 = vpack.c.b16 %v2329, %v2325
    %v2494 = vpack.c.b16 %v2334, %v2330
    %v2495 = vpack.c.b16 %v2335, %v2331
    %v2496 = vpack.c.b16 %v2336, %v2332
    %v2497 = vpack.c.b16 %v2337, %v2333
    %v2498 = vpack.c.b16 %v2342, %v2338
    %v2499 = vpack.c.b16 %v2343, %v2339
    %v2500 = vpack.c.b16 %v2344, %v2340
    %v2501 = vpack.c.b16 %v2345, %v2341
    %v2502 = vpack.c.b16 %v2350, %v2346
    %v2503 = vpack.c.b16 %v2351, %v2347
    %v2504 = vpack.c.b16 %v2352, %v2348
    %v2505 = vpack.c.b16 %v2353, %v2349
    %v2506 = vpack.c.b16 %v2358, %v2354
    %v2507 = vpack.c.b16 %v2359, %v2355
    %v2508 = vpack.c.b16 %v2360, %v2356
    %v2509 = vpack.c.b16 %v2361, %v2357
    %v2510 = vpack.c.b16 %v2366, %v2362
    %v2511 = vpack.c.b16 %v2367, %v2363
    %v2512 = vpack.c.b16 %v2368, %v2364
    %v2513 = vpack.c.b16 %v2369, %v2365
    %v2514 = vpack.c.b16 %v2374, %v2370
    %v2515 = vpack.c.b16 %v2375, %v2371
    %v2516 = vpack.c.b16 %v2376, %v2372
    %v2517 = vpack.c.b16 %v2377, %v2373
    %v2518 = vpack.c.b16 %v2382, %v2378
    %v2519 = vpack.c.b16 %v2383, %v2379
    %v2520 = vpack.c.b16 %v2384, %v2380
    %v2521 = vpack.c.b16 %v2385, %v2381
    %v2522 = vpack.c.b16 %v2390, %v2386
    %v2523 = vpack.c.b16 %v2391, %v2387
    %v2524 = vpack.c.b16 %v2392, %v2388
    %v2525 = vpack.c.b16 %v2393, %v2389
    %v2526 = vpack.c.b16 %v2398, %v2394
    %v2527 = vpack.c.b16 %v2399, %v2395
    %v2528 = vpack.c.b16 %v2400, %v2396
    %v2529 = vpack.c.b16 %v2401, %v2397
    %2658 = vmatprep.subr.bf16.mxu0 %v2403
    %2659 = vmatpush1.bf16.msra.mxu0 %v2402
    %2660 = vmatprep.subr.bf16.mxu0 %v2407
    %2661 = vmatpush1.bf16.msra.mxu0 %v2406
    %2662 = vmatprep.subr.bf16.mxu0 %v2411
    %2663 = vmatpush1.bf16.msra.mxu0 %v2410
    %2664 = vmatprep.subr.bf16.mxu0 %v2415
    %2665 = vmatpush1.bf16.msra.mxu0 %v2414
    %2666 = vmatprep.subr.bf16.mxu0 %v2419
    %2667 = vmatpush1.bf16.msra.mxu0 %v2418
    %2668 = vmatprep.subr.bf16.mxu0 %v2423
    %2669 = vmatpush1.bf16.msra.mxu0 %v2422
    %2670 = vmatprep.subr.bf16.mxu0 %v2427
    %2671 = vmatpush1.bf16.msra.mxu0 %v2426
    %2672 = vmatprep.subr.bf16.mxu0 %v2431
    %2673 = vmatpush1.bf16.msra.mxu0 %v2430
    %2674 = vmatprep.subr.bf16.mxu0 %v2435
    %2675 = vmatpush1.bf16.msra.mxu0 %v2434
    %2676 = vmatprep.subr.bf16.mxu0 %v2439
    %2677 = vmatpush1.bf16.msra.mxu0 %v2438
    %2678 = vmatprep.subr.bf16.mxu0 %v2443
    %2679 = vmatpush1.bf16.msra.mxu0 %v2442
    %2680 = vmatprep.subr.bf16.mxu0 %v2447
    %2681 = vmatpush1.bf16.msra.mxu0 %v2446
    %2682 = vmatprep.subr.bf16.mxu0 %v2451
    %2683 = vmatpush1.bf16.msra.mxu0 %v2450
    %2684 = vmatprep.subr.bf16.mxu0 %v2455
    %2685 = vmatpush1.bf16.msra.mxu0 %v2454
    %2686 = vmatprep.subr.bf16.mxu0 %v2459
    %2687 = vmatpush1.bf16.msra.mxu0 %v2458
    %2688 = vmatprep.subr.bf16.mxu0 %v2463
    %2689 = vmatpush1.bf16.msra.mxu0 %v2462
    %2690 = vmatprep.mubr.bf16.mxu0 %v1865
    %2691 = vmatmul.mubr.bf16.gmra.mrb[0].mxu0 %v1864
    %v2692 = vpop.f32.mrb[0].mxu0
    %v2693 = vadd.f32 %v2001, %v2692
    %v2694 = vpop.f32.mrb[0].mxu0
    %v2695 = vadd.f32 %v2005, %v2694
    %v2696 = vpop.f32.mrb[0].mxu0
    %v2697 = vadd.f32 %v2001, %v2696
    %v2698 = vpop.f32.mrb[0].mxu0
    %v2699 = vadd.f32 %v2005, %v2698
    %2700 = vdwg.mxu0
    %2701 = vmatprep.subr.bf16.mxu0 %v2467
    %2702 = vmatpush1.bf16.msra.mxu0 %v2466
    %2703 = vmatprep.subr.bf16.mxu0 %v2471
    %2704 = vmatpush1.bf16.msra.mxu0 %v2470
    %2705 = vmatprep.subr.bf16.mxu0 %v2475
    %2706 = vmatpush1.bf16.msra.mxu0 %v2474
    %2707 = vmatprep.subr.bf16.mxu0 %v2479
    %2708 = vmatpush1.bf16.msra.mxu0 %v2478
    %2709 = vmatprep.subr.bf16.mxu0 %v2483
    %2710 = vmatpush1.bf16.msra.mxu0 %v2482
    %2711 = vmatprep.subr.bf16.mxu0 %v2487
    %2712 = vmatpush1.bf16.msra.mxu0 %v2486
    %2713 = vmatprep.subr.bf16.mxu0 %v2491
    %2714 = vmatpush1.bf16.msra.mxu0 %v2490
    %2715 = vmatprep.subr.bf16.mxu0 %v2495
    %2716 = vmatpush1.bf16.msra.mxu0 %v2494
    %2717 = vmatprep.subr.bf16.mxu0 %v2499
    %2718 = vmatpush1.bf16.msra.mxu0 %v2498
    %2719 = vmatprep.subr.bf16.mxu0 %v2503
    %2720 = vmatpush1.bf16.msra.mxu0 %v2502
    %2721 = vmatprep.subr.bf16.mxu0 %v2507
    %2722 = vmatpush1.bf16.msra.mxu0 %v2506
    %2723 = vmatprep.subr.bf16.mxu0 %v2511
    %2724 = vmatpush1.bf16.msra.mxu0 %v2510
    %2725 = vmatprep.subr.bf16.mxu0 %v2515
    %2726 = vmatpush1.bf16.msra.mxu0 %v2514
    %2727 = vmatprep.subr.bf16.mxu0 %v2519
    %2728 = vmatpush1.bf16.msra.mxu0 %v2518
    %2729 = vmatprep.subr.bf16.mxu0 %v2523
    %2730 = vmatpush1.bf16.msra.mxu0 %v2522
    %2731 = vmatprep.subr.bf16.mxu0 %v2527
    %2732 = vmatpush1.bf16.msra.mxu0 %v2526
    %2733 = vmatprep.mubr.bf16.mxu0 %v1867
    %2734 = vmatmul.mubr.bf16.gmra.mrb[0].mxu0 %v1866
    %v2735 = vpop.f32.mrb[0].mxu0
    %v2736 = vadd.f32 %v2693, %v2735
    %v2737 = vpop.f32.mrb[0].mxu0
    %v2738 = vadd.f32 %v2695, %v2737
    %v2739 = vpop.f32.mrb[0].mxu0
    %v2740 = vadd.f32 %v2697, %v2739
    %v2741 = vpop.f32.mrb[0].mxu0
    %v2742 = vadd.f32 %v2699, %v2741
    %2743 = vdwg.mxu0
    %2744 = vmatprep.subr.bf16.mxu0 %v2405
    %2745 = vmatpush1.bf16.msra.mxu0 %v2404
    %2746 = vmatprep.subr.bf16.mxu0 %v2409
    %2747 = vmatpush1.bf16.msra.mxu0 %v2408
    %2748 = vmatprep.subr.bf16.mxu0 %v2413
    %2749 = vmatpush1.bf16.msra.mxu0 %v2412
    %2750 = vmatprep.subr.bf16.mxu0 %v2417
    %2751 = vmatpush1.bf16.msra.mxu0 %v2416
    %2752 = vmatprep.subr.bf16.mxu0 %v2421
    %2753 = vmatpush1.bf16.msra.mxu0 %v2420
    %2754 = vmatprep.subr.bf16.mxu0 %v2425
    %2755 = vmatpush1.bf16.msra.mxu0 %v2424
    %2756 = vmatprep.subr.bf16.mxu0 %v2429
    %2757 = vmatpush1.bf16.msra.mxu0 %v2428
    %2758 = vmatprep.subr.bf16.mxu0 %v2433
    %2759 = vmatpush1.bf16.msra.mxu0 %v2432
    %2760 = vmatprep.subr.bf16.mxu0 %v2437
    %2761 = vmatpush1.bf16.msra.mxu0 %v2436
    %2762 = vmatprep.subr.bf16.mxu0 %v2441
    %2763 = vmatpush1.bf16.msra.mxu0 %v2440
    %2764 = vmatprep.subr.bf16.mxu0 %v2445
    %2765 = vmatpush1.bf16.msra.mxu0 %v2444
    %2766 = vmatprep.subr.bf16.mxu0 %v2449
    %2767 = vmatpush1.bf16.msra.mxu0 %v2448
    %2768 = vmatprep.subr.bf16.mxu0 %v2453
    %2769 = vmatpush1.bf16.msra.mxu0 %v2452
    %2770 = vmatprep.subr.bf16.mxu0 %v2457
    %2771 = vmatpush1.bf16.msra.mxu0 %v2456
    %2772 = vmatprep.subr.bf16.mxu0 %v2461
    %2773 = vmatpush1.bf16.msra.mxu0 %v2460
    %2774 = vmatprep.subr.bf16.mxu0 %v2465
    %2775 = vmatpush1.bf16.msra.mxu0 %v2464
    %2776 = vmatprep.mubr.bf16.mxu0 %v1865
    %2777 = vmatmul.mubr.bf16.gmra.mrb[0].mxu0 %v1864
    %v2778 = vpop.f32.mrb[0].mxu0
    %v2779 = vadd.f32 %v2009, %v2778
    %v2780 = vpop.f32.mrb[0].mxu0
    %v2781 = vadd.f32 %v2013, %v2780
    %v2782 = vpop.f32.mrb[0].mxu0
    %v2783 = vadd.f32 %v2009, %v2782
    %v2784 = vpop.f32.mrb[0].mxu0
    %v2785 = vadd.f32 %v2013, %v2784
    %2786 = vdwg.mxu0
    %2787 = vmatprep.subr.bf16.mxu0 %v2469
    %2788 = vmatpush1.bf16.msra.mxu0 %v2468
    %2789 = vmatprep.subr.bf16.mxu0 %v2473
    %2790 = vmatpush1.bf16.msra.mxu0 %v2472
    %2791 = vmatprep.subr.bf16.mxu0 %v2477
    %2792 = vmatpush1.bf16.msra.mxu0 %v2476
    %2793 = vmatprep.subr.bf16.mxu0 %v2481
    %2794 = vmatpush1.bf16.msra.mxu0 %v2480
    %2795 = vmatprep.subr.bf16.mxu0 %v2485
    %2796 = vmatpush1.bf16.msra.mxu0 %v2484
    %2797 = vmatprep.subr.bf16.mxu0 %v2489
    %2798 = vmatpush1.bf16.msra.mxu0 %v2488
    %2799 = vmatprep.subr.bf16.mxu0 %v2493
    %2800 = vmatpush1.bf16.msra.mxu0 %v2492
    %2801 = vmatprep.subr.bf16.mxu0 %v2497
    %2802 = vmatpush1.bf16.msra.mxu0 %v2496
    %2803 = vmatprep.subr.bf16.mxu0 %v2501
    %2804 = vmatpush1.bf16.msra.mxu0 %v2500
    %2805 = vmatprep.subr.bf16.mxu0 %v2505
    %2806 = vmatpush1.bf16.msra.mxu0 %v2504
    %2807 = vmatprep.subr.bf16.mxu0 %v2509
    %2808 = vmatpush1.bf16.msra.mxu0 %v2508
    %2809 = vmatprep.subr.bf16.mxu0 %v2513
    %2810 = vmatpush1.bf16.msra.mxu0 %v2512
    %2811 = vmatprep.subr.bf16.mxu0 %v2517
    %2812 = vmatpush1.bf16.msra.mxu0 %v2516
    %2813 = vmatprep.subr.bf16.mxu0 %v2521
    %2814 = vmatpush1.bf16.msra.mxu0 %v2520
    %2815 = vmatprep.subr.bf16.mxu0 %v2525
    %2816 = vmatpush1.bf16.msra.mxu0 %v2524
    %2817 = vmatprep.subr.bf16.mxu0 %v2529
    %2818 = vmatpush1.bf16.msra.mxu0 %v2528
    %2819 = vmatprep.mubr.bf16.mxu0 %v1867
    %2820 = vmatmul.mubr.bf16.gmra.mrb[0].mxu0 %v1866
    %v2821 = vpop.f32.mrb[0].mxu0
    %v2822 = vadd.f32 %v2779, %v2821
    %v2823 = vpop.f32.mrb[0].mxu0
    %v2824 = vadd.f32 %v2781, %v2823
    %v2825 = vpop.f32.mrb[0].mxu0
    %v2826 = vadd.f32 %v2783, %v2825
    %v2827 = vpop.f32.mrb[0].mxu0
    %v2828 = vadd.f32 %v2785, %v2827
    %2829 = vdwg.mxu0
    %v2830 = vmax.f32 %v2736, 0.0
    %v2831 = vmax.f32 %v2738, 0.0
    %v2832 = vmax.f32 %v2822, 0.0
    %v2833 = vmax.f32 %v2824, 0.0
    %v2834 = vmax.f32 %v2740, 0.0
    %v2835 = vmax.f32 %v2742, 0.0
    %v2836 = vmax.f32 %v2826, 0.0
    %v2837 = vmax.f32 %v2828, 0.0
    %v2838 = vpack.c.bf16 %v2834, %v2830
    %v2839 = vpack.c.bf16 %v2835, %v2831
    %v2840 = vpack.c.bf16 %v2836, %v2832
    %v2841 = vpack.c.bf16 %v2837, %v2833
    %v2842 = vld [vmem:[#allocation8] sm:$0xff]
    %v2843 = vld [vmem:[#allocation8 + $0x8] sm:$0xff]
    %v2844 = vld [vmem:[#allocation8 + $0x10] sm:$0xff]
    %v2845 = vld [vmem:[#allocation8 + $0x18] sm:$0xff]
    %v2846 = vld [vmem:[#allocation8 + $0x20] sm:$0xff]
    %v2847 = vld [vmem:[#allocation8 + $0x28] sm:$0xff]
    %v2848 = vld [vmem:[#allocation8 + $0x30] sm:$0xff]
    %v2849 = vld [vmem:[#allocation8 + $0x38] sm:$0xff]
    %v2850 = vld [vmem:[#allocation8 + $0x40] sm:$0xff]
    %v2851 = vld [vmem:[#allocation8 + $0x48] sm:$0xff]
    %v2852 = vld [vmem:[#allocation8 + $0x50] sm:$0xff]
    %v2853 = vld [vmem:[#allocation8 + $0x58] sm:$0xff]
    %v2854 = vld [vmem:[#allocation8 + $0x60] sm:$0xff]
    %v2855 = vld [vmem:[#allocation8 + $0x68] sm:$0xff]
    %v2856 = vld [vmem:[#allocation8 + $0x70] sm:$0xff]
    %v2857 = vld [vmem:[#allocation8 + $0x78] sm:$0xff]
    %v2858 = vld [vmem:[#allocation8 + $0x80] sm:$0xff]
    %v2859 = vld [vmem:[#allocation8 + $0x88] sm:$0xff]
    %v2860 = vld [vmem:[#allocation8 + $0x90] sm:$0xff]
    %v2861 = vld [vmem:[#allocation8 + $0x98] sm:$0xff]
    %v2862 = vld [vmem:[#allocation8 + $0xa0] sm:$0xff]
    %v2863 = vld [vmem:[#allocation8 + $0xa8] sm:$0xff]
    %v2864 = vld [vmem:[#allocation8 + $0xb0] sm:$0xff]
    %v2865 = vld [vmem:[#allocation8 + $0xb8] sm:$0xff]
    %v2866 = vld [vmem:[#allocation8 + $0xc0] sm:$0xff]
    %v2867 = vld [vmem:[#allocation8 + $0xc8] sm:$0xff]
    %v2868 = vld [vmem:[#allocation8 + $0xd0] sm:$0xff]
    %v2869 = vld [vmem:[#allocation8 + $0xd8] sm:$0xff]
    %v2870 = vld [vmem:[#allocation8 + $0xe0] sm:$0xff]
    %v2871 = vld [vmem:[#allocation8 + $0xe8] sm:$0xff]
    %v2872 = vld [vmem:[#allocation8 + $0xf0] sm:$0xff]
    %v2873 = vld [vmem:[#allocation8 + $0xf8] sm:$0xff]
    %v2874 = vld [vmem:[#allocation8 + $0x100] sm:$0xff]
    %v2875 = vld [vmem:[#allocation8 + $0x108] sm:$0xff]
    %v2876 = vld [vmem:[#allocation8 + $0x110] sm:$0xff]
    %v2877 = vld [vmem:[#allocation8 + $0x118] sm:$0xff]
    %v2878 = vld [vmem:[#allocation8 + $0x120] sm:$0xff]
    %v2879 = vld [vmem:[#allocation8 + $0x128] sm:$0xff]
    %v2880 = vld [vmem:[#allocation8 + $0x130] sm:$0xff]
    %v2881 = vld [vmem:[#allocation8 + $0x138] sm:$0xff]
    %v2882 = vld [vmem:[#allocation8 + $0x140] sm:$0xff]
    %v2883 = vld [vmem:[#allocation8 + $0x148] sm:$0xff]
    %v2884 = vld [vmem:[#allocation8 + $0x150] sm:$0xff]
    %v2885 = vld [vmem:[#allocation8 + $0x158] sm:$0xff]
    %v2886 = vld [vmem:[#allocation8 + $0x160] sm:$0xff]
    %v2887 = vld [vmem:[#allocation8 + $0x168] sm:$0xff]
    %v2888 = vld [vmem:[#allocation8 + $0x170] sm:$0xff]
    %v2889 = vld [vmem:[#allocation8 + $0x178] sm:$0xff]
    %v2890 = vld [vmem:[#allocation8 + $0x180] sm:$0xff]
    %v2891 = vld [vmem:[#allocation8 + $0x188] sm:$0xff]
    %v2892 = vld [vmem:[#allocation8 + $0x190] sm:$0xff]
    %v2893 = vld [vmem:[#allocation8 + $0x198] sm:$0xff]
    %v2894 = vld [vmem:[#allocation8 + $0x1a0] sm:$0xff]
    %v2895 = vld [vmem:[#allocation8 + $0x1a8] sm:$0xff]
    %v2896 = vld [vmem:[#allocation8 + $0x1b0] sm:$0xff]
    %v2897 = vld [vmem:[#allocation8 + $0x1b8] sm:$0xff]
    %v2898 = vld [vmem:[#allocation8 + $0x1c0] sm:$0xff]
    %v2899 = vld [vmem:[#allocation8 + $0x1c8] sm:$0xff]
    %v2900 = vld [vmem:[#allocation8 + $0x1d0] sm:$0xff]
    %v2901 = vld [vmem:[#allocation8 + $0x1d8] sm:$0xff]
    %v2902 = vld [vmem:[#allocation8 + $0x1e0] sm:$0xff]
    %v2903 = vld [vmem:[#allocation8 + $0x1e8] sm:$0xff]
    %v2904 = vld [vmem:[#allocation8 + $0x1f0] sm:$0xff]
    %v2905 = vld [vmem:[#allocation8 + $0x1f8] sm:$0xff]
    %v2906 = vld [vmem:[#allocation8 + $0x200] sm:$0xff]
    %v2907 = vld [vmem:[#allocation8 + $0x208] sm:$0xff]
    %v2908 = vld [vmem:[#allocation8 + $0x210] sm:$0xff]
    %v2909 = vld [vmem:[#allocation8 + $0x218] sm:$0xff]
    %v2910 = vld [vmem:[#allocation8 + $0x220] sm:$0xff]
    %v2911 = vld [vmem:[#allocation8 + $0x228] sm:$0xff]
    %v2912 = vld [vmem:[#allocation8 + $0x230] sm:$0xff]
    %v2913 = vld [vmem:[#allocation8 + $0x238] sm:$0xff]
    %v2914 = vld [vmem:[#allocation8 + $0x240] sm:$0xff]
    %v2915 = vld [vmem:[#allocation8 + $0x248] sm:$0xff]
    %v2916 = vld [vmem:[#allocation8 + $0x250] sm:$0xff]
    %v2917 = vld [vmem:[#allocation8 + $0x258] sm:$0xff]
    %v2918 = vld [vmem:[#allocation8 + $0x260] sm:$0xff]
    %v2919 = vld [vmem:[#allocation8 + $0x268] sm:$0xff]
    %v2920 = vld [vmem:[#allocation8 + $0x270] sm:$0xff]
    %v2921 = vld [vmem:[#allocation8 + $0x278] sm:$0xff]
    %v2922 = vld [vmem:[#allocation8 + $0x280] sm:$0xff]
    %v2923 = vld [vmem:[#allocation8 + $0x288] sm:$0xff]
    %v2924 = vld [vmem:[#allocation8 + $0x290] sm:$0xff]
    %v2925 = vld [vmem:[#allocation8 + $0x298] sm:$0xff]
    %v2926 = vld [vmem:[#allocation8 + $0x2a0] sm:$0xff]
    %v2927 = vld [vmem:[#allocation8 + $0x2a8] sm:$0xff]
    %v2928 = vld [vmem:[#allocation8 + $0x2b0] sm:$0xff]
    %v2929 = vld [vmem:[#allocation8 + $0x2b8] sm:$0xff]
    %v2930 = vld [vmem:[#allocation8 + $0x2c0] sm:$0xff]
    %v2931 = vld [vmem:[#allocation8 + $0x2c8] sm:$0xff]
    %v2932 = vld [vmem:[#allocation8 + $0x2d0] sm:$0xff]
    %v2933 = vld [vmem:[#allocation8 + $0x2d8] sm:$0xff]
    %v2934 = vld [vmem:[#allocation8 + $0x2e0] sm:$0xff]
    %v2935 = vld [vmem:[#allocation8 + $0x2e8] sm:$0xff]
    %v2936 = vld [vmem:[#allocation8 + $0x2f0] sm:$0xff]
    %v2937 = vld [vmem:[#allocation8 + $0x2f8] sm:$0xff]
    %v2938 = vld [vmem:[#allocation8 + $0x300] sm:$0xff]
    %v2939 = vld [vmem:[#allocation8 + $0x308] sm:$0xff]
    %v2940 = vld [vmem:[#allocation8 + $0x310] sm:$0xff]
    %v2941 = vld [vmem:[#allocation8 + $0x318] sm:$0xff]
    %v2942 = vld [vmem:[#allocation8 + $0x320] sm:$0xff]
    %v2943 = vld [vmem:[#allocation8 + $0x328] sm:$0xff]
    %v2944 = vld [vmem:[#allocation8 + $0x330] sm:$0xff]
    %v2945 = vld [vmem:[#allocation8 + $0x338] sm:$0xff]
    %v2946 = vld [vmem:[#allocation8 + $0x340] sm:$0xff]
    %v2947 = vld [vmem:[#allocation8 + $0x348] sm:$0xff]
    %v2948 = vld [vmem:[#allocation8 + $0x350] sm:$0xff]
    %v2949 = vld [vmem:[#allocation8 + $0x358] sm:$0xff]
    %v2950 = vld [vmem:[#allocation8 + $0x360] sm:$0xff]
    %v2951 = vld [vmem:[#allocation8 + $0x368] sm:$0xff]
    %v2952 = vld [vmem:[#allocation8 + $0x370] sm:$0xff]
    %v2953 = vld [vmem:[#allocation8 + $0x378] sm:$0xff]
    %v2954 = vld [vmem:[#allocation8 + $0x380] sm:$0xff]
    %v2955 = vld [vmem:[#allocation8 + $0x388] sm:$0xff]
    %v2956 = vld [vmem:[#allocation8 + $0x390] sm:$0xff]
    %v2957 = vld [vmem:[#allocation8 + $0x398] sm:$0xff]
    %v2958 = vld [vmem:[#allocation8 + $0x3a0] sm:$0xff]
    %v2959 = vld [vmem:[#allocation8 + $0x3a8] sm:$0xff]
    %v2960 = vld [vmem:[#allocation8 + $0x3b0] sm:$0xff]
    %v2961 = vld [vmem:[#allocation8 + $0x3b8] sm:$0xff]
    %v2962 = vld [vmem:[#allocation8 + $0x3c0] sm:$0xff]
    %v2963 = vld [vmem:[#allocation8 + $0x3c8] sm:$0xff]
    %v2964 = vld [vmem:[#allocation8 + $0x3d0] sm:$0xff]
    %v2965 = vld [vmem:[#allocation8 + $0x3d8] sm:$0xff]
    %v2966 = vld [vmem:[#allocation8 + $0x3e0] sm:$0xff]
    %v2967 = vld [vmem:[#allocation8 + $0x3e8] sm:$0xff]
    %v2968 = vld [vmem:[#allocation8 + $0x3f0] sm:$0xff]
    %v2969 = vld [vmem:[#allocation8 + $0x3f8] sm:$0xff]
    %v2970 = vld [vmem:[%s6] sm:$0xf]
    %v2972 = vlaneseq
    %v2973 = vshrl.u32 %v2972, 7
    %v2974 = vsub.s32 0, %v2973
    %v2975 = vrot.slane %v2970, %v2974
    %v2976 = vlaneseq
    %v2977 = vshrl.u32 %v2976, 7
    %v2978 = vsub.s32 1, %v2977
    %v2979 = vrot.slane %v2970, %v2978
    %v2980 = vlaneseq
    %v2981 = vshrl.u32 %v2980, 7
    %v2982 = vsub.s32 2, %v2981
    %v2983 = vrot.slane %v2970, %v2982
    %v2984 = vlaneseq
    %v2985 = vshrl.u32 %v2984, 7
    %v2986 = vsub.s32 3, %v2985
    %v2987 = vrot.slane %v2970, %v2986
    %v3120 = vunpack.c.l.b16 %v2842
    %v3121 = vunpack.c.h.b16 %v2842
    %v3122 = vunpack.c.l.b16 %v2843
    %v3123 = vunpack.c.h.b16 %v2843
    %v3124 = vunpack.c.l.b16 %v2844
    %v3125 = vunpack.c.h.b16 %v2844
    %v3126 = vunpack.c.l.b16 %v2845
    %v3127 = vunpack.c.h.b16 %v2845
    %v3128 = vunpack.c.l.b16 %v2846
    %v3129 = vunpack.c.h.b16 %v2846
    %v3130 = vunpack.c.l.b16 %v2847
    %v3131 = vunpack.c.h.b16 %v2847
    %v3132 = vunpack.c.l.b16 %v2848
    %v3133 = vunpack.c.h.b16 %v2848
    %v3134 = vunpack.c.l.b16 %v2849
    %v3135 = vunpack.c.h.b16 %v2849
    %v3136 = vunpack.c.l.b16 %v2850
    %v3137 = vunpack.c.h.b16 %v2850
    %v3138 = vunpack.c.l.b16 %v2851
    %v3139 = vunpack.c.h.b16 %v2851
    %v3140 = vunpack.c.l.b16 %v2852
    %v3141 = vunpack.c.h.b16 %v2852
    %v3142 = vunpack.c.l.b16 %v2853
    %v3143 = vunpack.c.h.b16 %v2853
    %v3144 = vunpack.c.l.b16 %v2854
    %v3145 = vunpack.c.h.b16 %v2854
    %v3146 = vunpack.c.l.b16 %v2855
    %v3147 = vunpack.c.h.b16 %v2855
    %v3148 = vunpack.c.l.b16 %v2856
    %v3149 = vunpack.c.h.b16 %v2856
    %v3150 = vunpack.c.l.b16 %v2857
    %v3151 = vunpack.c.h.b16 %v2857
    %v3152 = vunpack.c.l.b16 %v2858
    %v3153 = vunpack.c.h.b16 %v2858
    %v3154 = vunpack.c.l.b16 %v2859
    %v3155 = vunpack.c.h.b16 %v2859
    %v3156 = vunpack.c.l.b16 %v2860
    %v3157 = vunpack.c.h.b16 %v2860
    %v3158 = vunpack.c.l.b16 %v2861
    %v3159 = vunpack.c.h.b16 %v2861
    %v3160 = vunpack.c.l.b16 %v2862
    %v3161 = vunpack.c.h.b16 %v2862
    %v3162 = vunpack.c.l.b16 %v2863
    %v3163 = vunpack.c.h.b16 %v2863
    %v3164 = vunpack.c.l.b16 %v2864
    %v3165 = vunpack.c.h.b16 %v2864
    %v3166 = vunpack.c.l.b16 %v2865
    %v3167 = vunpack.c.h.b16 %v2865
    %v3168 = vunpack.c.l.b16 %v2866
    %v3169 = vunpack.c.h.b16 %v2866
    %v3170 = vunpack.c.l.b16 %v2867
    %v3171 = vunpack.c.h.b16 %v2867
    %v3172 = vunpack.c.l.b16 %v2868
    %v3173 = vunpack.c.h.b16 %v2868
    %v3174 = vunpack.c.l.b16 %v2869
    %v3175 = vunpack.c.h.b16 %v2869
    %v3176 = vunpack.c.l.b16 %v2870
    %v3177 = vunpack.c.h.b16 %v2870
    %v3178 = vunpack.c.l.b16 %v2871
    %v3179 = vunpack.c.h.b16 %v2871
    %v3180 = vunpack.c.l.b16 %v2872
    %v3181 = vunpack.c.h.b16 %v2872
    %v3182 = vunpack.c.l.b16 %v2873
    %v3183 = vunpack.c.h.b16 %v2873
    %v3184 = vunpack.c.l.b16 %v2874
    %v3185 = vunpack.c.h.b16 %v2874
    %v3186 = vunpack.c.l.b16 %v2875
    %v3187 = vunpack.c.h.b16 %v2875
    %v3188 = vunpack.c.l.b16 %v2876
    %v3189 = vunpack.c.h.b16 %v2876
    %v3190 = vunpack.c.l.b16 %v2877
    %v3191 = vunpack.c.h.b16 %v2877
    %v3192 = vunpack.c.l.b16 %v2878
    %v3193 = vunpack.c.h.b16 %v2878
    %v3194 = vunpack.c.l.b16 %v2879
    %v3195 = vunpack.c.h.b16 %v2879
    %v3196 = vunpack.c.l.b16 %v2880
    %v3197 = vunpack.c.h.b16 %v2880
    %v3198 = vunpack.c.l.b16 %v2881
    %v3199 = vunpack.c.h.b16 %v2881
    %v3200 = vunpack.c.l.b16 %v2882
    %v3201 = vunpack.c.h.b16 %v2882
    %v3202 = vunpack.c.l.b16 %v2883
    %v3203 = vunpack.c.h.b16 %v2883
    %v3204 = vunpack.c.l.b16 %v2884
    %v3205 = vunpack.c.h.b16 %v2884
    %v3206 = vunpack.c.l.b16 %v2885
    %v3207 = vunpack.c.h.b16 %v2885
    %v3208 = vunpack.c.l.b16 %v2886
    %v3209 = vunpack.c.h.b16 %v2886
    %v3210 = vunpack.c.l.b16 %v2887
    %v3211 = vunpack.c.h.b16 %v2887
    %v3212 = vunpack.c.l.b16 %v2888
    %v3213 = vunpack.c.h.b16 %v2888
    %v3214 = vunpack.c.l.b16 %v2889
    %v3215 = vunpack.c.h.b16 %v2889
    %v3216 = vunpack.c.l.b16 %v2890
    %v3217 = vunpack.c.h.b16 %v2890
    %v3218 = vunpack.c.l.b16 %v2891
    %v3219 = vunpack.c.h.b16 %v2891
    %v3220 = vunpack.c.l.b16 %v2892
    %v3221 = vunpack.c.h.b16 %v2892
    %v3222 = vunpack.c.l.b16 %v2893
    %v3223 = vunpack.c.h.b16 %v2893
    %v3224 = vunpack.c.l.b16 %v2894
    %v3225 = vunpack.c.h.b16 %v2894
    %v3226 = vunpack.c.l.b16 %v2895
    %v3227 = vunpack.c.h.b16 %v2895
    %v3228 = vunpack.c.l.b16 %v2896
    %v3229 = vunpack.c.h.b16 %v2896
    %v3230 = vunpack.c.l.b16 %v2897
    %v3231 = vunpack.c.h.b16 %v2897
    %v3232 = vunpack.c.l.b16 %v2898
    %v3233 = vunpack.c.h.b16 %v2898
    %v3234 = vunpack.c.l.b16 %v2899
    %v3235 = vunpack.c.h.b16 %v2899
    %v3236 = vunpack.c.l.b16 %v2900
    %v3237 = vunpack.c.h.b16 %v2900
    %v3238 = vunpack.c.l.b16 %v2901
    %v3239 = vunpack.c.h.b16 %v2901
    %v3240 = vunpack.c.l.b16 %v2902
    %v3241 = vunpack.c.h.b16 %v2902
    %v3242 = vunpack.c.l.b16 %v2903
    %v3243 = vunpack.c.h.b16 %v2903
    %v3244 = vunpack.c.l.b16 %v2904
    %v3245 = vunpack.c.h.b16 %v2904
    %v3246 = vunpack.c.l.b16 %v2905
    %v3247 = vunpack.c.h.b16 %v2905
    %v3248 = vunpack.c.l.b16 %v2906
    %v3249 = vunpack.c.h.b16 %v2906
    %v3250 = vunpack.c.l.b16 %v2907
    %v3251 = vunpack.c.h.b16 %v2907
    %v3252 = vunpack.c.l.b16 %v2908
    %v3253 = vunpack.c.h.b16 %v2908
    %v3254 = vunpack.c.l.b16 %v2909
    %v3255 = vunpack.c.h.b16 %v2909
    %v3256 = vunpack.c.l.b16 %v2910
    %v3257 = vunpack.c.h.b16 %v2910
    %v3258 = vunpack.c.l.b16 %v2911
    %v3259 = vunpack.c.h.b16 %v2911
    %v3260 = vunpack.c.l.b16 %v2912
    %v3261 = vunpack.c.h.b16 %v2912
    %v3262 = vunpack.c.l.b16 %v2913
    %v3263 = vunpack.c.h.b16 %v2913
    %v3264 = vunpack.c.l.b16 %v2914
    %v3265 = vunpack.c.h.b16 %v2914
    %v3266 = vunpack.c.l.b16 %v2915
    %v3267 = vunpack.c.h.b16 %v2915
    %v3268 = vunpack.c.l.b16 %v2916
    %v3269 = vunpack.c.h.b16 %v2916
    %v3270 = vunpack.c.l.b16 %v2917
    %v3271 = vunpack.c.h.b16 %v2917
    %v3272 = vunpack.c.l.b16 %v2918
    %v3273 = vunpack.c.h.b16 %v2918
    %v3274 = vunpack.c.l.b16 %v2919
    %v3275 = vunpack.c.h.b16 %v2919
    %v3276 = vunpack.c.l.b16 %v2920
    %v3277 = vunpack.c.h.b16 %v2920
    %v3278 = vunpack.c.l.b16 %v2921
    %v3279 = vunpack.c.h.b16 %v2921
    %v3280 = vunpack.c.l.b16 %v2922
    %v3281 = vunpack.c.h.b16 %v2922
    %v3282 = vunpack.c.l.b16 %v2923
    %v3283 = vunpack.c.h.b16 %v2923
    %v3284 = vunpack.c.l.b16 %v2924
    %v3285 = vunpack.c.h.b16 %v2924
    %v3286 = vunpack.c.l.b16 %v2925
    %v3287 = vunpack.c.h.b16 %v2925
    %v3288 = vunpack.c.l.b16 %v2926
    %v3289 = vunpack.c.h.b16 %v2926
    %v3290 = vunpack.c.l.b16 %v2927
    %v3291 = vunpack.c.h.b16 %v2927
    %v3292 = vunpack.c.l.b16 %v2928
    %v3293 = vunpack.c.h.b16 %v2928
    %v3294 = vunpack.c.l.b16 %v2929
    %v3295 = vunpack.c.h.b16 %v2929
    %v3296 = vunpack.c.l.b16 %v2930
    %v3297 = vunpack.c.h.b16 %v2930
    %v3298 = vunpack.c.l.b16 %v2931
    %v3299 = vunpack.c.h.b16 %v2931
    %v3300 = vunpack.c.l.b16 %v2932
    %v3301 = vunpack.c.h.b16 %v2932
    %v3302 = vunpack.c.l.b16 %v2933
    %v3303 = vunpack.c.h.b16 %v2933
    %v3304 = vunpack.c.l.b16 %v2934
    %v3305 = vunpack.c.h.b16 %v2934
    %v3306 = vunpack.c.l.b16 %v2935
    %v3307 = vunpack.c.h.b16 %v2935
    %v3308 = vunpack.c.l.b16 %v2936
    %v3309 = vunpack.c.h.b16 %v2936
    %v3310 = vunpack.c.l.b16 %v2937
    %v3311 = vunpack.c.h.b16 %v2937
    %v3312 = vunpack.c.l.b16 %v2938
    %v3313 = vunpack.c.h.b16 %v2938
    %v3314 = vunpack.c.l.b16 %v2939
    %v3315 = vunpack.c.h.b16 %v2939
    %v3316 = vunpack.c.l.b16 %v2940
    %v3317 = vunpack.c.h.b16 %v2940
    %v3318 = vunpack.c.l.b16 %v2941
    %v3319 = vunpack.c.h.b16 %v2941
    %v3320 = vunpack.c.l.b16 %v2942
    %v3321 = vunpack.c.h.b16 %v2942
    %v3322 = vunpack.c.l.b16 %v2943
    %v3323 = vunpack.c.h.b16 %v2943
    %v3324 = vunpack.c.l.b16 %v2944
    %v3325 = vunpack.c.h.b16 %v2944
    %v3326 = vunpack.c.l.b16 %v2945
    %v3327 = vunpack.c.h.b16 %v2945
    %v3328 = vunpack.c.l.b16 %v2946
    %v3329 = vunpack.c.h.b16 %v2946
    %v3330 = vunpack.c.l.b16 %v2947
    %v3331 = vunpack.c.h.b16 %v2947
    %v3332 = vunpack.c.l.b16 %v2948
    %v3333 = vunpack.c.h.b16 %v2948
    %v3334 = vunpack.c.l.b16 %v2949
    %v3335 = vunpack.c.h.b16 %v2949
    %v3336 = vunpack.c.l.b16 %v2950
    %v3337 = vunpack.c.h.b16 %v2950
    %v3338 = vunpack.c.l.b16 %v2951
    %v3339 = vunpack.c.h.b16 %v2951
    %v3340 = vunpack.c.l.b16 %v2952
    %v3341 = vunpack.c.h.b16 %v2952
    %v3342 = vunpack.c.l.b16 %v2953
    %v3343 = vunpack.c.h.b16 %v2953
    %v3344 = vunpack.c.l.b16 %v2954
    %v3345 = vunpack.c.h.b16 %v2954
    %v3346 = vunpack.c.l.b16 %v2955
    %v3347 = vunpack.c.h.b16 %v2955
    %v3348 = vunpack.c.l.b16 %v2956
    %v3349 = vunpack.c.h.b16 %v2956
    %v3350 = vunpack.c.l.b16 %v2957
    %v3351 = vunpack.c.h.b16 %v2957
    %v3352 = vunpack.c.l.b16 %v2958
    %v3353 = vunpack.c.h.b16 %v2958
    %v3354 = vunpack.c.l.b16 %v2959
    %v3355 = vunpack.c.h.b16 %v2959
    %v3356 = vunpack.c.l.b16 %v2960
    %v3357 = vunpack.c.h.b16 %v2960
    %v3358 = vunpack.c.l.b16 %v2961
    %v3359 = vunpack.c.h.b16 %v2961
    %v3360 = vunpack.c.l.b16 %v2962
    %v3361 = vunpack.c.h.b16 %v2962
    %v3362 = vunpack.c.l.b16 %v2963
    %v3363 = vunpack.c.h.b16 %v2963
    %v3364 = vunpack.c.l.b16 %v2964
    %v3365 = vunpack.c.h.b16 %v2964
    %v3366 = vunpack.c.l.b16 %v2965
    %v3367 = vunpack.c.h.b16 %v2965
    %v3368 = vunpack.c.l.b16 %v2966
    %v3369 = vunpack.c.h.b16 %v2966
    %v3370 = vunpack.c.l.b16 %v2967
    %v3371 = vunpack.c.h.b16 %v2967
    %v3372 = vunpack.c.l.b16 %v2968
    %v3373 = vunpack.c.h.b16 %v2968
    %v3374 = vunpack.c.l.b16 %v2969
    %v3375 = vunpack.c.h.b16 %v2969
    %v3376 = vpack.c.b16 %v3124, %v3120
    %v3377 = vpack.c.b16 %v3125, %v3121
    %v3378 = vpack.c.b16 %v3126, %v3122
    %v3379 = vpack.c.b16 %v3127, %v3123
    %v3380 = vpack.c.b16 %v3132, %v3128
    %v3381 = vpack.c.b16 %v3133, %v3129
    %v3382 = vpack.c.b16 %v3134, %v3130
    %v3383 = vpack.c.b16 %v3135, %v3131
    %v3384 = vpack.c.b16 %v3140, %v3136
    %v3385 = vpack.c.b16 %v3141, %v3137
    %v3386 = vpack.c.b16 %v3142, %v3138
    %v3387 = vpack.c.b16 %v3143, %v3139
    %v3388 = vpack.c.b16 %v3148, %v3144
    %v3389 = vpack.c.b16 %v3149, %v3145
    %v3390 = vpack.c.b16 %v3150, %v3146
    %v3391 = vpack.c.b16 %v3151, %v3147
    %v3392 = vpack.c.b16 %v3156, %v3152
    %v3393 = vpack.c.b16 %v3157, %v3153
    %v3394 = vpack.c.b16 %v3158, %v3154
    %v3395 = vpack.c.b16 %v3159, %v3155
    %v3396 = vpack.c.b16 %v3164, %v3160
    %v3397 = vpack.c.b16 %v3165, %v3161
    %v3398 = vpack.c.b16 %v3166, %v3162
    %v3399 = vpack.c.b16 %v3167, %v3163
    %v3400 = vpack.c.b16 %v3172, %v3168
    %v3401 = vpack.c.b16 %v3173, %v3169
    %v3402 = vpack.c.b16 %v3174, %v3170
    %v3403 = vpack.c.b16 %v3175, %v3171
    %v3404 = vpack.c.b16 %v3180, %v3176
    %v3405 = vpack.c.b16 %v3181, %v3177
    %v3406 = vpack.c.b16 %v3182, %v3178
    %v3407 = vpack.c.b16 %v3183, %v3179
    %v3408 = vpack.c.b16 %v3188, %v3184
    %v3409 = vpack.c.b16 %v3189, %v3185
    %v3410 = vpack.c.b16 %v3190, %v3186
    %v3411 = vpack.c.b16 %v3191, %v3187
    %v3412 = vpack.c.b16 %v3196, %v3192
    %v3413 = vpack.c.b16 %v3197, %v3193
    %v3414 = vpack.c.b16 %v3198, %v3194
    %v3415 = vpack.c.b16 %v3199, %v3195
    %v3416 = vpack.c.b16 %v3204, %v3200
    %v3417 = vpack.c.b16 %v3205, %v3201
    %v3418 = vpack.c.b16 %v3206, %v3202
    %v3419 = vpack.c.b16 %v3207, %v3203
    %v3420 = vpack.c.b16 %v3212, %v3208
    %v3421 = vpack.c.b16 %v3213, %v3209
    %v3422 = vpack.c.b16 %v3214, %v3210
    %v3423 = vpack.c.b16 %v3215, %v3211
    %v3424 = vpack.c.b16 %v3220, %v3216
    %v3425 = vpack.c.b16 %v3221, %v3217
    %v3426 = vpack.c.b16 %v3222, %v3218
    %v3427 = vpack.c.b16 %v3223, %v3219
    %v3428 = vpack.c.b16 %v3228, %v3224
    %v3429 = vpack.c.b16 %v3229, %v3225
    %v3430 = vpack.c.b16 %v3230, %v3226
    %v3431 = vpack.c.b16 %v3231, %v3227
    %v3432 = vpack.c.b16 %v3236, %v3232
    %v3433 = vpack.c.b16 %v3237, %v3233
    %v3434 = vpack.c.b16 %v3238, %v3234
    %v3435 = vpack.c.b16 %v3239, %v3235
    %v3436 = vpack.c.b16 %v3244, %v3240
    %v3437 = vpack.c.b16 %v3245, %v3241
    %v3438 = vpack.c.b16 %v3246, %v3242
    %v3439 = vpack.c.b16 %v3247, %v3243
    %v3440 = vpack.c.b16 %v3252, %v3248
    %v3441 = vpack.c.b16 %v3253, %v3249
    %v3442 = vpack.c.b16 %v3254, %v3250
    %v3443 = vpack.c.b16 %v3255, %v3251
    %v3444 = vpack.c.b16 %v3260, %v3256
    %v3445 = vpack.c.b16 %v3261, %v3257
    %v3446 = vpack.c.b16 %v3262, %v3258
    %v3447 = vpack.c.b16 %v3263, %v3259
    %v3448 = vpack.c.b16 %v3268, %v3264
    %v3449 = vpack.c.b16 %v3269, %v3265
    %v3450 = vpack.c.b16 %v3270, %v3266
    %v3451 = vpack.c.b16 %v3271, %v3267
    %v3452 = vpack.c.b16 %v3276, %v3272
    %v3453 = vpack.c.b16 %v3277, %v3273
    %v3454 = vpack.c.b16 %v3278, %v3274
    %v3455 = vpack.c.b16 %v3279, %v3275
    %v3456 = vpack.c.b16 %v3284, %v3280
    %v3457 = vpack.c.b16 %v3285, %v3281
    %v3458 = vpack.c.b16 %v3286, %v3282
    %v3459 = vpack.c.b16 %v3287, %v3283
    %v3460 = vpack.c.b16 %v3292, %v3288
    %v3461 = vpack.c.b16 %v3293, %v3289
    %v3462 = vpack.c.b16 %v3294, %v3290
    %v3463 = vpack.c.b16 %v3295, %v3291
    %v3464 = vpack.c.b16 %v3300, %v3296
    %v3465 = vpack.c.b16 %v3301, %v3297
    %v3466 = vpack.c.b16 %v3302, %v3298
    %v3467 = vpack.c.b16 %v3303, %v3299
    %v3468 = vpack.c.b16 %v3308, %v3304
    %v3469 = vpack.c.b16 %v3309, %v3305
    %v3470 = vpack.c.b16 %v3310, %v3306
    %v3471 = vpack.c.b16 %v3311, %v3307
    %v3472 = vpack.c.b16 %v3316, %v3312
    %v3473 = vpack.c.b16 %v3317, %v3313
    %v3474 = vpack.c.b16 %v3318, %v3314
    %v3475 = vpack.c.b16 %v3319, %v3315
    %v3476 = vpack.c.b16 %v3324, %v3320
    %v3477 = vpack.c.b16 %v3325, %v3321
    %v3478 = vpack.c.b16 %v3326, %v3322
    %v3479 = vpack.c.b16 %v3327, %v3323
    %v3480 = vpack.c.b16 %v3332, %v3328
    %v3481 = vpack.c.b16 %v3333, %v3329
    %v3482 = vpack.c.b16 %v3334, %v3330
    %v3483 = vpack.c.b16 %v3335, %v3331
    %v3484 = vpack.c.b16 %v3340, %v3336
    %v3485 = vpack.c.b16 %v3341, %v3337
    %v3486 = vpack.c.b16 %v3342, %v3338
    %v3487 = vpack.c.b16 %v3343, %v3339
    %v3488 = vpack.c.b16 %v3348, %v3344
    %v3489 = vpack.c.b16 %v3349, %v3345
    %v3490 = vpack.c.b16 %v3350, %v3346
    %v3491 = vpack.c.b16 %v3351, %v3347
    %v3492 = vpack.c.b16 %v3356, %v3352
    %v3493 = vpack.c.b16 %v3357, %v3353
    %v3494 = vpack.c.b16 %v3358, %v3354
    %v3495 = vpack.c.b16 %v3359, %v3355
    %v3496 = vpack.c.b16 %v3364, %v3360
    %v3497 = vpack.c.b16 %v3365, %v3361
    %v3498 = vpack.c.b16 %v3366, %v3362
    %v3499 = vpack.c.b16 %v3367, %v3363
    %v3500 = vpack.c.b16 %v3372, %v3368
    %v3501 = vpack.c.b16 %v3373, %v3369
    %v3502 = vpack.c.b16 %v3374, %v3370
    %v3503 = vpack.c.b16 %v3375, %v3371
    %3632 = vmatprep.subr.bf16.mxu0 %v3377
    %3633 = vmatpush1.bf16.msra.mxu0 %v3376
    %3634 = vmatprep.subr.bf16.mxu0 %v3381
    %3635 = vmatpush1.bf16.msra.mxu0 %v3380
    %3636 = vmatprep.subr.bf16.mxu0 %v3385
    %3637 = vmatpush1.bf16.msra.mxu0 %v3384
    %3638 = vmatprep.subr.bf16.mxu0 %v3389
    %3639 = vmatpush1.bf16.msra.mxu0 %v3388
    %3640 = vmatprep.subr.bf16.mxu0 %v3393
    %3641 = vmatpush1.bf16.msra.mxu0 %v3392
    %3642 = vmatprep.subr.bf16.mxu0 %v3397
    %3643 = vmatpush1.bf16.msra.mxu0 %v3396
    %3644 = vmatprep.subr.bf16.mxu0 %v3401
    %3645 = vmatpush1.bf16.msra.mxu0 %v3400
    %3646 = vmatprep.subr.bf16.mxu0 %v3405
    %3647 = vmatpush1.bf16.msra.mxu0 %v3404
    %3648 = vmatprep.subr.bf16.mxu0 %v3409
    %3649 = vmatpush1.bf16.msra.mxu0 %v3408
    %3650 = vmatprep.subr.bf16.mxu0 %v3413
    %3651 = vmatpush1.bf16.msra.mxu0 %v3412
    %3652 = vmatprep.subr.bf16.mxu0 %v3417
    %3653 = vmatpush1.bf16.msra.mxu0 %v3416
    %3654 = vmatprep.subr.bf16.mxu0 %v3421
    %3655 = vmatpush1.bf16.msra.mxu0 %v3420
    %3656 = vmatprep.subr.bf16.mxu0 %v3425
    %3657 = vmatpush1.bf16.msra.mxu0 %v3424
    %3658 = vmatprep.subr.bf16.mxu0 %v3429
    %3659 = vmatpush1.bf16.msra.mxu0 %v3428
    %3660 = vmatprep.subr.bf16.mxu0 %v3433
    %3661 = vmatpush1.bf16.msra.mxu0 %v3432
    %3662 = vmatprep.subr.bf16.mxu0 %v3437
    %3663 = vmatpush1.bf16.msra.mxu0 %v3436
    %3664 = vmatprep.mubr.bf16.mxu0 %v2839
    %3665 = vmatmul.mubr.bf16.gmra.mrb[0].mxu0 %v2838
    %v3666 = vpop.f32.mrb[0].mxu0
    %v3667 = vadd.f32 %v2975, %v3666
    %v3668 = vpop.f32.mrb[0].mxu0
    %v3669 = vadd.f32 %v2979, %v3668
    %v3670 = vpop.f32.mrb[0].mxu0
    %v3671 = vadd.f32 %v2975, %v3670
    %v3672 = vpop.f32.mrb[0].mxu0
    %v3673 = vadd.f32 %v2979, %v3672
    %3674 = vdwg.mxu0
    %3675 = vmatprep.subr.bf16.mxu0 %v3441
    %3676 = vmatpush1.bf16.msra.mxu0 %v3440
    %3677 = vmatprep.subr.bf16.mxu0 %v3445
    %3678 = vmatpush1.bf16.msra.mxu0 %v3444
    %3679 = vmatprep.subr.bf16.mxu0 %v3449
    %3680 = vmatpush1.bf16.msra.mxu0 %v3448
    %3681 = vmatprep.subr.bf16.mxu0 %v3453
    %3682 = vmatpush1.bf16.msra.mxu0 %v3452
    %3683 = vmatprep.subr.bf16.mxu0 %v3457
    %3684 = vmatpush1.bf16.msra.mxu0 %v3456
    %3685 = vmatprep.subr.bf16.mxu0 %v3461
    %3686 = vmatpush1.bf16.msra.mxu0 %v3460
    %3687 = vmatprep.subr.bf16.mxu0 %v3465
    %3688 = vmatpush1.bf16.msra.mxu0 %v3464
    %3689 = vmatprep.subr.bf16.mxu0 %v3469
    %3690 = vmatpush1.bf16.msra.mxu0 %v3468
    %3691 = vmatprep.subr.bf16.mxu0 %v3473
    %3692 = vmatpush1.bf16.msra.mxu0 %v3472
    %3693 = vmatprep.subr.bf16.mxu0 %v3477
    %3694 = vmatpush1.bf16.msra.mxu0 %v3476
    %3695 = vmatprep.subr.bf16.mxu0 %v3481
    %3696 = vmatpush1.bf16.msra.mxu0 %v3480
    %3697 = vmatprep.subr.bf16.mxu0 %v3485
    %3698 = vmatpush1.bf16.msra.mxu0 %v3484
    %3699 = vmatprep.subr.bf16.mxu0 %v3489
    %3700 = vmatpush1.bf16.msra.mxu0 %v3488
    %3701 = vmatprep.subr.bf16.mxu0 %v3493
    %3702 = vmatpush1.bf16.msra.mxu0 %v3492
    %3703 = vmatprep.subr.bf16.mxu0 %v3497
    %3704 = vmatpush1.bf16.msra.mxu0 %v3496
    %3705 = vmatprep.subr.bf16.mxu0 %v3501
    %3706 = vmatpush1.bf16.msra.mxu0 %v3500
    %3707 = vmatprep.mubr.bf16.mxu0 %v2841
    %3708 = vmatmul.mubr.bf16.gmra.mrb[0].mxu0 %v2840
    %v3709 = vpop.f32.mrb[0].mxu0
    %v3710 = vadd.f32 %v3667, %v3709
    %v3711 = vpop.f32.mrb[0].mxu0
    %v3712 = vadd.f32 %v3669, %v3711
    %v3713 = vpop.f32.mrb[0].mxu0
    %v3714 = vadd.f32 %v3671, %v3713
    %v3715 = vpop.f32.mrb[0].mxu0
    %v3716 = vadd.f32 %v3673, %v3715
    %3717 = vdwg.mxu0
    %3718 = vmatprep.subr.bf16.mxu0 %v3379
    %3719 = vmatpush1.bf16.msra.mxu0 %v3378
    %3720 = vmatprep.subr.bf16.mxu0 %v3383
    %3721 = vmatpush1.bf16.msra.mxu0 %v3382
    %3722 = vmatprep.subr.bf16.mxu0 %v3387
    %3723 = vmatpush1.bf16.msra.mxu0 %v3386
    %3724 = vmatprep.subr.bf16.mxu0 %v3391
    %3725 = vmatpush1.bf16.msra.mxu0 %v3390
    %3726 = vmatprep.subr.bf16.mxu0 %v3395
    %3727 = vmatpush1.bf16.msra.mxu0 %v3394
    %3728 = vmatprep.subr.bf16.mxu0 %v3399
    %3729 = vmatpush1.bf16.msra.mxu0 %v3398
    %3730 = vmatprep.subr.bf16.mxu0 %v3403
    %3731 = vmatpush1.bf16.msra.mxu0 %v3402
    %3732 = vmatprep.subr.bf16.mxu0 %v3407
    %3733 = vmatpush1.bf16.msra.mxu0 %v3406
    %3734 = vmatprep.subr.bf16.mxu0 %v3411
    %3735 = vmatpush1.bf16.msra.mxu0 %v3410
    %3736 = vmatprep.subr.bf16.mxu0 %v3415
    %3737 = vmatpush1.bf16.msra.mxu0 %v3414
    %3738 = vmatprep.subr.bf16.mxu0 %v3419
    %3739 = vmatpush1.bf16.msra.mxu0 %v3418
    %3740 = vmatprep.subr.bf16.mxu0 %v3423
    %3741 = vmatpush1.bf16.msra.mxu0 %v3422
    %3742 = vmatprep.subr.bf16.mxu0 %v3427
    %3743 = vmatpush1.bf16.msra.mxu0 %v3426
    %3744 = vmatprep.subr.bf16.mxu0 %v3431
    %3745 = vmatpush1.bf16.msra.mxu0 %v3430
    %3746 = vmatprep.subr.bf16.mxu0 %v3435
    %3747 = vmatpush1.bf16.msra.mxu0 %v3434
    %3748 = vmatprep.subr.bf16.mxu0 %v3439
    %3749 = vmatpush1.bf16.msra.mxu0 %v3438
    %3750 = vmatprep.mubr.bf16.mxu0 %v2839
    %3751 = vmatmul.mubr.bf16.gmra.mrb[0].mxu0 %v2838
    %v3752 = vpop.f32.mrb[0].mxu0
    %v3753 = vadd.f32 %v2983, %v3752
    %v3754 = vpop.f32.mrb[0].mxu0
    %v3755 = vadd.f32 %v2987, %v3754
    %v3756 = vpop.f32.mrb[0].mxu0
    %v3757 = vadd.f32 %v2983, %v3756
    %v3758 = vpop.f32.mrb[0].mxu0
    %v3759 = vadd.f32 %v2987, %v3758
    %3760 = vdwg.mxu0
    %3761 = vmatprep.subr.bf16.mxu0 %v3443
    %3762 = vmatpush1.bf16.msra.mxu0 %v3442
    %3763 = vmatprep.subr.bf16.mxu0 %v3447
    %3764 = vmatpush1.bf16.msra.mxu0 %v3446
    %3765 = vmatprep.subr.bf16.mxu0 %v3451
    %3766 = vmatpush1.bf16.msra.mxu0 %v3450
    %3767 = vmatprep.subr.bf16.mxu0 %v3455
    %3768 = vmatpush1.bf16.msra.mxu0 %v3454
    %3769 = vmatprep.subr.bf16.mxu0 %v3459
    %3770 = vmatpush1.bf16.msra.mxu0 %v3458
    %3771 = vmatprep.subr.bf16.mxu0 %v3463
    %3772 = vmatpush1.bf16.msra.mxu0 %v3462
    %3773 = vmatprep.subr.bf16.mxu0 %v3467
    %3774 = vmatpush1.bf16.msra.mxu0 %v3466
    %3775 = vmatprep.subr.bf16.mxu0 %v3471
    %3776 = vmatpush1.bf16.msra.mxu0 %v3470
    %3777 = vmatprep.subr.bf16.mxu0 %v3475
    %3778 = vmatpush1.bf16.msra.mxu0 %v3474
    %3779 = vmatprep.subr.bf16.mxu0 %v3479
    %3780 = vmatpush1.bf16.msra.mxu0 %v3478
    %3781 = vmatprep.subr.bf16.mxu0 %v3483
    %3782 = vmatpush1.bf16.msra.mxu0 %v3482
    %3783 = vmatprep.subr.bf16.mxu0 %v3487
    %3784 = vmatpush1.bf16.msra.mxu0 %v3486
    %3785 = vmatprep.subr.bf16.mxu0 %v3491
    %3786 = vmatpush1.bf16.msra.mxu0 %v3490
    %3787 = vmatprep.subr.bf16.mxu0 %v3495
    %3788 = vmatpush1.bf16.msra.mxu0 %v3494
    %3789 = vmatprep.subr.bf16.mxu0 %v3499
    %3790 = vmatpush1.bf16.msra.mxu0 %v3498
    %3791 = vmatprep.subr.bf16.mxu0 %v3503
    %3792 = vmatpush1.bf16.msra.mxu0 %v3502
    %3793 = vmatprep.mubr.bf16.mxu0 %v2841
    %3794 = vmatmul.mubr.bf16.gmra.mrb[0].mxu0 %v2840
    %v3795 = vpop.f32.mrb[0].mxu0
    %v3796 = vadd.f32 %v3753, %v3795
    %v3797 = vpop.f32.mrb[0].mxu0
    %v3798 = vadd.f32 %v3755, %v3797
    %v3799 = vpop.f32.mrb[0].mxu0
    %v3800 = vadd.f32 %v3757, %v3799
    %v3801 = vpop.f32.mrb[0].mxu0
    %v3802 = vadd.f32 %v3759, %v3801
    %3803 = vdwg.mxu0
    %v3804 = vmax.f32 %v3710, 0.0
    %v3805 = vmax.f32 %v3712, 0.0
    %v3806 = vmax.f32 %v3796, 0.0
    %v3807 = vmax.f32 %v3798, 0.0
    %v3808 = vmax.f32 %v3714, 0.0
    %v3809 = vmax.f32 %v3716, 0.0
    %v3810 = vmax.f32 %v3800, 0.0
    %v3811 = vmax.f32 %v3802, 0.0
    %v3812 = vpack.c.bf16 %v3808, %v3804
    %v3813 = vpack.c.bf16 %v3809, %v3805
    %v3814 = vpack.c.bf16 %v3810, %v3806
    %v3815 = vpack.c.bf16 %v3811, %v3807
    %v3816 = vld [vmem:[#allocation10] sm:$0xf]
    %v3817 = vld [vmem:[#allocation10 + $0x4] sm:$0xf]
    %v3818 = vld [vmem:[#allocation10 + $0x8] sm:$0xf]
    %v3819 = vld [vmem:[#allocation10 + $0xc] sm:$0xf]
    %v3820 = vld [vmem:[#allocation10 + $0x10] sm:$0xf]
    %v3821 = vld [vmem:[#allocation10 + $0x14] sm:$0xf]
    %v3822 = vld [vmem:[#allocation10 + $0x18] sm:$0xf]
    %v3823 = vld [vmem:[#allocation10 + $0x1c] sm:$0xf]
    %v3824 = vld [vmem:[#allocation10 + $0x20] sm:$0xf]
    %v3825 = vld [vmem:[#allocation10 + $0x24] sm:$0xf]
    %v3826 = vld [vmem:[#allocation10 + $0x28] sm:$0xf]
    %v3827 = vld [vmem:[#allocation10 + $0x2c] sm:$0xf]
    %v3828 = vld [vmem:[#allocation10 + $0x30] sm:$0xf]
    %v3829 = vld [vmem:[#allocation10 + $0x34] sm:$0xf]
    %v3830 = vld [vmem:[#allocation10 + $0x38] sm:$0xf]
    %v3831 = vld [vmem:[#allocation10 + $0x3c] sm:$0xf]
    %v3832 = vld [vmem:[#allocation10 + $0x40] sm:$0xf]
    %v3833 = vld [vmem:[#allocation10 + $0x44] sm:$0xf]
    %v3834 = vld [vmem:[#allocation10 + $0x48] sm:$0xf]
    %v3835 = vld [vmem:[#allocation10 + $0x4c] sm:$0xf]
    %v3836 = vld [vmem:[#allocation10 + $0x50] sm:$0xf]
    %v3837 = vld [vmem:[#allocation10 + $0x54] sm:$0xf]
    %v3838 = vld [vmem:[#allocation10 + $0x58] sm:$0xf]
    %v3839 = vld [vmem:[#allocation10 + $0x5c] sm:$0xf]
    %v3840 = vld [vmem:[#allocation10 + $0x60] sm:$0xf]
    %v3841 = vld [vmem:[#allocation10 + $0x64] sm:$0xf]
    %v3842 = vld [vmem:[#allocation10 + $0x68] sm:$0xf]
    %v3843 = vld [vmem:[#allocation10 + $0x6c] sm:$0xf]
    %v3844 = vld [vmem:[#allocation10 + $0x70] sm:$0xf]
    %v3845 = vld [vmem:[#allocation10 + $0x74] sm:$0xf]
    %v3846 = vld [vmem:[#allocation10 + $0x78] sm:$0xf]
    %v3847 = vld [vmem:[#allocation10 + $0x7c] sm:$0xf]
    %v3848 = vld [vmem:[#allocation10 + $0x80] sm:$0xf]
    %v3849 = vld [vmem:[#allocation10 + $0x84] sm:$0xf]
    %v3850 = vld [vmem:[#allocation10 + $0x88] sm:$0xf]
    %v3851 = vld [vmem:[#allocation10 + $0x8c] sm:$0xf]
    %v3852 = vld [vmem:[#allocation10 + $0x90] sm:$0xf]
    %v3853 = vld [vmem:[#allocation10 + $0x94] sm:$0xf]
    %v3854 = vld [vmem:[#allocation10 + $0x98] sm:$0xf]
    %v3855 = vld [vmem:[#allocation10 + $0x9c] sm:$0xf]
    %v3856 = vld [vmem:[#allocation10 + $0xa0] sm:$0xf]
    %v3857 = vld [vmem:[#allocation10 + $0xa4] sm:$0xf]
    %v3858 = vld [vmem:[#allocation10 + $0xa8] sm:$0xf]
    %v3859 = vld [vmem:[#allocation10 + $0xac] sm:$0xf]
    %v3860 = vld [vmem:[#allocation10 + $0xb0] sm:$0xf]
    %v3861 = vld [vmem:[#allocation10 + $0xb4] sm:$0xf]
    %v3862 = vld [vmem:[#allocation10 + $0xb8] sm:$0xf]
    %v3863 = vld [vmem:[#allocation10 + $0xbc] sm:$0xf]
    %v3864 = vld [vmem:[#allocation10 + $0xc0] sm:$0xf]
    %v3865 = vld [vmem:[#allocation10 + $0xc4] sm:$0xf]
    %v3866 = vld [vmem:[#allocation10 + $0xc8] sm:$0xf]
    %v3867 = vld [vmem:[#allocation10 + $0xcc] sm:$0xf]
    %v3868 = vld [vmem:[#allocation10 + $0xd0] sm:$0xf]
    %v3869 = vld [vmem:[#allocation10 + $0xd4] sm:$0xf]
    %v3870 = vld [vmem:[#allocation10 + $0xd8] sm:$0xf]
    %v3871 = vld [vmem:[#allocation10 + $0xdc] sm:$0xf]
    %v3872 = vld [vmem:[#allocation10 + $0xe0] sm:$0xf]
    %v3873 = vld [vmem:[#allocation10 + $0xe4] sm:$0xf]
    %v3874 = vld [vmem:[#allocation10 + $0xe8] sm:$0xf]
    %v3875 = vld [vmem:[#allocation10 + $0xec] sm:$0xf]
    %v3876 = vld [vmem:[#allocation10 + $0xf0] sm:$0xf]
    %v3877 = vld [vmem:[#allocation10 + $0xf4] sm:$0xf]
    %v3878 = vld [vmem:[#allocation10 + $0xf8] sm:$0xf]
    %v3879 = vld [vmem:[#allocation10 + $0xfc] sm:$0xf]
    %v3880 = vld [vmem:[%s8] sm:$0x1]
    %v3882 = vlaneseq
    %v3883 = vshrl.u32 %v3882, 7
    %v3884 = vsub.s32 0, %v3883
    %v3885 = vrot.slane %v3880, %v3884
    %v3951 = vunpack.c.l.b16 %v3816
    %v3952 = vunpack.c.l.b16 %v3817
    %v3953 = vunpack.c.l.b16 %v3818
    %v3954 = vunpack.c.l.b16 %v3819
    %v3955 = vunpack.c.l.b16 %v3820
    %v3956 = vunpack.c.l.b16 %v3821
    %v3957 = vunpack.c.l.b16 %v3822
    %v3958 = vunpack.c.l.b16 %v3823
    %v3959 = vunpack.c.l.b16 %v3824
    %v3960 = vunpack.c.l.b16 %v3825
    %v3961 = vunpack.c.l.b16 %v3826
    %v3962 = vunpack.c.l.b16 %v3827
    %v3963 = vunpack.c.l.b16 %v3828
    %v3964 = vunpack.c.l.b16 %v3829
    %v3965 = vunpack.c.l.b16 %v3830
    %v3966 = vunpack.c.l.b16 %v3831
    %v3967 = vunpack.c.l.b16 %v3832
    %v3968 = vunpack.c.l.b16 %v3833
    %v3969 = vunpack.c.l.b16 %v3834
    %v3970 = vunpack.c.l.b16 %v3835
    %v3971 = vunpack.c.l.b16 %v3836
    %v3972 = vunpack.c.l.b16 %v3837
    %v3973 = vunpack.c.l.b16 %v3838
    %v3974 = vunpack.c.l.b16 %v3839
    %v3975 = vunpack.c.l.b16 %v3840
    %v3976 = vunpack.c.l.b16 %v3841
    %v3977 = vunpack.c.l.b16 %v3842
    %v3978 = vunpack.c.l.b16 %v3843
    %v3979 = vunpack.c.l.b16 %v3844
    %v3980 = vunpack.c.l.b16 %v3845
    %v3981 = vunpack.c.l.b16 %v3846
    %v3982 = vunpack.c.l.b16 %v3847
    %v3983 = vunpack.c.l.b16 %v3848
    %v3984 = vunpack.c.l.b16 %v3849
    %v3985 = vunpack.c.l.b16 %v3850
    %v3986 = vunpack.c.l.b16 %v3851
    %v3987 = vunpack.c.l.b16 %v3852
    %v3988 = vunpack.c.l.b16 %v3853
    %v3989 = vunpack.c.l.b16 %v3854
    %v3990 = vunpack.c.l.b16 %v3855
    %v3991 = vunpack.c.l.b16 %v3856
    %v3992 = vunpack.c.l.b16 %v3857
    %v3993 = vunpack.c.l.b16 %v3858
    %v3994 = vunpack.c.l.b16 %v3859
    %v3995 = vunpack.c.l.b16 %v3860
    %v3996 = vunpack.c.l.b16 %v3861
    %v3997 = vunpack.c.l.b16 %v3862
    %v3998 = vunpack.c.l.b16 %v3863
    %v3999 = vunpack.c.l.b16 %v3864
    %v4000 = vunpack.c.l.b16 %v3865
    %v4001 = vunpack.c.l.b16 %v3866
    %v4002 = vunpack.c.l.b16 %v3867
    %v4003 = vunpack.c.l.b16 %v3868
    %v4004 = vunpack.c.l.b16 %v3869
    %v4005 = vunpack.c.l.b16 %v3870
    %v4006 = vunpack.c.l.b16 %v3871
    %v4007 = vunpack.c.l.b16 %v3872
    %v4008 = vunpack.c.l.b16 %v3873
    %v4009 = vunpack.c.l.b16 %v3874
    %v4010 = vunpack.c.l.b16 %v3875
    %v4011 = vunpack.c.l.b16 %v3876
    %v4012 = vunpack.c.l.b16 %v3877
    %v4013 = vunpack.c.l.b16 %v3878
    %v4014 = vunpack.c.l.b16 %v3879
    %v4015 = vpack.c.b16 %v3952, %v3951
    %v4016 = vpack.c.b16 %v3954, %v3953
    %v4017 = vpack.c.b16 %v3956, %v3955
    %v4018 = vpack.c.b16 %v3958, %v3957
    %v4019 = vpack.c.b16 %v3960, %v3959
    %v4020 = vpack.c.b16 %v3962, %v3961
    %v4021 = vpack.c.b16 %v3964, %v3963
    %v4022 = vpack.c.b16 %v3966, %v3965
    %v4023 = vpack.c.b16 %v3968, %v3967
    %v4024 = vpack.c.b16 %v3970, %v3969
    %v4025 = vpack.c.b16 %v3972, %v3971
    %v4026 = vpack.c.b16 %v3974, %v3973
    %v4027 = vpack.c.b16 %v3976, %v3975
    %v4028 = vpack.c.b16 %v3978, %v3977
    %v4029 = vpack.c.b16 %v3980, %v3979
    %v4030 = vpack.c.b16 %v3982, %v3981
    %v4031 = vpack.c.b16 %v3984, %v3983
    %v4032 = vpack.c.b16 %v3986, %v3985
    %v4033 = vpack.c.b16 %v3988, %v3987
    %v4034 = vpack.c.b16 %v3990, %v3989
    %v4035 = vpack.c.b16 %v3992, %v3991
    %v4036 = vpack.c.b16 %v3994, %v3993
    %v4037 = vpack.c.b16 %v3996, %v3995
    %v4038 = vpack.c.b16 %v3998, %v3997
    %v4039 = vpack.c.b16 %v4000, %v3999
    %v4040 = vpack.c.b16 %v4002, %v4001
    %v4041 = vpack.c.b16 %v4004, %v4003
    %v4042 = vpack.c.b16 %v4006, %v4005
    %v4043 = vpack.c.b16 %v4008, %v4007
    %v4044 = vpack.c.b16 %v4010, %v4009
    %v4045 = vpack.c.b16 %v4012, %v4011
    %v4046 = vpack.c.b16 %v4014, %v4013
    %4079 = vmatprep.subr.bf16.mxu0 0
    %4080 = vmatpush1.bf16.msra.mxu0 %v4015
    %4081 = vmatprep.subr.bf16.mxu0 0
    %4082 = vmatpush1.bf16.msra.mxu0 %v4016
    %4083 = vmatprep.subr.bf16.mxu0 0
    %4084 = vmatpush1.bf16.msra.mxu0 %v4017
    %4085 = vmatprep.subr.bf16.mxu0 0
    %4086 = vmatpush1.bf16.msra.mxu0 %v4018
    %4087 = vmatprep.subr.bf16.mxu0 0
    %4088 = vmatpush1.bf16.msra.mxu0 %v4019
    %4089 = vmatprep.subr.bf16.mxu0 0
    %4090 = vmatpush1.bf16.msra.mxu0 %v4020
    %4091 = vmatprep.subr.bf16.mxu0 0
    %4092 = vmatpush1.bf16.msra.mxu0 %v4021
    %4093 = vmatprep.subr.bf16.mxu0 0
    %4094 = vmatpush1.bf16.msra.mxu0 %v4022
    %4095 = vmatprep.subr.bf16.mxu0 0
    %4096 = vmatpush1.bf16.msra.mxu0 %v4023
    %4097 = vmatprep.subr.bf16.mxu0 0
    %4098 = vmatpush1.bf16.msra.mxu0 %v4024
    %4099 = vmatprep.subr.bf16.mxu0 0
    %4100 = vmatpush1.bf16.msra.mxu0 %v4025
    %4101 = vmatprep.subr.bf16.mxu0 0
    %4102 = vmatpush1.bf16.msra.mxu0 %v4026
    %4103 = vmatprep.subr.bf16.mxu0 0
    %4104 = vmatpush1.bf16.msra.mxu0 %v4027
    %4105 = vmatprep.subr.bf16.mxu0 0
    %4106 = vmatpush1.bf16.msra.mxu0 %v4028
    %4107 = vmatprep.subr.bf16.mxu0 0
    %4108 = vmatpush1.bf16.msra.mxu0 %v4029
    %4109 = vmatprep.subr.bf16.mxu0 0
    %4110 = vmatpush1.bf16.msra.mxu0 %v4030
    %4111 = vmatprep.mubr.bf16.mxu0 %v3813
    %4112 = vmatmul.mubr.bf16.gmra.mrb[0].mxu0 %v3812
    %v4113 = vpop.f32.mrb[0].mxu0
    %v4114 = vadd.f32 %v3885, %v4113
    %v4115 = vpop.f32.mrb[0].mxu0
    %v4116 = vpop.f32.mrb[0].mxu0
    %v4117 = vadd.f32 %v3885, %v4116
    %v4118 = vpop.f32.mrb[0].mxu0
    %4119 = vdwg.mxu0
    %4120 = vmatprep.subr.bf16.mxu0 0
    %4121 = vmatpush1.bf16.msra.mxu0 %v4031
    %4122 = vmatprep.subr.bf16.mxu0 0
    %4123 = vmatpush1.bf16.msra.mxu0 %v4032
    %4124 = vmatprep.subr.bf16.mxu0 0
    %4125 = vmatpush1.bf16.msra.mxu0 %v4033
    %4126 = vmatprep.subr.bf16.mxu0 0
    %4127 = vmatpush1.bf16.msra.mxu0 %v4034
    %4128 = vmatprep.subr.bf16.mxu0 0
    %4129 = vmatpush1.bf16.msra.mxu0 %v4035
    %4130 = vmatprep.subr.bf16.mxu0 0
    %4131 = vmatpush1.bf16.msra.mxu0 %v4036
    %4132 = vmatprep.subr.bf16.mxu0 0
    %4133 = vmatpush1.bf16.msra.mxu0 %v4037
    %4134 = vmatprep.subr.bf16.mxu0 0
    %4135 = vmatpush1.bf16.msra.mxu0 %v4038
    %4136 = vmatprep.subr.bf16.mxu0 0
    %4137 = vmatpush1.bf16.msra.mxu0 %v4039
    %4138 = vmatprep.subr.bf16.mxu0 0
    %4139 = vmatpush1.bf16.msra.mxu0 %v4040
    %4140 = vmatprep.subr.bf16.mxu0 0
    %4141 = vmatpush1.bf16.msra.mxu0 %v4041
    %4142 = vmatprep.subr.bf16.mxu0 0
    %4143 = vmatpush1.bf16.msra.mxu0 %v4042
    %4144 = vmatprep.subr.bf16.mxu0 0
    %4145 = vmatpush1.bf16.msra.mxu0 %v4043
    %4146 = vmatprep.subr.bf16.mxu0 0
    %4147 = vmatpush1.bf16.msra.mxu0 %v4044
    %4148 = vmatprep.subr.bf16.mxu0 0
    %4149 = vmatpush1.bf16.msra.mxu0 %v4045
    %4150 = vmatprep.subr.bf16.mxu0 0
    %4151 = vmatpush1.bf16.msra.mxu0 %v4046
    %4152 = vmatprep.mubr.bf16.mxu0 %v3815
    %4153 = vmatmul.mubr.bf16.gmra.mrb[0].mxu0 %v3814
    %v4154 = vpop.f32.mrb[0].mxu0
    %v4155 = vadd.f32 %v4114, %v4154
    %v4156 = vpop.f32.mrb[0].mxu0
    %v4157 = vpop.f32.mrb[0].mxu0
    %v4158 = vadd.f32 %v4117, %v4157
    %v4159 = vpop.f32.mrb[0].mxu0
    %4160 = vdwg.mxu0
    %4161 = vst [vmem:[#allocation11] sm:$0xff] %v4155
    %4162 = vst [vmem:[#allocation11 + $0x8] sm:$0xff] %v4158
    // Predicated region
    $region58: #{tpu_custom_call.1} parent=1 // pred_check
      _
    $region59: #{tpu_custom_call.1} parent=1 // pred_check_branch
      %4164 = sbr.rel (0) target = $region61
    $region60: #{tpu_custom_call.1} parent=1 // pred_region
      %s4166 = ssub.s32 256, 256
      %4167 = vsyncadd [#allocation4], %s4166
      %s4168 = sshll.u32 [#allocation11], 4
      %s4169 = int_to_ptr.vmem [resolvable:$true] %s4168
      %4174 = dma.vmem_to_hbm [thread:$0]  %s4169, 256, %s9, [#allocation4], 128, 128, 8
    $region61: #{tpu_custom_call.1} parent=1 // pred_fallthru
      _
    // Predicated region
    $region62: #{tpu_custom_call.1} parent=1 // pred_check
      _
    $region63: #{tpu_custom_call.1} parent=1 // pred_check_branch
      %4176 = sbr.rel (0) target = $region65
    $region64: #{tpu_custom_call.1} parent=1 // pred_region
      %4177 = dma.done [#allocation4], 256
    $region65: #{tpu_custom_call.1} parent=1 // pred_fallthru
      _
    %4178 = vsyncpa [#allocation3], 1
    %4179 = vsyncpa [#allocation6], 1
    %4180 = vsyncpa [#allocation9], 1
    %4181 = vsyncpa [#allocation4], 1

</llo_original>
